<compile_context>
chip_gen: v7x
topology: tpu7x:2x2x1
jax: 0.10.0
libtpu: 0.0.40
codegen_flags: <defaults>
</compile_context>

<pallas_src>
import functools

import jax
import jax.numpy as jnp
from jax.experimental import pallas as pl
from jax.experimental.pallas import tpu as pltpu

EPS = 1e-5                       # nn.BatchNorm2d default eps
LANE = 128                       # TPU lane width -> channel padding granularity
VMEM_LIMIT = 48 * 1024 * 1024    # safe on v5e/v6e (128 MiB) and v7x (64 MiB)


def _round_up(x, m):
    return (x + m - 1) // m * m


# ------------------------------ Pallas kernels ------------------------------ #
def conv3x3_stats_kernel(xp_ref, w_ref, z_ref, psum_ref, *, th, w_out, cout_pad):
    """Pass 1: 3x3 conv on one (th, W) row tile + per-tile BN partial sums.

    xp_ref   : (H+2, W+2, Cin_pad)    bf16  spatially padded image, resident per n
    w_ref    : (9, Cin_pad, Cout_pad) bf16  folded conv weight (tap-major)
    z_ref    : (th, W, Cout_pad)      f32   pre-BN conv output tile
    psum_ref : (2, Cout_pad)          f32   [sum(z), sum(z^2)] over this tile
    """
    i = pl.program_id(1)
    row0 = pl.multiple_of(i * th, th)      # top output row of this tile
    m = th * w_out

    acc = jnp.zeros((m, cout_pad), jnp.float32)
    # 9 halo taps: shifted slices of the resident block + accumulating matmuls.
    for ky in range(3):
        for kx in range(3):
            patch = xp_ref[pl.ds(row0 + ky, th), pl.ds(kx, w_out), :]
            acc = acc + jnp.dot(patch.reshape(m, -1), w_ref[ky * 3 + kx],
                                preferred_element_type=jnp.float32)

    z_ref[...] = acc.reshape(th, w_out, cout_pad)
    s = jnp.sum(acc, axis=0, keepdims=True)
    ss = jnp.sum(acc * acc, axis=0, keepdims=True)
    psum_ref[...] = jnp.concatenate([s, ss], axis=0)


def bn_relu_kernel(z_ref, scale_ref, shift_ref, y_ref):
    """Pass 2: folded BatchNorm (per-channel scale/shift) + ReLU: fma + max."""
    y = z_ref[...] * scale_ref[...] + shift_ref[...]
    y_ref[...] = jnp.maximum(y, 0.0).astype(y_ref.dtype)


# ------------------------------ layer wrapper ------------------------------- #
def conv_bn_relu_layer(xp, w9, gamma_pad, beta_pad, *, tile_rows, out_dtype):
    """One Conv3x3(pad=1) + BatchNorm2d(training stats) + ReLU layer.

    xp        : (N, H+2, W+2, Cin_pad) bf16   (spatial + channel padded, NHWC)
    w9        : (9, Cin_pad, Cout_pad) bf16
    gamma/beta: (Cout_pad,) f32 (zero in padded channels)
    returns   : (N, H, W, Cout_pad) out_dtype (padded channels are exactly 0)
    """
    n, hp, wp, cin_pad = xp.shape
    h, wd = hp - 2, wp - 2
    cout_pad = w9.shape[2]
    assert h % tile_rows == 0, "tile_rows must divide H"
    n_tiles = h // tile_rows
    grid = (n, n_tiles)

    cparams = pltpu.CompilerParams(
        dimension_semantics=("parallel", "parallel"),
        vmem_limit_bytes=VMEM_LIMIT)

    conv_cost = pl.CostEstimate(
        flops=2 * n * h * wd * 9 * cin_pad * cout_pad,
        transcendentals=0,
        bytes_accessed=xp.size * 2 + w9.size * 2 + n * h * wd * cout_pad * 4)

    z, psum = pl.pallas_call(
        functools.partial(conv3x3_stats_kernel, th=tile_rows, w_out=wd,
                          cout_pad=cout_pad),
        grid=grid,
        in_specs=[
            # per-image padded block, resident across the row-tile axis
            pl.BlockSpec((None, hp, wp, cin_pad), lambda ni, ti: (ni, 0, 0, 0)),
            # full folded weight, resident across the whole grid
            pl.BlockSpec((9, cin_pad, cout_pad), lambda ni, ti: (0, 0, 0)),
        ],
        out_specs=[
            pl.BlockSpec((None, tile_rows, wd, cout_pad),
                         lambda ni, ti: (ni, ti, 0, 0)),
            pl.BlockSpec((None, None, 2, cout_pad),
                         lambda ni, ti: (ni, ti, 0, 0)),
        ],
        out_shape=[
            jax.ShapeDtypeStruct((n, h, wd, cout_pad), jnp.float32),
            jax.ShapeDtypeStruct((n, n_tiles, 2, cout_pad), jnp.float32),
        ],
        compiler_params=cparams,
        cost_estimate=conv_cost,
    )(xp, w9)

    # Fold batch statistics (BatchNorm2d training-mode, biased variance) with
    # gamma/beta into a single per-channel scale/shift (tiny XLA reduction).
    m_total = n * h * wd
    s = jnp.sum(psum[:, :, 0, :], axis=(0, 1))
    ss = jnp.sum(psum[:, :, 1, :], axis=(0, 1))
    mean = s / m_total
    var = jnp.maximum(ss / m_total - mean * mean, 0.0)   # guard f32 cancellation
    inv_std = jax.lax.rsqrt(var + EPS)
    scale = (gamma_pad * inv_std).reshape(1, cout_pad)
    shift = (beta_pad - mean * gamma_pad * inv_std).reshape(1, cout_pad)

    apply_cost = pl.CostEstimate(
        flops=2 * m_total * cout_pad,
        transcendentals=0,
        bytes_accessed=z.size * 4
        + m_total * cout_pad * jnp.dtype(out_dtype).itemsize)

    y = pl.pallas_call(
        bn_relu_kernel,
        grid=grid,
        in_specs=[
            pl.BlockSpec((None, tile_rows, wd, cout_pad),
                         lambda ni, ti: (ni, ti, 0, 0)),
            pl.BlockSpec((1, cout_pad), lambda ni, ti: (0, 0)),
            pl.BlockSpec((1, cout_pad), lambda ni, ti: (0, 0)),
        ],
        out_specs=pl.BlockSpec((None, tile_rows, wd, cout_pad),
                               lambda ni, ti: (ni, ti, 0, 0)),
        out_shape=jax.ShapeDtypeStruct((n, h, wd, cout_pad), out_dtype),
        compiler_params=cparams,
        cost_estimate=apply_cost,
    )(z, scale, shift)
    return y


# --------------------------------- glue ------------------------------------- #
def _fold_weight(w_oihw, cin_pad, cout_pad):
    """PyTorch (C_out, C_in, 3, 3) -> (9, Cin_pad, Cout_pad) bf16, tap-major."""
    c_out, c_in, _, _ = w_oihw.shape
    w = jnp.transpose(w_oihw, (2, 3, 1, 0)).reshape(9, c_in, c_out)
    w = jnp.pad(w, ((0, 0), (0, cin_pad - c_in), (0, cout_pad - c_out)))
    return w.astype(jnp.bfloat16)


def _pad_vec(v, cpad):
    return jnp.pad(v.astype(jnp.float32), (0, cpad - v.shape[0]))


def _pick_tile_rows(h, wd, target_m=1024):
    """Largest divisor of H with tile_rows*W <= target_m (amortize step cost)."""
    best = 1
    for th in range(1, h + 1):
        if h % th == 0 and th * wd <= target_m:
            best = th
    return best


@functools.partial(jax.jit, static_argnames=("tile_rows",))
def double_conv_forward(x_nchw, params, tile_rows=None):
    (w1, b1, g1, be1, w2, b2, g2, be2) = params
    del b1, b2  # conv bias cancels exactly under training-mode BatchNorm
    n, c_in, h, wd = x_nchw.shape
    c_mid, c_out = w1.shape[0], w2.shape[0]
    cin_pad = _round_up(c_in, LANE)
    cmid_pad = _round_up(c_mid, LANE)
    cout_pad = _round_up(c_out, LANE)
    th = tile_rows if tile_rows is not None else _pick_tile_rows(h, wd)

    # NHWC, spatial halo pad (conv padding=1), channel pad to lane width, bf16.
    x = jnp.transpose(x_nchw, (0, 2, 3, 1))
    xp1 = jnp.pad(x, ((0, 0), (1, 1), (1, 1), (0, cin_pad - c_in))
                  ).astype(jnp.bfloat16)

    y1 = conv_bn_relu_layer(xp1, _fold_weight(w1, cin_pad, cmid_pad),
                            _pad_vec(g1, cmid_pad), _pad_vec(be1, cmid_pad),
                            tile_rows=th, out_dtype=jnp.bfloat16)

    # Layer-1 output is already channel-padded (padded channels are exactly 0),
    # so only the spatial halo pad is needed before layer 2.
    # TODO(synk): fully fusing conv2 onto VMEM-resident y1 tiles would remove
    # this inter-layer HBM round trip; kept as a separate streaming pass here.
    xp2 = jnp.pad(y1, ((0, 0), (1, 1), (1, 1), (0, 0)))

    y2 = conv_bn_relu_layer(xp2, _fold_weight(w2, cmid_pad, cout_pad),
                            _pad_vec(g2, cout_pad), _pad_vec(be2, cout_pad),
                            tile_rows=th, out_dtype=jnp.float32)

    return jnp.transpose(y2[..., :c_out], (0, 3, 1, 2))    # back to NCHW


# ---------------------------- pure-JAX reference ----------------------------- #
def reference_forward(x, params):
    (w1, b1, g1, be1, w2, b2, g2, be2) = params

    def conv(x, w, b):
        y = jax.lax.conv_general_dilated(
            x, w, (1, 1), ((1, 1), (1, 1)),
            dimension_numbers=("NCHW", "OIHW", "NCHW"),
            precision=jax.lax.Precision.HIGHEST)
        return y + b[None, :, None, None]

    def bn_relu(y, g, be):
        mean = jnp.mean(y, axis=(0, 2, 3), keepdims=True)
        var = jnp.mean((y - mean) ** 2, axis=(0, 2, 3), keepdims=True)
        y = (y - mean) * jax.lax.rsqrt(var + EPS)
        y = y * g[None, :, None, None] + be[None, :, None, None]
        return jnp.maximum(y, 0.0)

    y = bn_relu(conv(x, w1, b1), g1, be1)
    return bn_relu(conv(y, w2, b2), g2, be2)


# ----------------------------------- main ------------------------------------ #
if __name__ == "__main__":
    # TODO(synk): BatchNorm2d running_mean/running_var momentum updates are a
    # training-time side effect and are not modeled (they do not affect the
    # tensor returned by forward()).
    in_channels, out_channels = 4, 8
    N, H, W = 2, 16, 16

    key = jax.random.PRNGKey(0)
    ks = jax.random.split(key, 9)
    x = jax.random.normal(ks[0], (N, in_channels, H, W), jnp.float32)

    # Deterministic synthetic parameters (shapes as in the PyTorch __init__).
    w1 = 0.1 * jax.random.normal(ks[1], (out_channels, in_channels, 3, 3), jnp.float32)
    b1 = 0.1 * jax.random.normal(ks[2], (out_channels,), jnp.float32)
    g1 = 1.0 + 0.1 * jax.random.normal(ks[3], (out_channels,), jnp.float32)
    be1 = 0.1 * jax.random.normal(ks[4], (out_channels,), jnp.float32)
    w2 = 0.1 * jax.random.normal(ks[5], (out_channels, out_channels, 3, 3), jnp.float32)
    b2 = 0.1 * jax.random.normal(ks[6], (out_channels,), jnp.float32)
    g2 = 1.0 + 0.1 * jax.random.normal(ks[7], (out_channels,), jnp.float32)
    be2 = 0.1 * jax.random.normal(ks[8], (out_channels,), jnp.float32)
    params = (w1, b1, g1, be1, w2, b2, g2, be2)

    # tile_rows=8 -> 2 row tiles per image, grid (N, 2) per kernel.
    out = double_conv_forward(x, params, tile_rows=8)
    out = jax.block_until_ready(out)
    assert out.shape == (N, out_channels, H, W), out.shape

    ref = jax.block_until_ready(reference_forward(x, params))
    # Tolerance reflects the bf16 MXU path (f32 accumulation) vs. the
    # Precision.HIGHEST f32 reference, amplified by the BN normalization.
    assert jnp.allclose(out, ref, atol=5e-2, rtol=5e-2), (
        float(jnp.max(jnp.abs(out - ref))))

    print("KERNEL_OK")
</pallas_src>

<mosaic_0001>
module attributes {stable_mosaic.version = 11 : i64} {
  func.func @conv3x3_stats_kernel(%arg0: i32, %arg1: i32, %arg2: memref<1x18x18x128xbf16, #tpu.memory_space<vmem>>, %arg3: memref<9x128x128xbf16, #tpu.memory_space<vmem>>, %arg4: memref<1x8x16x128xf32, #tpu.memory_space<vmem>>, %arg5: memref<1x1x2x128xf32, #tpu.memory_space<vmem>>) attributes {dimension_semantics = [#tpu.dimension_semantics<parallel>, #tpu.dimension_semantics<parallel>], iteration_bounds = array<i64: 2, 2>, scalar_prefetch = 0 : i64, scratch_operands = 0 : i64, tpu.core_type = #tpu.core_type<tc>, window_params = [{transform_indices = @transform_0, window_bounds = array<i64: 1, 18, 18, 128>}, {pipeline_mode = #tpu.pipeline_mode<synchronous>, transform_indices = @transform_1, window_bounds = array<i64: 9, 128, 128>}, {transform_indices = @transform_2, window_bounds = array<i64: 1, 8, 16, 128>}, {transform_indices = @transform_3, window_bounds = array<i64: 1, 1, 2, 128>}]} {
    %c8_i32 = arith.constant 8 : i32
    %0 = arith.muli %arg1, %c8_i32 : i32
    %1 = tpu.assume_multiple %0, 8 : i32
    %cst = arith.constant 0.000000e+00 : f32
    %2 = vector.broadcast %cst : f32 to vector<128x128xf32>
    %c0_i32 = arith.constant 0 : i32
    %3 = arith.addi %1, %c0_i32 : i32
    %c0 = arith.constant 0 : index
    %4 = arith.index_cast %3 : i32 to index
    %c0_0 = arith.constant 0 : index
    %c0_1 = arith.constant 0 : index
    %5 = vector.load %arg2[%c0, %4, %c0_0, %c0_1] : memref<1x18x18x128xbf16, #tpu.memory_space<vmem>>, vector<1x8x16x128xbf16>
    %6 = vector.shape_cast %5 : vector<1x8x16x128xbf16> to vector<8x16x128xbf16>
    %7 = vector.shape_cast %6 : vector<8x16x128xbf16> to vector<128x128xbf16>
    %c0_2 = arith.constant 0 : index
    %c0_3 = arith.constant 0 : index
    %c0_4 = arith.constant 0 : index
    %8 = vector.load %arg3[%c0_2, %c0_3, %c0_4] : memref<9x128x128xbf16, #tpu.memory_space<vmem>>, vector<1x128x128xbf16>
    %9 = vector.shape_cast %8 : vector<1x128x128xbf16> to vector<128x128xbf16>
    %cst_5 = arith.constant dense<0.000000e+00> : vector<128x128xf32>
    %10 = tpu.matmul %7, %9, %cst_5 {dimension_numbers = #tpu.dot_dimension_numbers<[1], [0], [0], [1], [0, 0, 1, 1], [], []>} : vector<128x128xbf16>, vector<128x128xbf16>, vector<128x128xf32> -> vector<128x128xf32>
    %11 = arith.addf %2, %10 : vector<128x128xf32>
    %c0_i32_6 = arith.constant 0 : i32
    %12 = arith.addi %1, %c0_i32_6 : i32
    %c0_7 = arith.constant 0 : index
    %13 = arith.index_cast %12 : i32 to index
    %c1 = arith.constant 1 : index
    %c0_8 = arith.constant 0 : index
    %14 = vector.load %arg2[%c0_7, %13, %c1, %c0_8] : memref<1x18x18x128xbf16, #tpu.memory_space<vmem>>, vector<1x8x16x128xbf16>
    %15 = vector.shape_cast %14 : vector<1x8x16x128xbf16> to vector<8x16x128xbf16>
    %16 = vector.shape_cast %15 : vector<8x16x128xbf16> to vector<128x128xbf16>
    %c1_9 = arith.constant 1 : index
    %c0_10 = arith.constant 0 : index
    %c0_11 = arith.constant 0 : index
    %17 = vector.load %arg3[%c1_9, %c0_10, %c0_11] : memref<9x128x128xbf16, #tpu.memory_space<vmem>>, vector<1x128x128xbf16>
    %18 = vector.shape_cast %17 : vector<1x128x128xbf16> to vector<128x128xbf16>
    %cst_12 = arith.constant dense<0.000000e+00> : vector<128x128xf32>
    %19 = tpu.matmul %16, %18, %cst_12 {dimension_numbers = #tpu.dot_dimension_numbers<[1], [0], [0], [1], [0, 0, 1, 1], [], []>} : vector<128x128xbf16>, vector<128x128xbf16>, vector<128x128xf32> -> vector<128x128xf32>
    %20 = arith.addf %11, %19 : vector<128x128xf32>
    %c0_i32_13 = arith.constant 0 : i32
    %21 = arith.addi %1, %c0_i32_13 : i32
    %c0_14 = arith.constant 0 : index
    %22 = arith.index_cast %21 : i32 to index
    %c2 = arith.constant 2 : index
    %c0_15 = arith.constant 0 : index
    %23 = vector.load %arg2[%c0_14, %22, %c2, %c0_15] : memref<1x18x18x128xbf16, #tpu.memory_space<vmem>>, vector<1x8x16x128xbf16>
    %24 = vector.shape_cast %23 : vector<1x8x16x128xbf16> to vector<8x16x128xbf16>
    %25 = vector.shape_cast %24 : vector<8x16x128xbf16> to vector<128x128xbf16>
    %c2_16 = arith.constant 2 : index
    %c0_17 = arith.constant 0 : index
    %c0_18 = arith.constant 0 : index
    %26 = vector.load %arg3[%c2_16, %c0_17, %c0_18] : memref<9x128x128xbf16, #tpu.memory_space<vmem>>, vector<1x128x128xbf16>
    %27 = vector.shape_cast %26 : vector<1x128x128xbf16> to vector<128x128xbf16>
    %cst_19 = arith.constant dense<0.000000e+00> : vector<128x128xf32>
    %28 = tpu.matmul %25, %27, %cst_19 {dimension_numbers = #tpu.dot_dimension_numbers<[1], [0], [0], [1], [0, 0, 1, 1], [], []>} : vector<128x128xbf16>, vector<128x128xbf16>, vector<128x128xf32> -> vector<128x128xf32>
    %29 = arith.addf %20, %28 : vector<128x128xf32>
    %c1_i32 = arith.constant 1 : i32
    %30 = arith.addi %1, %c1_i32 : i32
    %c0_20 = arith.constant 0 : index
    %31 = arith.index_cast %30 : i32 to index
    %c0_21 = arith.constant 0 : index
    %c0_22 = arith.constant 0 : index
    %32 = vector.load %arg2[%c0_20, %31, %c0_21, %c0_22] : memref<1x18x18x128xbf16, #tpu.memory_space<vmem>>, vector<1x8x16x128xbf16>
    %33 = vector.shape_cast %32 : vector<1x8x16x128xbf16> to vector<8x16x128xbf16>
    %34 = vector.shape_cast %33 : vector<8x16x128xbf16> to vector<128x128xbf16>
    %c3 = arith.constant 3 : index
    %c0_23 = arith.constant 0 : index
    %c0_24 = arith.constant 0 : index
    %35 = vector.load %arg3[%c3, %c0_23, %c0_24] : memref<9x128x128xbf16, #tpu.memory_space<vmem>>, vector<1x128x128xbf16>
    %36 = vector.shape_cast %35 : vector<1x128x128xbf16> to vector<128x128xbf16>
    %cst_25 = arith.constant dense<0.000000e+00> : vector<128x128xf32>
    %37 = tpu.matmul %34, %36, %cst_25 {dimension_numbers = #tpu.dot_dimension_numbers<[1], [0], [0], [1], [0, 0, 1, 1], [], []>} : vector<128x128xbf16>, vector<128x128xbf16>, vector<128x128xf32> -> vector<128x128xf32>
    %38 = arith.addf %29, %37 : vector<128x128xf32>
    %c1_i32_26 = arith.constant 1 : i32
    %39 = arith.addi %1, %c1_i32_26 : i32
    %c0_27 = arith.constant 0 : index
    %40 = arith.index_cast %39 : i32 to index
    %c1_28 = arith.constant 1 : index
    %c0_29 = arith.constant 0 : index
    %41 = vector.load %arg2[%c0_27, %40, %c1_28, %c0_29] : memref<1x18x18x128xbf16, #tpu.memory_space<vmem>>, vector<1x8x16x128xbf16>
    %42 = vector.shape_cast %41 : vector<1x8x16x128xbf16> to vector<8x16x128xbf16>
    %43 = vector.shape_cast %42 : vector<8x16x128xbf16> to vector<128x128xbf16>
    %c4 = arith.constant 4 : index
    %c0_30 = arith.constant 0 : index
    %c0_31 = arith.constant 0 : index
    %44 = vector.load %arg3[%c4, %c0_30, %c0_31] : memref<9x128x128xbf16, #tpu.memory_space<vmem>>, vector<1x128x128xbf16>
    %45 = vector.shape_cast %44 : vector<1x128x128xbf16> to vector<128x128xbf16>
    %cst_32 = arith.constant dense<0.000000e+00> : vector<128x128xf32>
    %46 = tpu.matmul %43, %45, %cst_32 {dimension_numbers = #tpu.dot_dimension_numbers<[1], [0], [0], [1], [0, 0, 1, 1], [], []>} : vector<128x128xbf16>, vector<128x128xbf16>, vector<128x128xf32> -> vector<128x128xf32>
    %47 = arith.addf %38, %46 : vector<128x128xf32>
    %c1_i32_33 = arith.constant 1 : i32
    %48 = arith.addi %1, %c1_i32_33 : i32
    %c0_34 = arith.constant 0 : index
    %49 = arith.index_cast %48 : i32 to index
    %c2_35 = arith.constant 2 : index
    %c0_36 = arith.constant 0 : index
    %50 = vector.load %arg2[%c0_34, %49, %c2_35, %c0_36] : memref<1x18x18x128xbf16, #tpu.memory_space<vmem>>, vector<1x8x16x128xbf16>
    %51 = vector.shape_cast %50 : vector<1x8x16x128xbf16> to vector<8x16x128xbf16>
    %52 = vector.shape_cast %51 : vector<8x16x128xbf16> to vector<128x128xbf16>
    %c5 = arith.constant 5 : index
    %c0_37 = arith.constant 0 : index
    %c0_38 = arith.constant 0 : index
    %53 = vector.load %arg3[%c5, %c0_37, %c0_38] : memref<9x128x128xbf16, #tpu.memory_space<vmem>>, vector<1x128x128xbf16>
    %54 = vector.shape_cast %53 : vector<1x128x128xbf16> to vector<128x128xbf16>
    %cst_39 = arith.constant dense<0.000000e+00> : vector<128x128xf32>
    %55 = tpu.matmul %52, %54, %cst_39 {dimension_numbers = #tpu.dot_dimension_numbers<[1], [0], [0], [1], [0, 0, 1, 1], [], []>} : vector<128x128xbf16>, vector<128x128xbf16>, vector<128x128xf32> -> vector<128x128xf32>
    %56 = arith.addf %47, %55 : vector<128x128xf32>
    %c2_i32 = arith.constant 2 : i32
    %57 = arith.addi %1, %c2_i32 : i32
    %c0_40 = arith.constant 0 : index
    %58 = arith.index_cast %57 : i32 to index
    %c0_41 = arith.constant 0 : index
    %c0_42 = arith.constant 0 : index
    %59 = vector.load %arg2[%c0_40, %58, %c0_41, %c0_42] : memref<1x18x18x128xbf16, #tpu.memory_space<vmem>>, vector<1x8x16x128xbf16>
    %60 = vector.shape_cast %59 : vector<1x8x16x128xbf16> to vector<8x16x128xbf16>
    %61 = vector.shape_cast %60 : vector<8x16x128xbf16> to vector<128x128xbf16>
    %c6 = arith.constant 6 : index
    %c0_43 = arith.constant 0 : index
    %c0_44 = arith.constant 0 : index
    %62 = vector.load %arg3[%c6, %c0_43, %c0_44] : memref<9x128x128xbf16, #tpu.memory_space<vmem>>, vector<1x128x128xbf16>
    %63 = vector.shape_cast %62 : vector<1x128x128xbf16> to vector<128x128xbf16>
    %cst_45 = arith.constant dense<0.000000e+00> : vector<128x128xf32>
    %64 = tpu.matmul %61, %63, %cst_45 {dimension_numbers = #tpu.dot_dimension_numbers<[1], [0], [0], [1], [0, 0, 1, 1], [], []>} : vector<128x128xbf16>, vector<128x128xbf16>, vector<128x128xf32> -> vector<128x128xf32>
    %65 = arith.addf %56, %64 : vector<128x128xf32>
    %c2_i32_46 = arith.constant 2 : i32
    %66 = arith.addi %1, %c2_i32_46 : i32
    %c0_47 = arith.constant 0 : index
    %67 = arith.index_cast %66 : i32 to index
    %c1_48 = arith.constant 1 : index
    %c0_49 = arith.constant 0 : index
    %68 = vector.load %arg2[%c0_47, %67, %c1_48, %c0_49] : memref<1x18x18x128xbf16, #tpu.memory_space<vmem>>, vector<1x8x16x128xbf16>
    %69 = vector.shape_cast %68 : vector<1x8x16x128xbf16> to vector<8x16x128xbf16>
    %70 = vector.shape_cast %69 : vector<8x16x128xbf16> to vector<128x128xbf16>
    %c7 = arith.constant 7 : index
    %c0_50 = arith.constant 0 : index
    %c0_51 = arith.constant 0 : index
    %71 = vector.load %arg3[%c7, %c0_50, %c0_51] : memref<9x128x128xbf16, #tpu.memory_space<vmem>>, vector<1x128x128xbf16>
    %72 = vector.shape_cast %71 : vector<1x128x128xbf16> to vector<128x128xbf16>
    %cst_52 = arith.constant dense<0.000000e+00> : vector<128x128xf32>
    %73 = tpu.matmul %70, %72, %cst_52 {dimension_numbers = #tpu.dot_dimension_numbers<[1], [0], [0], [1], [0, 0, 1, 1], [], []>} : vector<128x128xbf16>, vector<128x128xbf16>, vector<128x128xf32> -> vector<128x128xf32>
    %74 = arith.addf %65, %73 : vector<128x128xf32>
    %c2_i32_53 = arith.constant 2 : i32
    %75 = arith.addi %1, %c2_i32_53 : i32
    %c0_54 = arith.constant 0 : index
    %76 = arith.index_cast %75 : i32 to index
    %c2_55 = arith.constant 2 : index
    %c0_56 = arith.constant 0 : index
    %77 = vector.load %arg2[%c0_54, %76, %c2_55, %c0_56] : memref<1x18x18x128xbf16, #tpu.memory_space<vmem>>, vector<1x8x16x128xbf16>
    %78 = vector.shape_cast %77 : vector<1x8x16x128xbf16> to vector<8x16x128xbf16>
    %79 = vector.shape_cast %78 : vector<8x16x128xbf16> to vector<128x128xbf16>
    %c8 = arith.constant 8 : index
    %c0_57 = arith.constant 0 : index
    %c0_58 = arith.constant 0 : index
    %80 = vector.load %arg3[%c8, %c0_57, %c0_58] : memref<9x128x128xbf16, #tpu.memory_space<vmem>>, vector<1x128x128xbf16>
    %81 = vector.shape_cast %80 : vector<1x128x128xbf16> to vector<128x128xbf16>
    %cst_59 = arith.constant dense<0.000000e+00> : vector<128x128xf32>
    %82 = tpu.matmul %79, %81, %cst_59 {dimension_numbers = #tpu.dot_dimension_numbers<[1], [0], [0], [1], [0, 0, 1, 1], [], []>} : vector<128x128xbf16>, vector<128x128xbf16>, vector<128x128xf32> -> vector<128x128xf32>
    %83 = arith.addf %74, %82 : vector<128x128xf32>
    %84 = vector.shape_cast %83 : vector<128x128xf32> to vector<8x16x128xf32>
    %c0_60 = arith.constant 0 : index
    %c0_61 = arith.constant 0 : index
    %c0_62 = arith.constant 0 : index
    %c0_63 = arith.constant 0 : index
    %85 = vector.load %arg4[%c0_60, %c0_61, %c0_62, %c0_63] : memref<1x8x16x128xf32, #tpu.memory_space<vmem>>, vector<1x8x16x128xf32>
    %86 = vector.shape_cast %85 : vector<1x8x16x128xf32> to vector<8x16x128xf32>
    %87 = vector.shape_cast %84 : vector<8x16x128xf32> to vector<1x8x16x128xf32>
    tpu.vector_store %arg4[%c0_60, %c0_61, %c0_62, %c0_63], %87 {strides = array<i32>} : memref<1x8x16x128xf32, #tpu.memory_space<vmem>>, vector<1x8x16x128xf32>,
    %cst_64 = arith.constant dense<0.000000e+00> : vector<128xf32>
    %88 = vector.multi_reduction <add>, %83, %cst_64 [0] : vector<128x128xf32> to vector<128xf32>
    %89 = vector.shape_cast %88 : vector<128xf32> to vector<1x128xf32>
    %90 = arith.mulf %83, %83 : vector<128x128xf32>
    %cst_65 = arith.constant dense<0.000000e+00> : vector<128xf32>
    %91 = vector.multi_reduction <add>, %90, %cst_65 [0] : vector<128x128xf32> to vector<128xf32>
    %92 = vector.shape_cast %91 : vector<128xf32> to vector<1x128xf32>
    %93 = tpu.concatenate %89, %92 in 0 : vector<1x128xf32>, vector<1x128xf32> -> vector<2x128xf32>
    %c0_66 = arith.constant 0 : index
    %c0_67 = arith.constant 0 : index
    %c0_68 = arith.constant 0 : index
    %c0_69 = arith.constant 0 : index
    %94 = vector.load %arg5[%c0_66, %c0_67, %c0_68, %c0_69] : memref<1x1x2x128xf32, #tpu.memory_space<vmem>>, vector<1x1x2x128xf32>
    %95 = vector.shape_cast %94 : vector<1x1x2x128xf32> to vector<2x128xf32>
    %96 = vector.shape_cast %93 : vector<2x128xf32> to vector<1x1x2x128xf32>
    tpu.vector_store %arg5[%c0_66, %c0_67, %c0_68, %c0_69], %96 {strides = array<i32>} : memref<1x1x2x128xf32, #tpu.memory_space<vmem>>, vector<1x1x2x128xf32>,
    return
  }
  func.func @transform_0(%arg0: i32, %arg1: i32) -> (i32, i32, i32, i32) {
    %c0_i32 = arith.constant 0 : i32
    %c0_i32_0 = arith.constant 0 : i32
    %c0_i32_1 = arith.constant 0 : i32
    %c0_i32_2 = arith.constant 0 : i32
    return %arg0, %c0_i32, %c0_i32_0, %c0_i32_1 : i32, i32, i32, i32
  }
  func.func @transform_1(%arg0: i32, %arg1: i32) -> (i32, i32, i32) {
    %c0_i32 = arith.constant 0 : i32
    %c0_i32_0 = arith.constant 0 : i32
    %c0_i32_1 = arith.constant 0 : i32
    %c0_i32_2 = arith.constant 0 : i32
    return %c0_i32, %c0_i32_0, %c0_i32_1 : i32, i32, i32
  }
  func.func @transform_2(%arg0: i32, %arg1: i32) -> (i32, i32, i32, i32) {
    %c0_i32 = arith.constant 0 : i32
    %c0_i32_0 = arith.constant 0 : i32
    %c0_i32_1 = arith.constant 0 : i32
    return %arg0, %arg1, %c0_i32, %c0_i32_0 : i32, i32, i32, i32
  }
  func.func @transform_3(%arg0: i32, %arg1: i32) -> (i32, i32, i32, i32) {
    %c0_i32 = arith.constant 0 : i32
    %c0_i32_0 = arith.constant 0 : i32
    %c0_i32_1 = arith.constant 0 : i32
    return %arg0, %arg1, %c0_i32, %c0_i32_0 : i32, i32, i32, i32
  }
}

module attributes {stable_mosaic.version = 11 : i64} {
  func.func @bn_relu_kernel(%arg0: i32, %arg1: i32, %arg2: memref<1x8x16x128xf32, #tpu.memory_space<vmem>>, %arg3: memref<1x128xf32, #tpu.memory_space<vmem>>, %arg4: memref<1x128xf32, #tpu.memory_space<vmem>>, %arg5: memref<1x8x16x128xbf16, #tpu.memory_space<vmem>>) attributes {dimension_semantics = [#tpu.dimension_semantics<parallel>, #tpu.dimension_semantics<parallel>], iteration_bounds = array<i64: 2, 2>, scalar_prefetch = 0 : i64, scratch_operands = 0 : i64, tpu.core_type = #tpu.core_type<tc>, window_params = [{transform_indices = @transform_0, window_bounds = array<i64: 1, 8, 16, 128>}, {pipeline_mode = #tpu.pipeline_mode<synchronous>, transform_indices = @transform_1, window_bounds = array<i64: 1, 128>}, {pipeline_mode = #tpu.pipeline_mode<synchronous>, transform_indices = @transform_2, window_bounds = array<i64: 1, 128>}, {transform_indices = @transform_3, window_bounds = array<i64: 1, 8, 16, 128>}]} {
    %c0 = arith.constant 0 : index
    %c0_0 = arith.constant 0 : index
    %c0_1 = arith.constant 0 : index
    %c0_2 = arith.constant 0 : index
    %0 = vector.load %arg2[%c0, %c0_0, %c0_1, %c0_2] : memref<1x8x16x128xf32, #tpu.memory_space<vmem>>, vector<1x8x16x128xf32>
    %1 = vector.shape_cast %0 : vector<1x8x16x128xf32> to vector<8x16x128xf32>
    %c0_3 = arith.constant 0 : index
    %c0_4 = arith.constant 0 : index
    %2 = vector.load %arg3[%c0_3, %c0_4] : memref<1x128xf32, #tpu.memory_space<vmem>>, vector<1x128xf32>
    %3 = vector.shape_cast %2 : vector<1x128xf32> to vector<1x1x128xf32>
    %4 = vector.broadcast %3 : vector<1x1x128xf32> to vector<8x16x128xf32>
    %5 = arith.mulf %1, %4 : vector<8x16x128xf32>
    %c0_5 = arith.constant 0 : index
    %c0_6 = arith.constant 0 : index
    %6 = vector.load %arg4[%c0_5, %c0_6] : memref<1x128xf32, #tpu.memory_space<vmem>>, vector<1x128xf32>
    %7 = vector.shape_cast %6 : vector<1x128xf32> to vector<1x1x128xf32>
    %8 = vector.broadcast %7 : vector<1x1x128xf32> to vector<8x16x128xf32>
    %9 = arith.addf %5, %8 : vector<8x16x128xf32>
    %cst = arith.constant 0.000000e+00 : f32
    %10 = vector.broadcast %cst : f32 to vector<8x16x128xf32>
    %11 = arith.maximumf %9, %10 : vector<8x16x128xf32>
    %12 = arith.truncf %11 : vector<8x16x128xf32> to vector<8x16x128xbf16>
    %c0_7 = arith.constant 0 : index
    %c0_8 = arith.constant 0 : index
    %c0_9 = arith.constant 0 : index
    %c0_10 = arith.constant 0 : index
    %13 = vector.load %arg5[%c0_7, %c0_8, %c0_9, %c0_10] : memref<1x8x16x128xbf16, #tpu.memory_space<vmem>>, vector<1x8x16x128xbf16>
    %14 = vector.shape_cast %13 : vector<1x8x16x128xbf16> to vector<8x16x128xbf16>
    %15 = vector.shape_cast %12 : vector<8x16x128xbf16> to vector<1x8x16x128xbf16>
    tpu.vector_store %arg5[%c0_7, %c0_8, %c0_9, %c0_10], %15 {strides = array<i32>} : memref<1x8x16x128xbf16, #tpu.memory_space<vmem>>, vector<1x8x16x128xbf16>,
    return
  }
  func.func @transform_0(%arg0: i32, %arg1: i32) -> (i32, i32, i32, i32) {
    %c0_i32 = arith.constant 0 : i32
    %c0_i32_0 = arith.constant 0 : i32
    %c0_i32_1 = arith.constant 0 : i32
    return %arg0, %arg1, %c0_i32, %c0_i32_0 : i32, i32, i32, i32
  }
  func.func @transform_1(%arg0: i32, %arg1: i32) -> (i32, i32) {
    %c0_i32 = arith.constant 0 : i32
    %c0_i32_0 = arith.constant 0 : i32
    %c0_i32_1 = arith.constant 0 : i32
    return %c0_i32, %c0_i32_0 : i32, i32
  }
  func.func @transform_2(%arg0: i32, %arg1: i32) -> (i32, i32) {
    %c0_i32 = arith.constant 0 : i32
    %c0_i32_0 = arith.constant 0 : i32
    %c0_i32_1 = arith.constant 0 : i32
    return %c0_i32, %c0_i32_0 : i32, i32
  }
  func.func @transform_3(%arg0: i32, %arg1: i32) -> (i32, i32, i32, i32) {
    %c0_i32 = arith.constant 0 : i32
    %c0_i32_0 = arith.constant 0 : i32
    %c0_i32_1 = arith.constant 0 : i32
    return %arg0, %arg1, %c0_i32, %c0_i32_0 : i32, i32, i32, i32
  }
}

module attributes {stable_mosaic.version = 11 : i64} {
  func.func @bn_relu_kernel(%arg0: i32, %arg1: i32, %arg2: memref<1x8x16x128xf32, #tpu.memory_space<vmem>>, %arg3: memref<1x128xf32, #tpu.memory_space<vmem>>, %arg4: memref<1x128xf32, #tpu.memory_space<vmem>>, %arg5: memref<1x8x16x128xf32, #tpu.memory_space<vmem>>) attributes {dimension_semantics = [#tpu.dimension_semantics<parallel>, #tpu.dimension_semantics<parallel>], iteration_bounds = array<i64: 2, 2>, scalar_prefetch = 0 : i64, scratch_operands = 0 : i64, tpu.core_type = #tpu.core_type<tc>, window_params = [{transform_indices = @transform_0, window_bounds = array<i64: 1, 8, 16, 128>}, {pipeline_mode = #tpu.pipeline_mode<synchronous>, transform_indices = @transform_1, window_bounds = array<i64: 1, 128>}, {pipeline_mode = #tpu.pipeline_mode<synchronous>, transform_indices = @transform_2, window_bounds = array<i64: 1, 128>}, {transform_indices = @transform_3, window_bounds = array<i64: 1, 8, 16, 128>}]} {
    %c0 = arith.constant 0 : index
    %c0_0 = arith.constant 0 : index
    %c0_1 = arith.constant 0 : index
    %c0_2 = arith.constant 0 : index
    %0 = vector.load %arg2[%c0, %c0_0, %c0_1, %c0_2] : memref<1x8x16x128xf32, #tpu.memory_space<vmem>>, vector<1x8x16x128xf32>
    %1 = vector.shape_cast %0 : vector<1x8x16x128xf32> to vector<8x16x128xf32>
    %c0_3 = arith.constant 0 : index
    %c0_4 = arith.constant 0 : index
    %2 = vector.load %arg3[%c0_3, %c0_4] : memref<1x128xf32, #tpu.memory_space<vmem>>, vector<1x128xf32>
    %3 = vector.shape_cast %2 : vector<1x128xf32> to vector<1x1x128xf32>
    %4 = vector.broadcast %3 : vector<1x1x128xf32> to vector<8x16x128xf32>
    %5 = arith.mulf %1, %4 : vector<8x16x128xf32>
    %c0_5 = arith.constant 0 : index
    %c0_6 = arith.constant 0 : index
    %6 = vector.load %arg4[%c0_5, %c0_6] : memref<1x128xf32, #tpu.memory_space<vmem>>, vector<1x128xf32>
    %7 = vector.shape_cast %6 : vector<1x128xf32> to vector<1x1x128xf32>
    %8 = vector.broadcast %7 : vector<1x1x128xf32> to vector<8x16x128xf32>
    %9 = arith.addf %5, %8 : vector<8x16x128xf32>
    %cst = arith.constant 0.000000e+00 : f32
    %10 = vector.broadcast %cst : f32 to vector<8x16x128xf32>
    %11 = arith.maximumf %9, %10 : vector<8x16x128xf32>
    %c0_7 = arith.constant 0 : index
    %c0_8 = arith.constant 0 : index
    %c0_9 = arith.constant 0 : index
    %c0_10 = arith.constant 0 : index
    %12 = vector.load %arg5[%c0_7, %c0_8, %c0_9, %c0_10] : memref<1x8x16x128xf32, #tpu.memory_space<vmem>>, vector<1x8x16x128xf32>
    %13 = vector.shape_cast %12 : vector<1x8x16x128xf32> to vector<8x16x128xf32>
    %14 = vector.shape_cast %11 : vector<8x16x128xf32> to vector<1x8x16x128xf32>
    tpu.vector_store %arg5[%c0_7, %c0_8, %c0_9, %c0_10], %14 {strides = array<i32>} : memref<1x8x16x128xf32, #tpu.memory_space<vmem>>, vector<1x8x16x128xf32>,
    return
  }
  func.func @transform_0(%arg0: i32, %arg1: i32) -> (i32, i32, i32, i32) {
    %c0_i32 = arith.constant 0 : i32
    %c0_i32_0 = arith.constant 0 : i32
    %c0_i32_1 = arith.constant 0 : i32
    return %arg0, %arg1, %c0_i32, %c0_i32_0 : i32, i32, i32, i32
  }
  func.func @transform_1(%arg0: i32, %arg1: i32) -> (i32, i32) {
    %c0_i32 = arith.constant 0 : i32
    %c0_i32_0 = arith.constant 0 : i32
    %c0_i32_1 = arith.constant 0 : i32
    return %c0_i32, %c0_i32_0 : i32, i32
  }
  func.func @transform_2(%arg0: i32, %arg1: i32) -> (i32, i32) {
    %c0_i32 = arith.constant 0 : i32
    %c0_i32_0 = arith.constant 0 : i32
    %c0_i32_1 = arith.constant 0 : i32
    return %c0_i32, %c0_i32_0 : i32, i32
  }
  func.func @transform_3(%arg0: i32, %arg1: i32) -> (i32, i32, i32, i32) {
    %c0_i32 = arith.constant 0 : i32
    %c0_i32_0 = arith.constant 0 : i32
    %c0_i32_1 = arith.constant 0 : i32
    return %arg0, %arg1, %c0_i32, %c0_i32_0 : i32, i32, i32, i32
  }
}

</mosaic_0001>

<llo_original>
// kernel: double_conv_forward.7
$region0: #{double_conv_forward.7}
  #allocation0 [shape = 'u32[]', space=smem, size = 0x4, offset = 0x4, fixed_abs, tag = 'smem constant byte address 0x4 - core index']
  #allocation1 [shape = 'u32[144,128]{1,0:T(1,128)}', space=vmem, size = 0x12000, scoped, tag = 'internal scratch']
  %s0 = inlined_call_operand.vmem [shape: f32[2,16,16,128], index: 0, kind: input, shape index: {}]
  %s1 = inlined_call_operand.vmem [shape: f32[1,128], index: 1, kind: input, shape index: {}]
  %s2 = inlined_call_operand.vmem [shape: f32[1,128], index: 2, kind: input, shape index: {}]
  %s3 = inlined_call_operand.vmem [shape: f32[2,16,16,128], index: 3, kind: output, shape index: {}]
  %s4 = sld [smem:[#allocation0]]
  $region45: #{double_conv_forward.7} parent=0
    _
  %s6 = ssub.s32 1, %s4
  %s7 = scalar_select 0, %s6, %s4
  loop: start=0, step=1, limit=6
  $region2: #{double_conv_forward.7} parent=0 // loop_pre_header
    _
  $region3: #{double_conv_forward.7} parent=0 // loop_header
    %s9 = sphi 0, %s13
    %p10 = scmp.ge.s32.totalorder %s9, 6
    %s16 = sphi 0, %s28
    %s17 = sphi 0, %s24
    %s18 = sphi 0, %s16
    %s19 = sphi 0, %s17
    %s20 = sphi 0, %s18
    %s21 = sphi 0, %s19
    %s33 = sphi 0, %s35
    %s36 = sphi 0, %s33
    %s37 = sphi 0, %s36
    %s53 = sphi 0, %s37
    %s57 = sphi 0, %s57
    %s59 = sphi 0, %s57
    %s60 = sphi 0, %s59
    %s74 = sphi 0, %s60
    %s78 = sphi 0, %s78
    %s80 = sphi 0, %s78
    %s81 = sphi 0, %s80
    %s95 = sphi 0, %s81
    %s103 = sphi 0, %s105
    %s106 = sphi 0, %s103
    %s107 = sphi 0, %s106
    %s123 = sphi 0, %s107
  $region4: #{double_conv_forward.7} parent=0 // loop_header_branch
    %12 = sbr.rel (%p10) target = $region8
  $region5: #{double_conv_forward.7} parent=0 // loop_body
    %s14 = ssub.s32 %s9, 1
    %s15 = ssub.s32 %s9, 2
    %s22 = sadd.s32 1, %s17
    %p23 = scmp.ge.s32.totalorder %s22, 2
    %s24 = scalar_select %p23, 0, %s22
    %s25 = sadd.s32 1, %s16
    %s26 = scalar_select %p23, %s25, %s16
    %p27 = scmp.ge.s32.totalorder %s26, 2
    %s28 = scalar_select %p27, 0, %s26
    %s29 = ssub.s32 %s16, %s28
    %s30 = ssub.s32 %s17, %s24
    %s31 = sor.u32 %s29, %s30
    %p32 = scmp.eq.s32.totalorder %s31, 0
    %s34 = sadd.s32 %s33, 1
    %s35 = scalar_select %p32, %s33, %s34
    %p38 = pneg %p32
    %p39 = scmp.eq.s32.totalorder %s9, 3
    %p40 = por %p38, %p39
    %p41 = scmp.ne.s32.totalorder %s33, %s36
    %p42 = scmp.eq.s32.totalorder %s9, 0
    %p43 = por %p41, %p42
    %p44 = scmp.ne.s32.totalorder %s33, %s36
    %p45 = scmp.eq.s32.totalorder %s14, 3
    %p46 = por %p44, %p45
    %p47 = scmp.ne.s32.totalorder %s36, %s37
    %p48 = scmp.eq.s32.totalorder %s14, 0
    %p49 = por %p47, %p48
    %p50 = scmp.ne.s32.totalorder %s36, %s37
    %p51 = scmp.eq.s32.totalorder %s15, 3
    %p52 = por %p50, %p51
    %p54 = scmp.ne.s32.totalorder %s37, %s53
    %p55 = scmp.eq.s32.totalorder %s15, 0
    %p56 = por %p54, %p55
    %s58 = sadd.s32 %s57, 1
    %p61 = scmp.eq.s32.totalorder %s9, 3
    %p62 = scmp.ne.s32.totalorder %s57, %s59
    %p63 = scmp.eq.s32.totalorder %s9, 0
    %p64 = por %p62, %p63
    %p65 = scmp.ne.s32.totalorder %s57, %s59
    %p66 = scmp.eq.s32.totalorder %s14, 3
    %p67 = por %p65, %p66
    %p68 = scmp.ne.s32.totalorder %s59, %s60
    %p69 = scmp.eq.s32.totalorder %s14, 0
    %p70 = por %p68, %p69
    %p71 = scmp.ne.s32.totalorder %s59, %s60
    %p72 = scmp.eq.s32.totalorder %s15, 3
    %p73 = por %p71, %p72
    %p75 = scmp.ne.s32.totalorder %s60, %s74
    %p76 = scmp.eq.s32.totalorder %s15, 0
    %p77 = por %p75, %p76
    %s79 = sadd.s32 %s78, 1
    %p82 = scmp.eq.s32.totalorder %s9, 3
    %p83 = scmp.ne.s32.totalorder %s78, %s80
    %p84 = scmp.eq.s32.totalorder %s9, 0
    %p85 = por %p83, %p84
    %p86 = scmp.ne.s32.totalorder %s78, %s80
    %p87 = scmp.eq.s32.totalorder %s14, 3
    %p88 = por %p86, %p87
    %p89 = scmp.ne.s32.totalorder %s80, %s81
    %p90 = scmp.eq.s32.totalorder %s14, 0
    %p91 = por %p89, %p90
    %p92 = scmp.ne.s32.totalorder %s80, %s81
    %p93 = scmp.eq.s32.totalorder %s15, 3
    %p94 = por %p92, %p93
    %p96 = scmp.ne.s32.totalorder %s81, %s95
    %p97 = scmp.eq.s32.totalorder %s15, 0
    %p98 = por %p96, %p97
    %s99 = ssub.s32 %s16, %s28
    %s100 = ssub.s32 %s17, %s24
    %s101 = sor.u32 %s99, %s100
    %p102 = scmp.eq.s32.totalorder %s101, 0
    %s104 = sadd.s32 %s103, 1
    %s105 = scalar_select %p102, %s103, %s104
    %p108 = pneg %p102
    %p109 = scmp.eq.s32.totalorder %s9, 3
    %p110 = por %p108, %p109
    %p111 = scmp.ne.s32.totalorder %s103, %s106
    %p112 = scmp.eq.s32.totalorder %s9, 0
    %p113 = por %p111, %p112
    %p114 = scmp.ne.s32.totalorder %s103, %s106
    %p115 = scmp.eq.s32.totalorder %s14, 3
    %p116 = por %p114, %p115
    %p117 = scmp.ne.s32.totalorder %s106, %s107
    %p118 = scmp.eq.s32.totalorder %s14, 0
    %p119 = por %p117, %p118
    %p120 = scmp.ne.s32.totalorder %s106, %s107
    %p121 = scmp.eq.s32.totalorder %s15, 3
    %p122 = por %p120, %p121
    %p124 = scmp.ne.s32.totalorder %s107, %s123
    %p125 = scmp.eq.s32.totalorder %s15, 0
    %p126 = por %p124, %p125
    %p127 = scmp.le.s32.totalorder 1, %s9
    %p128 = scmp.lt.s32.totalorder %s9, 5
    %p129 = pnand %p127, %p128
    %p130 = pneg %p129
    // Predicated region
    $region9: #{double_conv_forward.7} parent=5 // pred_check
      _
    $region10: #{double_conv_forward.7} parent=5 // pred_check_branch
      %132 = sbr.rel (%p129) target = $region12
    $region11: #{double_conv_forward.7} parent=5 // pred_region
      %s133 = ssub.s32 %s9, 1
      // Predicated region
      $region13: #{double_conv_forward.7} parent=11 // pred_check
        %p134 = pneg %p70
      $region14: #{double_conv_forward.7} parent=11 // pred_check_branch
        %136 = sbr.rel (%p134) target = $region16
      $region15: #{double_conv_forward.7} parent=11 // pred_region
        _
      $region16: #{double_conv_forward.7} parent=11 // pred_fallthru
        _
      // Predicated region
      $region17: #{double_conv_forward.7} parent=11 // pred_check
        %p137 = pneg %p91
      $region18: #{double_conv_forward.7} parent=11 // pred_check_branch
        %139 = sbr.rel (%p137) target = $region20
      $region19: #{double_conv_forward.7} parent=11 // pred_region
        _
      $region20: #{double_conv_forward.7} parent=11 // pred_fallthru
        _
    $region12: #{double_conv_forward.7} parent=5 // pred_fallthru
      _
    %p140 = scmp.lt.s32.totalorder %s9, 4
    // Predicated region
    $region21: #{double_conv_forward.7} parent=5 // pred_check
      %p141 = pneg %p140
    $region22: #{double_conv_forward.7} parent=5 // pred_check_branch
      %143 = sbr.rel (%p141) target = $region24
    $region23: #{double_conv_forward.7} parent=5 // pred_region
      // Predicated region
      $region25: #{double_conv_forward.7} parent=23 // pred_check
        %p144 = pneg %p43
      $region26: #{double_conv_forward.7} parent=23 // pred_check_branch
        %146 = sbr.rel (%p144) target = $region28
      $region27: #{double_conv_forward.7} parent=23 // pred_region
        %s147 = smul.u32 8, %s17
        %p148 = scmp.lt.s32.totalorder %s16, 1
        %s149 = scalar_select %p148, %s16, 1
        %p150 = scmp.lt.s32.totalorder %s147, 15
        %s151 = scalar_select %p150, %s147, 15
        %s152 = smul.addr %s151, 2
        %s153 = smul.addr %s149, 32
        %s154 = sadd.s32 %s152, %s153
        %s155 = smul.addr %s154, 8
        %s156 = scalar_lea.vmem %s0, %s155
        %s157 = smul.u32 8, %s17
      $region28: #{double_conv_forward.7} parent=23 // pred_fallthru
        _
    $region24: #{double_conv_forward.7} parent=5 // pred_fallthru
      _
    %p158 = scmp.le.s32.totalorder 1, %s9
    %p159 = scmp.lt.s32.totalorder %s9, 5
    %p160 = pnand %p158, %p159
    %p161 = pneg %p160
    // Predicated region
    $region29: #{double_conv_forward.7} parent=5 // pred_check
      _
    $region30: #{double_conv_forward.7} parent=5 // pred_check_branch
      %163 = sbr.rel (%p160) target = $region32
    $region31: #{double_conv_forward.7} parent=5 // pred_region
      %s164 = ssub.s32 %s9, 1
      %s165 = smul.u32 8, %s19
      %p166 = scmp.lt.s32.totalorder %s18, 1
      %s167 = scalar_select %p166, %s18, 1
      %p168 = scmp.lt.s32.totalorder %s165, 15
      %s169 = scalar_select %p168, %s165, 15
      %s170 = smul.addr %s169, 2
      %s171 = smul.addr %s167, 32
      %s172 = sadd.s32 %s170, %s171
      %s173 = smul.addr %s172, 8
      %s174 = scalar_lea.vmem %s0, %s173
      %p175 = pneg %p49
      %p176 = pneg %p46
      %p177 = pneg %p70
      %p178 = pneg %p67
      %p179 = pneg %p91
      %p180 = pneg %p88
      %p181 = pneg %p119
      %p182 = pneg %p116
      %s183 = smul.u32 8, %s19
      %p184 = scmp.lt.s32.totalorder %s18, 1
      %s185 = scalar_select %p184, %s18, 1
      %p186 = scmp.lt.s32.totalorder %s183, 15
      %s187 = scalar_select %p186, %s183, 15
      %s188 = smul.addr %s187, 2
      %s189 = smul.addr %s185, 32
      %s190 = sadd.s32 %s188, %s189
      %s191 = smul.addr %s190, 8
      %s192 = scalar_lea.vmem %s3, %s191
      %s193 = smul.u32 8, %s19
      %p194 = scmp.lt.s32.totalorder %s18, 1
      %s195 = scalar_select %p194, %s18, 1
      %p196 = scmp.lt.s32.totalorder %s193, 15
      %s197 = scalar_select %p196, %s193, 15
      %s198 = smul.addr %s197, 2
      %s199 = smul.addr %s195, 32
      %s200 = sadd.s32 %s198, %s199
      %s201 = smul.addr %s200, 8
      %s202 = scalar_lea.vmem %s0, %s201
      %s203 = smul.u32 8, %s19
      %s204 = smul.u32 8, %s19
      %p205 = scmp.lt.s32.totalorder %s18, 1
      %s206 = scalar_select %p205, %s18, 1
      %p207 = scmp.lt.s32.totalorder %s204, 15
      %s208 = scalar_select %p207, %s204, 15
      %s209 = smul.addr %s208, 2
      %s210 = smul.addr %s206, 32
      %s211 = sadd.s32 %s209, %s210
      %s212 = smul.addr %s211, 8
      %s213 = scalar_lea.vmem %s3, %s212
      %s214 = smul.u32 8, %s19
      %v215 = vld [vmem:[%s202] sm:$0xff]
      %v216 = vld [vmem:[%s202 + $0x8] sm:$0xff]
      %v217 = vld [vmem:[%s202 + $0x10] sm:$0xff]
      %v218 = vld [vmem:[%s202 + $0x18] sm:$0xff]
      %v219 = vld [vmem:[%s202 + $0x20] sm:$0xff]
      %v220 = vld [vmem:[%s202 + $0x28] sm:$0xff]
      %v221 = vld [vmem:[%s202 + $0x30] sm:$0xff]
      %v222 = vld [vmem:[%s202 + $0x38] sm:$0xff]
      %v223 = vld [vmem:[%s202 + $0x40] sm:$0xff]
      %v224 = vld [vmem:[%s202 + $0x48] sm:$0xff]
      %v225 = vld [vmem:[%s202 + $0x50] sm:$0xff]
      %v226 = vld [vmem:[%s202 + $0x58] sm:$0xff]
      %v227 = vld [vmem:[%s202 + $0x60] sm:$0xff]
      %v228 = vld [vmem:[%s202 + $0x68] sm:$0xff]
      %v229 = vld [vmem:[%s202 + $0x70] sm:$0xff]
      %v230 = vld [vmem:[%s202 + $0x78] sm:$0xff]
      %v231 = vld [vmem:[%s1] sm:$0x1]
      %v233 = vlaneseq
      %v234 = vshrl.u32 %v233, 7
      %v235 = vsub.s32 0, %v234
      %v236 = vrot.slane %v231, %v235
      %v238 = vmul.f32 %v215, %v236
      %v239 = vmul.f32 %v216, %v236
      %v240 = vmul.f32 %v217, %v236
      %v241 = vmul.f32 %v218, %v236
      %v242 = vmul.f32 %v219, %v236
      %v243 = vmul.f32 %v220, %v236
      %v244 = vmul.f32 %v221, %v236
      %v245 = vmul.f32 %v222, %v236
      %v246 = vmul.f32 %v223, %v236
      %v247 = vmul.f32 %v224, %v236
      %v248 = vmul.f32 %v225, %v236
      %v249 = vmul.f32 %v226, %v236
      %v250 = vmul.f32 %v227, %v236
      %v251 = vmul.f32 %v228, %v236
      %v252 = vmul.f32 %v229, %v236
      %v253 = vmul.f32 %v230, %v236
      %v254 = vld [vmem:[%s2] sm:$0x1]
      %v256 = vlaneseq
      %v257 = vshrl.u32 %v256, 7
      %v258 = vsub.s32 0, %v257
      %v259 = vrot.slane %v254, %v258
      %v261 = vadd.f32 %v238, %v259
      %v262 = vadd.f32 %v239, %v259
      %v263 = vadd.f32 %v240, %v259
      %v264 = vadd.f32 %v241, %v259
      %v265 = vadd.f32 %v242, %v259
      %v266 = vadd.f32 %v243, %v259
      %v267 = vadd.f32 %v244, %v259
      %v268 = vadd.f32 %v245, %v259
      %v269 = vadd.f32 %v246, %v259
      %v270 = vadd.f32 %v247, %v259
      %v271 = vadd.f32 %v248, %v259
      %v272 = vadd.f32 %v249, %v259
      %v273 = vadd.f32 %v250, %v259
      %v274 = vadd.f32 %v251, %v259
      %v275 = vadd.f32 %v252, %v259
      %v276 = vadd.f32 %v253, %v259
      %v277 = vmax.f32 %v261, 0.0
      %v278 = vmax.f32 %v262, 0.0
      %v279 = vmax.f32 %v263, 0.0
      %v280 = vmax.f32 %v264, 0.0
      %v281 = vmax.f32 %v265, 0.0
      %v282 = vmax.f32 %v266, 0.0
      %v283 = vmax.f32 %v267, 0.0
      %v284 = vmax.f32 %v268, 0.0
      %v285 = vmax.f32 %v269, 0.0
      %v286 = vmax.f32 %v270, 0.0
      %v287 = vmax.f32 %v271, 0.0
      %v288 = vmax.f32 %v272, 0.0
      %v289 = vmax.f32 %v273, 0.0
      %v290 = vmax.f32 %v274, 0.0
      %v291 = vmax.f32 %v275, 0.0
      %v292 = vmax.f32 %v276, 0.0
      %293 = vst [vmem:[%s213] sm:$0xff] %v277
      %294 = vst [vmem:[%s213 + $0x8] sm:$0xff] %v278
      %295 = vst [vmem:[%s213 + $0x10] sm:$0xff] %v279
      %296 = vst [vmem:[%s213 + $0x18] sm:$0xff] %v280
      %297 = vst [vmem:[%s213 + $0x20] sm:$0xff] %v281
      %298 = vst [vmem:[%s213 + $0x28] sm:$0xff] %v282
      %299 = vst [vmem:[%s213 + $0x30] sm:$0xff] %v283
      %300 = vst [vmem:[%s213 + $0x38] sm:$0xff] %v284
      %301 = vst [vmem:[%s213 + $0x40] sm:$0xff] %v285
      %302 = vst [vmem:[%s213 + $0x48] sm:$0xff] %v286
      %303 = vst [vmem:[%s213 + $0x50] sm:$0xff] %v287
      %304 = vst [vmem:[%s213 + $0x58] sm:$0xff] %v288
      %305 = vst [vmem:[%s213 + $0x60] sm:$0xff] %v289
      %306 = vst [vmem:[%s213 + $0x68] sm:$0xff] %v290
      %307 = vst [vmem:[%s213 + $0x70] sm:$0xff] %v291
      %308 = vst [vmem:[%s213 + $0x78] sm:$0xff] %v292
      %s309 = smul.u32 8, %s19
      %p310 = scmp.lt.s32.totalorder %s18, 1
      %s311 = scalar_select %p310, %s18, 1
      %p312 = scmp.lt.s32.totalorder %s309, 15
      %s313 = scalar_select %p312, %s309, 15
      %s314 = smul.addr %s313, 2
      %s315 = smul.addr %s311, 32
      %s316 = sadd.s32 %s314, %s315
      %s317 = smul.addr %s316, 8
      %s318 = scalar_lea.vmem %s3, %s317
      // Predicated region
      $region33: #{double_conv_forward.7} parent=31 // pred_check
        %p319 = pneg %p116
      $region34: #{double_conv_forward.7} parent=31 // pred_check_branch
        %321 = sbr.rel (%p319) target = $region36
      $region35: #{double_conv_forward.7} parent=31 // pred_region
        %s322 = smul.u32 8, %s19
      $region36: #{double_conv_forward.7} parent=31 // pred_fallthru
        _
    $region32: #{double_conv_forward.7} parent=5 // pred_fallthru
      _
    %p323 = scmp.le.s32.totalorder 2, %s9
    // Predicated region
    $region37: #{double_conv_forward.7} parent=5 // pred_check
      %p324 = pneg %p323
    $region38: #{double_conv_forward.7} parent=5 // pred_check_branch
      %326 = sbr.rel (%p324) target = $region40
    $region39: #{double_conv_forward.7} parent=5 // pred_region
      %s327 = ssub.s32 %s9, 2
      // Predicated region
      $region41: #{double_conv_forward.7} parent=39 // pred_check
        %p328 = pneg %p122
      $region42: #{double_conv_forward.7} parent=39 // pred_check_branch
        %330 = sbr.rel (%p328) target = $region44
      $region43: #{double_conv_forward.7} parent=39 // pred_region
        %s331 = smul.u32 8, %s21
        %p332 = scmp.lt.s32.totalorder %s20, 1
        %s333 = scalar_select %p332, %s20, 1
        %p334 = scmp.lt.s32.totalorder %s331, 15
        %s335 = scalar_select %p334, %s331, 15
        %s336 = smul.addr %s335, 2
        %s337 = smul.addr %s333, 32
        %s338 = sadd.s32 %s336, %s337
        %s339 = smul.addr %s338, 8
        %s340 = scalar_lea.vmem %s3, %s339
      $region44: #{double_conv_forward.7} parent=39 // pred_fallthru
        _
    $region40: #{double_conv_forward.7} parent=5 // pred_fallthru
      _
  $region6: #{double_conv_forward.7} parent=0 // loop_footer
    %s13 = sadd.s32 1, %s9
  $region7: #{double_conv_forward.7} parent=0 // loop_footer_branch
    %8 = sbr.rel target = $region3
  $region8: #{double_conv_forward.7} parent=0 // loop_exit
    _

// kernel: double_conv_forward.5
$region0: #{double_conv_forward.5}
  #allocation0 [shape = 'u32[]', space=smem, size = 0x4, offset = 0x4, fixed_abs, tag = 'smem constant byte address 0x4 - core index']
  #allocation1 [shape = 'u32[144,128]{1,0:T(1,128)}', space=vmem, size = 0x12000, scoped, tag = 'internal scratch']
  %s0 = inlined_call_operand.vmem [shape: f32[2,16,16,128], index: 0, kind: input, shape index: {}]
  %s1 = inlined_call_operand.vmem [shape: f32[1,128], index: 1, kind: input, shape index: {}]
  %s2 = inlined_call_operand.vmem [shape: f32[1,128], index: 2, kind: input, shape index: {}]
  %s3 = inlined_call_operand.vmem [shape: bf16[2,16,16,128], index: 3, kind: output, shape index: {}]
  %s4 = sld [smem:[#allocation0]]
  $region45: #{double_conv_forward.5} parent=0
    _
  %s6 = ssub.s32 1, %s4
  %s7 = scalar_select 0, %s6, %s4
  loop: start=0, step=1, limit=6
  $region2: #{double_conv_forward.5} parent=0 // loop_pre_header
    _
  $region3: #{double_conv_forward.5} parent=0 // loop_header
    %s9 = sphi 0, %s13
    %p10 = scmp.ge.s32.totalorder %s9, 6
    %s16 = sphi 0, %s28
    %s17 = sphi 0, %s24
    %s18 = sphi 0, %s16
    %s19 = sphi 0, %s17
    %s20 = sphi 0, %s18
    %s21 = sphi 0, %s19
    %s33 = sphi 0, %s35
    %s36 = sphi 0, %s33
    %s37 = sphi 0, %s36
    %s53 = sphi 0, %s37
    %s57 = sphi 0, %s57
    %s59 = sphi 0, %s57
    %s60 = sphi 0, %s59
    %s74 = sphi 0, %s60
    %s78 = sphi 0, %s78
    %s80 = sphi 0, %s78
    %s81 = sphi 0, %s80
    %s95 = sphi 0, %s81
    %s103 = sphi 0, %s105
    %s106 = sphi 0, %s103
    %s107 = sphi 0, %s106
    %s123 = sphi 0, %s107
  $region4: #{double_conv_forward.5} parent=0 // loop_header_branch
    %12 = sbr.rel (%p10) target = $region8
  $region5: #{double_conv_forward.5} parent=0 // loop_body
    %s14 = ssub.s32 %s9, 1
    %s15 = ssub.s32 %s9, 2
    %s22 = sadd.s32 1, %s17
    %p23 = scmp.ge.s32.totalorder %s22, 2
    %s24 = scalar_select %p23, 0, %s22
    %s25 = sadd.s32 1, %s16
    %s26 = scalar_select %p23, %s25, %s16
    %p27 = scmp.ge.s32.totalorder %s26, 2
    %s28 = scalar_select %p27, 0, %s26
    %s29 = ssub.s32 %s16, %s28
    %s30 = ssub.s32 %s17, %s24
    %s31 = sor.u32 %s29, %s30
    %p32 = scmp.eq.s32.totalorder %s31, 0
    %s34 = sadd.s32 %s33, 1
    %s35 = scalar_select %p32, %s33, %s34
    %p38 = pneg %p32
    %p39 = scmp.eq.s32.totalorder %s9, 3
    %p40 = por %p38, %p39
    %p41 = scmp.ne.s32.totalorder %s33, %s36
    %p42 = scmp.eq.s32.totalorder %s9, 0
    %p43 = por %p41, %p42
    %p44 = scmp.ne.s32.totalorder %s33, %s36
    %p45 = scmp.eq.s32.totalorder %s14, 3
    %p46 = por %p44, %p45
    %p47 = scmp.ne.s32.totalorder %s36, %s37
    %p48 = scmp.eq.s32.totalorder %s14, 0
    %p49 = por %p47, %p48
    %p50 = scmp.ne.s32.totalorder %s36, %s37
    %p51 = scmp.eq.s32.totalorder %s15, 3
    %p52 = por %p50, %p51
    %p54 = scmp.ne.s32.totalorder %s37, %s53
    %p55 = scmp.eq.s32.totalorder %s15, 0
    %p56 = por %p54, %p55
    %s58 = sadd.s32 %s57, 1
    %p61 = scmp.eq.s32.totalorder %s9, 3
    %p62 = scmp.ne.s32.totalorder %s57, %s59
    %p63 = scmp.eq.s32.totalorder %s9, 0
    %p64 = por %p62, %p63
    %p65 = scmp.ne.s32.totalorder %s57, %s59
    %p66 = scmp.eq.s32.totalorder %s14, 3
    %p67 = por %p65, %p66
    %p68 = scmp.ne.s32.totalorder %s59, %s60
    %p69 = scmp.eq.s32.totalorder %s14, 0
    %p70 = por %p68, %p69
    %p71 = scmp.ne.s32.totalorder %s59, %s60
    %p72 = scmp.eq.s32.totalorder %s15, 3
    %p73 = por %p71, %p72
    %p75 = scmp.ne.s32.totalorder %s60, %s74
    %p76 = scmp.eq.s32.totalorder %s15, 0
    %p77 = por %p75, %p76
    %s79 = sadd.s32 %s78, 1
    %p82 = scmp.eq.s32.totalorder %s9, 3
    %p83 = scmp.ne.s32.totalorder %s78, %s80
    %p84 = scmp.eq.s32.totalorder %s9, 0
    %p85 = por %p83, %p84
    %p86 = scmp.ne.s32.totalorder %s78, %s80
    %p87 = scmp.eq.s32.totalorder %s14, 3
    %p88 = por %p86, %p87
    %p89 = scmp.ne.s32.totalorder %s80, %s81
    %p90 = scmp.eq.s32.totalorder %s14, 0
    %p91 = por %p89, %p90
    %p92 = scmp.ne.s32.totalorder %s80, %s81
    %p93 = scmp.eq.s32.totalorder %s15, 3
    %p94 = por %p92, %p93
    %p96 = scmp.ne.s32.totalorder %s81, %s95
    %p97 = scmp.eq.s32.totalorder %s15, 0
    %p98 = por %p96, %p97
    %s99 = ssub.s32 %s16, %s28
    %s100 = ssub.s32 %s17, %s24
    %s101 = sor.u32 %s99, %s100
    %p102 = scmp.eq.s32.totalorder %s101, 0
    %s104 = sadd.s32 %s103, 1
    %s105 = scalar_select %p102, %s103, %s104
    %p108 = pneg %p102
    %p109 = scmp.eq.s32.totalorder %s9, 3
    %p110 = por %p108, %p109
    %p111 = scmp.ne.s32.totalorder %s103, %s106
    %p112 = scmp.eq.s32.totalorder %s9, 0
    %p113 = por %p111, %p112
    %p114 = scmp.ne.s32.totalorder %s103, %s106
    %p115 = scmp.eq.s32.totalorder %s14, 3
    %p116 = por %p114, %p115
    %p117 = scmp.ne.s32.totalorder %s106, %s107
    %p118 = scmp.eq.s32.totalorder %s14, 0
    %p119 = por %p117, %p118
    %p120 = scmp.ne.s32.totalorder %s106, %s107
    %p121 = scmp.eq.s32.totalorder %s15, 3
    %p122 = por %p120, %p121
    %p124 = scmp.ne.s32.totalorder %s107, %s123
    %p125 = scmp.eq.s32.totalorder %s15, 0
    %p126 = por %p124, %p125
    %p127 = scmp.le.s32.totalorder 1, %s9
    %p128 = scmp.lt.s32.totalorder %s9, 5
    %p129 = pnand %p127, %p128
    %p130 = pneg %p129
    // Predicated region
    $region9: #{double_conv_forward.5} parent=5 // pred_check
      _
    $region10: #{double_conv_forward.5} parent=5 // pred_check_branch
      %132 = sbr.rel (%p129) target = $region12
    $region11: #{double_conv_forward.5} parent=5 // pred_region
      %s133 = ssub.s32 %s9, 1
      // Predicated region
      $region13: #{double_conv_forward.5} parent=11 // pred_check
        %p134 = pneg %p70
      $region14: #{double_conv_forward.5} parent=11 // pred_check_branch
        %136 = sbr.rel (%p134) target = $region16
      $region15: #{double_conv_forward.5} parent=11 // pred_region
        _
      $region16: #{double_conv_forward.5} parent=11 // pred_fallthru
        _
      // Predicated region
      $region17: #{double_conv_forward.5} parent=11 // pred_check
        %p137 = pneg %p91
      $region18: #{double_conv_forward.5} parent=11 // pred_check_branch
        %139 = sbr.rel (%p137) target = $region20
      $region19: #{double_conv_forward.5} parent=11 // pred_region
        _
      $region20: #{double_conv_forward.5} parent=11 // pred_fallthru
        _
    $region12: #{double_conv_forward.5} parent=5 // pred_fallthru
      _
    %p140 = scmp.lt.s32.totalorder %s9, 4
    // Predicated region
    $region21: #{double_conv_forward.5} parent=5 // pred_check
      %p141 = pneg %p140
    $region22: #{double_conv_forward.5} parent=5 // pred_check_branch
      %143 = sbr.rel (%p141) target = $region24
    $region23: #{double_conv_forward.5} parent=5 // pred_region
      // Predicated region
      $region25: #{double_conv_forward.5} parent=23 // pred_check
        %p144 = pneg %p43
      $region26: #{double_conv_forward.5} parent=23 // pred_check_branch
        %146 = sbr.rel (%p144) target = $region28
      $region27: #{double_conv_forward.5} parent=23 // pred_region
        %s147 = smul.u32 8, %s17
        %p148 = scmp.lt.s32.totalorder %s16, 1
        %s149 = scalar_select %p148, %s16, 1
        %p150 = scmp.lt.s32.totalorder %s147, 15
        %s151 = scalar_select %p150, %s147, 15
        %s152 = smul.addr %s151, 2
        %s153 = smul.addr %s149, 32
        %s154 = sadd.s32 %s152, %s153
        %s155 = smul.addr %s154, 8
        %s156 = scalar_lea.vmem %s0, %s155
        %s157 = smul.u32 8, %s17
      $region28: #{double_conv_forward.5} parent=23 // pred_fallthru
        _
    $region24: #{double_conv_forward.5} parent=5 // pred_fallthru
      _
    %p158 = scmp.le.s32.totalorder 1, %s9
    %p159 = scmp.lt.s32.totalorder %s9, 5
    %p160 = pnand %p158, %p159
    %p161 = pneg %p160
    // Predicated region
    $region29: #{double_conv_forward.5} parent=5 // pred_check
      _
    $region30: #{double_conv_forward.5} parent=5 // pred_check_branch
      %163 = sbr.rel (%p160) target = $region32
    $region31: #{double_conv_forward.5} parent=5 // pred_region
      %s164 = ssub.s32 %s9, 1
      %s165 = smul.u32 8, %s19
      %p166 = scmp.lt.s32.totalorder %s18, 1
      %s167 = scalar_select %p166, %s18, 1
      %p168 = scmp.lt.s32.totalorder %s165, 15
      %s169 = scalar_select %p168, %s165, 15
      %s170 = smul.addr %s169, 2
      %s171 = smul.addr %s167, 32
      %s172 = sadd.s32 %s170, %s171
      %s173 = smul.addr %s172, 8
      %s174 = scalar_lea.vmem %s0, %s173
      %p175 = pneg %p49
      %p176 = pneg %p46
      %p177 = pneg %p70
      %p178 = pneg %p67
      %p179 = pneg %p91
      %p180 = pneg %p88
      %p181 = pneg %p119
      %p182 = pneg %p116
      %s183 = smul.u32 8, %s19
      %p184 = scmp.lt.s32.totalorder %s18, 1
      %s185 = scalar_select %p184, %s18, 1
      %p186 = scmp.lt.s32.totalorder %s183, 15
      %s187 = scalar_select %p186, %s183, 15
      %s188 = smul.addr %s187, 2
      %s189 = smul.addr %s185, 32
      %s190 = sadd.s32 %s188, %s189
      %s191 = smul.addr %s190, 4
      %s192 = scalar_lea.vmem %s3, %s191
      %s193 = smul.u32 8, %s19
      %p194 = scmp.lt.s32.totalorder %s18, 1
      %s195 = scalar_select %p194, %s18, 1
      %p196 = scmp.lt.s32.totalorder %s193, 15
      %s197 = scalar_select %p196, %s193, 15
      %s198 = smul.addr %s197, 2
      %s199 = smul.addr %s195, 32
      %s200 = sadd.s32 %s198, %s199
      %s201 = smul.addr %s200, 8
      %s202 = scalar_lea.vmem %s0, %s201
      %s203 = smul.u32 8, %s19
      %s204 = smul.u32 8, %s19
      %p205 = scmp.lt.s32.totalorder %s18, 1
      %s206 = scalar_select %p205, %s18, 1
      %p207 = scmp.lt.s32.totalorder %s204, 15
      %s208 = scalar_select %p207, %s204, 15
      %s209 = smul.addr %s208, 2
      %s210 = smul.addr %s206, 32
      %s211 = sadd.s32 %s209, %s210
      %s212 = smul.addr %s211, 4
      %s213 = scalar_lea.vmem %s3, %s212
      %s214 = smul.u32 8, %s19
      %v215 = vld [vmem:[%s202] sm:$0xff]
      %v216 = vld [vmem:[%s202 + $0x8] sm:$0xff]
      %v217 = vld [vmem:[%s202 + $0x10] sm:$0xff]
      %v218 = vld [vmem:[%s202 + $0x18] sm:$0xff]
      %v219 = vld [vmem:[%s202 + $0x20] sm:$0xff]
      %v220 = vld [vmem:[%s202 + $0x28] sm:$0xff]
      %v221 = vld [vmem:[%s202 + $0x30] sm:$0xff]
      %v222 = vld [vmem:[%s202 + $0x38] sm:$0xff]
      %v223 = vld [vmem:[%s202 + $0x40] sm:$0xff]
      %v224 = vld [vmem:[%s202 + $0x48] sm:$0xff]
      %v225 = vld [vmem:[%s202 + $0x50] sm:$0xff]
      %v226 = vld [vmem:[%s202 + $0x58] sm:$0xff]
      %v227 = vld [vmem:[%s202 + $0x60] sm:$0xff]
      %v228 = vld [vmem:[%s202 + $0x68] sm:$0xff]
      %v229 = vld [vmem:[%s202 + $0x70] sm:$0xff]
      %v230 = vld [vmem:[%s202 + $0x78] sm:$0xff]
      %v231 = vld [vmem:[%s1] sm:$0x1]
      %v233 = vlaneseq
      %v234 = vshrl.u32 %v233, 7
      %v235 = vsub.s32 0, %v234
      %v236 = vrot.slane %v231, %v235
      %v238 = vmul.f32 %v215, %v236
      %v239 = vmul.f32 %v216, %v236
      %v240 = vmul.f32 %v217, %v236
      %v241 = vmul.f32 %v218, %v236
      %v242 = vmul.f32 %v219, %v236
      %v243 = vmul.f32 %v220, %v236
      %v244 = vmul.f32 %v221, %v236
      %v245 = vmul.f32 %v222, %v236
      %v246 = vmul.f32 %v223, %v236
      %v247 = vmul.f32 %v224, %v236
      %v248 = vmul.f32 %v225, %v236
      %v249 = vmul.f32 %v226, %v236
      %v250 = vmul.f32 %v227, %v236
      %v251 = vmul.f32 %v228, %v236
      %v252 = vmul.f32 %v229, %v236
      %v253 = vmul.f32 %v230, %v236
      %v254 = vld [vmem:[%s2] sm:$0x1]
      %v256 = vlaneseq
      %v257 = vshrl.u32 %v256, 7
      %v258 = vsub.s32 0, %v257
      %v259 = vrot.slane %v254, %v258
      %v261 = vadd.f32 %v238, %v259
      %v262 = vadd.f32 %v239, %v259
      %v263 = vadd.f32 %v240, %v259
      %v264 = vadd.f32 %v241, %v259
      %v265 = vadd.f32 %v242, %v259
      %v266 = vadd.f32 %v243, %v259
      %v267 = vadd.f32 %v244, %v259
      %v268 = vadd.f32 %v245, %v259
      %v269 = vadd.f32 %v246, %v259
      %v270 = vadd.f32 %v247, %v259
      %v271 = vadd.f32 %v248, %v259
      %v272 = vadd.f32 %v249, %v259
      %v273 = vadd.f32 %v250, %v259
      %v274 = vadd.f32 %v251, %v259
      %v275 = vadd.f32 %v252, %v259
      %v276 = vadd.f32 %v253, %v259
      %v277 = vmax.f32 %v261, 0.0
      %v278 = vmax.f32 %v262, 0.0
      %v279 = vmax.f32 %v263, 0.0
      %v280 = vmax.f32 %v264, 0.0
      %v281 = vmax.f32 %v265, 0.0
      %v282 = vmax.f32 %v266, 0.0
      %v283 = vmax.f32 %v267, 0.0
      %v284 = vmax.f32 %v268, 0.0
      %v285 = vmax.f32 %v269, 0.0
      %v286 = vmax.f32 %v270, 0.0
      %v287 = vmax.f32 %v271, 0.0
      %v288 = vmax.f32 %v272, 0.0
      %v289 = vmax.f32 %v273, 0.0
      %v290 = vmax.f32 %v274, 0.0
      %v291 = vmax.f32 %v275, 0.0
      %v292 = vmax.f32 %v276, 0.0
      %v293 = vpack.c.bf16 %v278, %v277
      %v294 = vpack.c.bf16 %v280, %v279
      %v295 = vpack.c.bf16 %v282, %v281
      %v296 = vpack.c.bf16 %v284, %v283
      %v297 = vpack.c.bf16 %v286, %v285
      %v298 = vpack.c.bf16 %v288, %v287
      %v299 = vpack.c.bf16 %v290, %v289
      %v300 = vpack.c.bf16 %v292, %v291
      %v309 = vunpack.c.l.b16 %v293
      %v310 = vunpack.c.h.b16 %v293
      %v311 = vunpack.c.l.b16 %v294
      %v312 = vunpack.c.h.b16 %v294
      %v313 = vunpack.c.l.b16 %v295
      %v314 = vunpack.c.h.b16 %v295
      %v315 = vunpack.c.l.b16 %v296
      %v316 = vunpack.c.h.b16 %v296
      %v317 = vunpack.c.l.b16 %v297
      %v318 = vunpack.c.h.b16 %v297
      %v319 = vunpack.c.l.b16 %v298
      %v320 = vunpack.c.h.b16 %v298
      %v321 = vunpack.c.l.b16 %v299
      %v322 = vunpack.c.h.b16 %v299
      %v323 = vunpack.c.l.b16 %v300
      %v324 = vunpack.c.h.b16 %v300
      %v325 = vpack.c.b16 %v309, %v309
      %v326 = vpack.c.b16 %v310, %v310
      %v327 = vpack.c.b16 %v311, %v311
      %v328 = vpack.c.b16 %v312, %v312
      %v329 = vpack.c.b16 %v313, %v313
      %v330 = vpack.c.b16 %v314, %v314
      %v331 = vpack.c.b16 %v315, %v315
      %v332 = vpack.c.b16 %v316, %v316
      %v333 = vpack.c.b16 %v317, %v317
      %v334 = vpack.c.b16 %v318, %v318
      %v335 = vpack.c.b16 %v319, %v319
      %v336 = vpack.c.b16 %v320, %v320
      %v337 = vpack.c.b16 %v321, %v321
      %v338 = vpack.c.b16 %v322, %v322
      %v339 = vpack.c.b16 %v323, %v323
      %v340 = vpack.c.b16 %v324, %v324
      %357 = vst [vmem:[%s213] sm:$0xf] %v325
      %358 = vst [vmem:[%s213 + $0x4] sm:$0xf] %v326
      %359 = vst [vmem:[%s213 + $0x8] sm:$0xf] %v327
      %360 = vst [vmem:[%s213 + $0xc] sm:$0xf] %v328
      %361 = vst [vmem:[%s213 + $0x10] sm:$0xf] %v329
      %362 = vst [vmem:[%s213 + $0x14] sm:$0xf] %v330
      %363 = vst [vmem:[%s213 + $0x18] sm:$0xf] %v331
      %364 = vst [vmem:[%s213 + $0x1c] sm:$0xf] %v332
      %365 = vst [vmem:[%s213 + $0x20] sm:$0xf] %v333
      %366 = vst [vmem:[%s213 + $0x24] sm:$0xf] %v334
      %367 = vst [vmem:[%s213 + $0x28] sm:$0xf] %v335
      %368 = vst [vmem:[%s213 + $0x2c] sm:$0xf] %v336
      %369 = vst [vmem:[%s213 + $0x30] sm:$0xf] %v337
      %370 = vst [vmem:[%s213 + $0x34] sm:$0xf] %v338
      %371 = vst [vmem:[%s213 + $0x38] sm:$0xf] %v339
      %372 = vst [vmem:[%s213 + $0x3c] sm:$0xf] %v340
      %s373 = smul.u32 8, %s19
      %p374 = scmp.lt.s32.totalorder %s18, 1
      %s375 = scalar_select %p374, %s18, 1
      %p376 = scmp.lt.s32.totalorder %s373, 15
      %s377 = scalar_select %p376, %s373, 15
      %s378 = smul.addr %s377, 2
      %s379 = smul.addr %s375, 32
      %s380 = sadd.s32 %s378, %s379
      %s381 = smul.addr %s380, 4
      %s382 = scalar_lea.vmem %s3, %s381
      // Predicated region
      $region33: #{double_conv_forward.5} parent=31 // pred_check
        %p383 = pneg %p116
      $region34: #{double_conv_forward.5} parent=31 // pred_check_branch
        %385 = sbr.rel (%p383) target = $region36
      $region35: #{double_conv_forward.5} parent=31 // pred_region
        %s386 = smul.u32 8, %s19
      $region36: #{double_conv_forward.5} parent=31 // pred_fallthru
        _
    $region32: #{double_conv_forward.5} parent=5 // pred_fallthru
      _
    %p387 = scmp.le.s32.totalorder 2, %s9
    // Predicated region
    $region37: #{double_conv_forward.5} parent=5 // pred_check
      %p388 = pneg %p387
    $region38: #{double_conv_forward.5} parent=5 // pred_check_branch
      %390 = sbr.rel (%p388) target = $region40
    $region39: #{double_conv_forward.5} parent=5 // pred_region
      %s391 = ssub.s32 %s9, 2
      // Predicated region
      $region41: #{double_conv_forward.5} parent=39 // pred_check
        %p392 = pneg %p122
      $region42: #{double_conv_forward.5} parent=39 // pred_check_branch
        %394 = sbr.rel (%p392) target = $region44
      $region43: #{double_conv_forward.5} parent=39 // pred_region
        %s395 = smul.u32 8, %s21
        %p396 = scmp.lt.s32.totalorder %s20, 1
        %s397 = scalar_select %p396, %s20, 1
        %p398 = scmp.lt.s32.totalorder %s395, 15
        %s399 = scalar_select %p398, %s395, 15
        %s400 = smul.addr %s399, 2
        %s401 = smul.addr %s397, 32
        %s402 = sadd.s32 %s400, %s401
        %s403 = smul.addr %s402, 4
        %s404 = scalar_lea.vmem %s3, %s403
      $region44: #{double_conv_forward.5} parent=39 // pred_fallthru
        _
    $region40: #{double_conv_forward.5} parent=5 // pred_fallthru
      _
  $region6: #{double_conv_forward.5} parent=0 // loop_footer
    %s13 = sadd.s32 1, %s9
  $region7: #{double_conv_forward.5} parent=0 // loop_footer_branch
    %8 = sbr.rel target = $region3
  $region8: #{double_conv_forward.5} parent=0 // loop_exit
    _

// kernel: double_conv_forward.4
$region0: #{double_conv_forward.4}
  #allocation0 [shape = 'u32[]', space=smem, size = 0x4, offset = 0x4, fixed_abs, tag = 'smem constant byte address 0x4 - core index']
  #allocation1 [shape = 'u32[144,128]{1,0:T(1,128)}', space=vmem, size = 0x12000, scoped, tag = 'internal scratch']
  %s0 = inlined_call_operand.vmem [shape: bf16[2,18,18,128], index: 0, kind: input, shape index: {}]
  %s1 = inlined_call_operand.vmem [shape: bf16[9,128,128], index: 1, kind: input, shape index: {}]
  %s2 = inlined_call_operand.vmem [shape: f32[2,16,16,128], index: 2, kind: output, shape index: {0}]
  %s3 = inlined_call_operand.vmem [shape: f32[2,2,2,128], index: 3, kind: output, shape index: {1}]
  %4 = xla_tuple %s2, %s3
  %s5 = sld [smem:[#allocation0]]
  $region49: #{double_conv_forward.4} parent=0
    _
  %s7 = ssub.s32 1, %s5
  %s8 = scalar_select 0, %s7, %s5
  loop: start=0, step=1, limit=6
  $region2: #{double_conv_forward.4} parent=0 // loop_pre_header
    _
  $region3: #{double_conv_forward.4} parent=0 // loop_header
    %s10 = sphi 0, %s14
    %p11 = scmp.ge.s32.totalorder %s10, 6
    %s17 = sphi 0, %s29
    %s18 = sphi 0, %s25
    %s19 = sphi 0, %s17
    %s20 = sphi 0, %s18
    %s21 = sphi 0, %s19
    %s22 = sphi 0, %s20
    %s32 = sphi 0, %s34
    %s35 = sphi 0, %s32
    %s36 = sphi 0, %s35
    %s52 = sphi 0, %s36
    %s56 = sphi 0, %s56
    %s58 = sphi 0, %s56
    %s59 = sphi 0, %s58
    %s73 = sphi 0, %s59
    %s81 = sphi 0, %s83
    %s84 = sphi 0, %s81
    %s85 = sphi 0, %s84
    %s101 = sphi 0, %s85
    %s109 = sphi 0, %s111
    %s112 = sphi 0, %s109
    %s113 = sphi 0, %s112
    %s129 = sphi 0, %s113
  $region4: #{double_conv_forward.4} parent=0 // loop_header_branch
    %13 = sbr.rel (%p11) target = $region8
  $region5: #{double_conv_forward.4} parent=0 // loop_body
    %s15 = ssub.s32 %s10, 1
    %s16 = ssub.s32 %s10, 2
    %s23 = sadd.s32 1, %s18
    %p24 = scmp.ge.s32.totalorder %s23, 2
    %s25 = scalar_select %p24, 0, %s23
    %s26 = sadd.s32 1, %s17
    %s27 = scalar_select %p24, %s26, %s17
    %p28 = scmp.ge.s32.totalorder %s27, 2
    %s29 = scalar_select %p28, 0, %s27
    %s30 = ssub.s32 %s17, %s29
    %p31 = scmp.eq.s32.totalorder %s30, 0
    %s33 = sadd.s32 %s32, 1
    %s34 = scalar_select %p31, %s32, %s33
    %p37 = pneg %p31
    %p38 = scmp.eq.s32.totalorder %s10, 3
    %p39 = por %p37, %p38
    %p40 = scmp.ne.s32.totalorder %s32, %s35
    %p41 = scmp.eq.s32.totalorder %s10, 0
    %p42 = por %p40, %p41
    %p43 = scmp.ne.s32.totalorder %s32, %s35
    %p44 = scmp.eq.s32.totalorder %s15, 3
    %p45 = por %p43, %p44
    %p46 = scmp.ne.s32.totalorder %s35, %s36
    %p47 = scmp.eq.s32.totalorder %s15, 0
    %p48 = por %p46, %p47
    %p49 = scmp.ne.s32.totalorder %s35, %s36
    %p50 = scmp.eq.s32.totalorder %s16, 3
    %p51 = por %p49, %p50
    %p53 = scmp.ne.s32.totalorder %s36, %s52
    %p54 = scmp.eq.s32.totalorder %s16, 0
    %p55 = por %p53, %p54
    %s57 = sadd.s32 %s56, 1
    %p60 = scmp.eq.s32.totalorder %s10, 3
    %p61 = scmp.ne.s32.totalorder %s56, %s58
    %p62 = scmp.eq.s32.totalorder %s10, 0
    %p63 = por %p61, %p62
    %p64 = scmp.ne.s32.totalorder %s56, %s58
    %p65 = scmp.eq.s32.totalorder %s15, 3
    %p66 = por %p64, %p65
    %p67 = scmp.ne.s32.totalorder %s58, %s59
    %p68 = scmp.eq.s32.totalorder %s15, 0
    %p69 = por %p67, %p68
    %p70 = scmp.ne.s32.totalorder %s58, %s59
    %p71 = scmp.eq.s32.totalorder %s16, 3
    %p72 = por %p70, %p71
    %p74 = scmp.ne.s32.totalorder %s59, %s73
    %p75 = scmp.eq.s32.totalorder %s16, 0
    %p76 = por %p74, %p75
    %s77 = ssub.s32 %s17, %s29
    %s78 = ssub.s32 %s18, %s25
    %s79 = sor.u32 %s77, %s78
    %p80 = scmp.eq.s32.totalorder %s79, 0
    %s82 = sadd.s32 %s81, 1
    %s83 = scalar_select %p80, %s81, %s82
    %p86 = pneg %p80
    %p87 = scmp.eq.s32.totalorder %s10, 3
    %p88 = por %p86, %p87
    %p89 = scmp.ne.s32.totalorder %s81, %s84
    %p90 = scmp.eq.s32.totalorder %s10, 0
    %p91 = por %p89, %p90
    %p92 = scmp.ne.s32.totalorder %s81, %s84
    %p93 = scmp.eq.s32.totalorder %s15, 3
    %p94 = por %p92, %p93
    %p95 = scmp.ne.s32.totalorder %s84, %s85
    %p96 = scmp.eq.s32.totalorder %s15, 0
    %p97 = por %p95, %p96
    %p98 = scmp.ne.s32.totalorder %s84, %s85
    %p99 = scmp.eq.s32.totalorder %s16, 3
    %p100 = por %p98, %p99
    %p102 = scmp.ne.s32.totalorder %s85, %s101
    %p103 = scmp.eq.s32.totalorder %s16, 0
    %p104 = por %p102, %p103
    %s105 = ssub.s32 %s17, %s29
    %s106 = ssub.s32 %s18, %s25
    %s107 = sor.u32 %s105, %s106
    %p108 = scmp.eq.s32.totalorder %s107, 0
    %s110 = sadd.s32 %s109, 1
    %s111 = scalar_select %p108, %s109, %s110
    %p114 = pneg %p108
    %p115 = scmp.eq.s32.totalorder %s10, 3
    %p116 = por %p114, %p115
    %p117 = scmp.ne.s32.totalorder %s109, %s112
    %p118 = scmp.eq.s32.totalorder %s10, 0
    %p119 = por %p117, %p118
    %p120 = scmp.ne.s32.totalorder %s109, %s112
    %p121 = scmp.eq.s32.totalorder %s15, 3
    %p122 = por %p120, %p121
    %p123 = scmp.ne.s32.totalorder %s112, %s113
    %p124 = scmp.eq.s32.totalorder %s15, 0
    %p125 = por %p123, %p124
    %p126 = scmp.ne.s32.totalorder %s112, %s113
    %p127 = scmp.eq.s32.totalorder %s16, 3
    %p128 = por %p126, %p127
    %p130 = scmp.ne.s32.totalorder %s113, %s129
    %p131 = scmp.eq.s32.totalorder %s16, 0
    %p132 = por %p130, %p131
    %p133 = scmp.le.s32.totalorder 1, %s10
    %p134 = scmp.lt.s32.totalorder %s10, 5
    %p135 = pnand %p133, %p134
    %p136 = pneg %p135
    // Predicated region
    $region9: #{double_conv_forward.4} parent=5 // pred_check
      _
    $region10: #{double_conv_forward.4} parent=5 // pred_check_branch
      %138 = sbr.rel (%p135) target = $region12
    $region11: #{double_conv_forward.4} parent=5 // pred_region
      %s139 = ssub.s32 %s10, 1
      // Predicated region
      $region13: #{double_conv_forward.4} parent=11 // pred_check
        %p140 = pneg %p69
      $region14: #{double_conv_forward.4} parent=11 // pred_check_branch
        %142 = sbr.rel (%p140) target = $region16
      $region15: #{double_conv_forward.4} parent=11 // pred_region
        _
      $region16: #{double_conv_forward.4} parent=11 // pred_fallthru
        _
    $region12: #{double_conv_forward.4} parent=5 // pred_fallthru
      _
    %p143 = scmp.lt.s32.totalorder %s10, 4
    // Predicated region
    $region17: #{double_conv_forward.4} parent=5 // pred_check
      %p144 = pneg %p143
    $region18: #{double_conv_forward.4} parent=5 // pred_check_branch
      %146 = sbr.rel (%p144) target = $region20
    $region19: #{double_conv_forward.4} parent=5 // pred_region
      // Predicated region
      $region21: #{double_conv_forward.4} parent=19 // pred_check
        %p147 = pneg %p42
      $region22: #{double_conv_forward.4} parent=19 // pred_check_branch
        %149 = sbr.rel (%p147) target = $region24
      $region23: #{double_conv_forward.4} parent=19 // pred_region
        %p150 = scmp.lt.s32.totalorder %s17, 1
        %s151 = scalar_select %p150, %s17, 1
        %s152 = smul.addr %s151, 54
        %s153 = smul.addr %s152, 4
        %s154 = scalar_lea.vmem %s0, %s153
      $region24: #{double_conv_forward.4} parent=19 // pred_fallthru
        _
    $region20: #{double_conv_forward.4} parent=5 // pred_fallthru
      _
    %p155 = scmp.le.s32.totalorder 1, %s10
    %p156 = scmp.lt.s32.totalorder %s10, 5
    %p157 = pnand %p155, %p156
    %p158 = pneg %p157
    // Predicated region
    $region25: #{double_conv_forward.4} parent=5 // pred_check
      _
    $region26: #{double_conv_forward.4} parent=5 // pred_check_branch
      %160 = sbr.rel (%p157) target = $region28
    $region27: #{double_conv_forward.4} parent=5 // pred_region
      %s161 = ssub.s32 %s10, 1
      %p162 = scmp.lt.s32.totalorder %s19, 1
      %s163 = scalar_select %p162, %s19, 1
      %s164 = smul.addr %s163, 54
      %s165 = smul.addr %s164, 4
      %s166 = scalar_lea.vmem %s0, %s165
      %p167 = pneg %p48
      %p168 = pneg %p45
      %p169 = pneg %p69
      %p170 = pneg %p66
      %p171 = pneg %p97
      %p172 = pneg %p94
      %s173 = smul.u32 8, %s20
      %p174 = scmp.lt.s32.totalorder %s19, 1
      %s175 = scalar_select %p174, %s19, 1
      %p176 = scmp.lt.s32.totalorder %s173, 15
      %s177 = scalar_select %p176, %s173, 15
      %s178 = smul.addr %s177, 2
      %s179 = smul.addr %s175, 32
      %s180 = sadd.s32 %s178, %s179
      %s181 = smul.addr %s180, 8
      %s182 = scalar_lea.vmem %s2, %s181
      %p183 = pneg %p125
      %p184 = pneg %p122
      %p185 = scmp.lt.s32.totalorder %s19, 1
      %s186 = scalar_select %p185, %s19, 1
      %p187 = scmp.lt.s32.totalorder %s20, 1
      %s188 = scalar_select %p187, %s20, 1
      %s189 = smul.addr %s186, 2
      %s190 = sadd.s32 %s188, %s189
      %s191 = smul.addr %s190, 2
      %s192 = scalar_lea.vmem %s3, %s191
      %p193 = scmp.lt.s32.totalorder %s19, 1
      %s194 = scalar_select %p193, %s19, 1
      %s195 = smul.addr %s194, 54
      %s196 = smul.addr %s195, 4
      %s197 = scalar_lea.vmem %s0, %s196
      %s198 = smul.u32 8, %s20
      %p199 = scmp.lt.s32.totalorder %s19, 1
      %s200 = scalar_select %p199, %s19, 1
      %p201 = scmp.lt.s32.totalorder %s198, 15
      %s202 = scalar_select %p201, %s198, 15
      %s203 = smul.addr %s202, 2
      %s204 = smul.addr %s200, 32
      %s205 = sadd.s32 %s203, %s204
      %s206 = smul.addr %s205, 8
      %s207 = scalar_lea.vmem %s2, %s206
      %s208 = smul.u32 8, %s20
      %p209 = scmp.lt.s32.totalorder %s19, 1
      %s210 = scalar_select %p209, %s19, 1
      %p211 = scmp.lt.s32.totalorder %s20, 1
      %s212 = scalar_select %p211, %s20, 1
      %s213 = smul.addr %s210, 2
      %s214 = sadd.s32 %s212, %s213
      %s215 = smul.addr %s214, 2
      %s216 = scalar_lea.vmem %s3, %s215
      %s218 = smul.u32 %s20, 8
      %s219 = smul.u32 %s218, 3
      %s220 = smul.addr %s219, 4
      %s221 = scalar_lea.vmem %s197, %s220
      %v222 = vld [vmem:[%s221] sm:$0xf]
      %v223 = vld [vmem:[%s221 + $0x4] sm:$0xf]
      %v224 = vld [vmem:[%s221 + $0xc] sm:$0xf]
      %v225 = vld [vmem:[%s221 + $0x10] sm:$0xf]
      %v226 = vld [vmem:[%s221 + $0x18] sm:$0xf]
      %v227 = vld [vmem:[%s221 + $0x1c] sm:$0xf]
      %v228 = vld [vmem:[%s221 + $0x24] sm:$0xf]
      %v229 = vld [vmem:[%s221 + $0x28] sm:$0xf]
      %v230 = vld [vmem:[%s221 + $0x30] sm:$0xf]
      %v231 = vld [vmem:[%s221 + $0x34] sm:$0xf]
      %v232 = vld [vmem:[%s221 + $0x3c] sm:$0xf]
      %v233 = vld [vmem:[%s221 + $0x40] sm:$0xf]
      %v234 = vld [vmem:[%s221 + $0x48] sm:$0xf]
      %v235 = vld [vmem:[%s221 + $0x4c] sm:$0xf]
      %v236 = vld [vmem:[%s221 + $0x54] sm:$0xf]
      %v237 = vld [vmem:[%s221 + $0x58] sm:$0xf]
      %v238 = vld [vmem:[%s1] sm:$0xf]
      %v239 = vld [vmem:[%s1 + $0x4] sm:$0xf]
      %v240 = vld [vmem:[%s1 + $0x8] sm:$0xf]
      %v241 = vld [vmem:[%s1 + $0xc] sm:$0xf]
      %v242 = vld [vmem:[%s1 + $0x10] sm:$0xf]
      %v243 = vld [vmem:[%s1 + $0x14] sm:$0xf]
      %v244 = vld [vmem:[%s1 + $0x18] sm:$0xf]
      %v245 = vld [vmem:[%s1 + $0x1c] sm:$0xf]
      %v246 = vld [vmem:[%s1 + $0x20] sm:$0xf]
      %v247 = vld [vmem:[%s1 + $0x24] sm:$0xf]
      %v248 = vld [vmem:[%s1 + $0x28] sm:$0xf]
      %v249 = vld [vmem:[%s1 + $0x2c] sm:$0xf]
      %v250 = vld [vmem:[%s1 + $0x30] sm:$0xf]
      %v251 = vld [vmem:[%s1 + $0x34] sm:$0xf]
      %v252 = vld [vmem:[%s1 + $0x38] sm:$0xf]
      %v253 = vld [vmem:[%s1 + $0x3c] sm:$0xf]
      %v254 = vld [vmem:[%s221 + $0x8] sm:$0x1]
      %v255 = vld [vmem:[%s221 + $0x14] sm:$0x1]
      %v256 = vld [vmem:[%s221 + $0x20] sm:$0x1]
      %v257 = vld [vmem:[%s221 + $0x2c] sm:$0x1]
      %v258 = vld [vmem:[%s221 + $0x38] sm:$0x1]
      %v259 = vld [vmem:[%s221 + $0x44] sm:$0x1]
      %v260 = vld [vmem:[%s221 + $0x50] sm:$0x1]
      %v261 = vld [vmem:[%s221 + $0x5c] sm:$0x1]
      %vm262 = vsmask.f32 3328
      %vm263 = vsmask.f32 7440
      %vm264 = vmor %vm262, %vm263
      %v266 = vshrl.u32 %v222, 16
      %v268 = vrot.slane %v266, 4
      %v269 = vshll.u32 %v222, 16
      %v271 = vrot.slane %v269, 5
      %v272 = vor.u32 %v268, %v271
      %v273 = vrot.slane %v272, 4
      %v275 = vshll.u32 %v223, 16
      %v277 = vrot.slane %v275, 5
      %v278 = vsel %vm264, %v273, %v277
      %v279 = vshrl.u32 %v223, 16
      %v281 = vrot.slane %v279, 4
      %v282 = vor.u32 %v281, %v277
      %v283 = vrot.slane %v282, 4
      %v285 = vshll.u32 %v254, 16
      %v287 = vrot.slane %v285, 5
      %v288 = vsel %vm264, %v283, %v287
      %v290 = vshrl.u32 %v224, 16
      %v292 = vrot.slane %v290, 4
      %v293 = vshll.u32 %v224, 16
      %v295 = vrot.slane %v293, 5
      %v296 = vor.u32 %v292, %v295
      %v297 = vrot.slane %v296, 4
      %v299 = vshll.u32 %v225, 16
      %v301 = vrot.slane %v299, 5
      %v302 = vsel %vm264, %v297, %v301
      %v303 = vshrl.u32 %v225, 16
      %v305 = vrot.slane %v303, 4
      %v306 = vor.u32 %v305, %v301
      %v307 = vrot.slane %v306, 4
      %v309 = vshll.u32 %v255, 16
      %v311 = vrot.slane %v309, 5
      %v312 = vsel %vm264, %v307, %v311
      %v314 = vshrl.u32 %v226, 16
      %v316 = vrot.slane %v314, 4
      %v317 = vshll.u32 %v226, 16
      %v319 = vrot.slane %v317, 5
      %v320 = vor.u32 %v316, %v319
      %v321 = vrot.slane %v320, 4
      %v323 = vshll.u32 %v227, 16
      %v325 = vrot.slane %v323, 5
      %v326 = vsel %vm264, %v321, %v325
      %v327 = vshrl.u32 %v227, 16
      %v329 = vrot.slane %v327, 4
      %v330 = vor.u32 %v329, %v325
      %v331 = vrot.slane %v330, 4
      %v333 = vshll.u32 %v256, 16
      %v335 = vrot.slane %v333, 5
      %v336 = vsel %vm264, %v331, %v335
      %v338 = vshrl.u32 %v228, 16
      %v340 = vrot.slane %v338, 4
      %v341 = vshll.u32 %v228, 16
      %v343 = vrot.slane %v341, 5
      %v344 = vor.u32 %v340, %v343
      %v345 = vrot.slane %v344, 4
      %v347 = vshll.u32 %v229, 16
      %v349 = vrot.slane %v347, 5
      %v350 = vsel %vm264, %v345, %v349
      %v351 = vshrl.u32 %v229, 16
      %v353 = vrot.slane %v351, 4
      %v354 = vor.u32 %v353, %v349
      %v355 = vrot.slane %v354, 4
      %v357 = vshll.u32 %v257, 16
      %v359 = vrot.slane %v357, 5
      %v360 = vsel %vm264, %v355, %v359
      %v362 = vshrl.u32 %v230, 16
      %v364 = vrot.slane %v362, 4
      %v365 = vshll.u32 %v230, 16
      %v367 = vrot.slane %v365, 5
      %v368 = vor.u32 %v364, %v367
      %v369 = vrot.slane %v368, 4
      %v371 = vshll.u32 %v231, 16
      %v373 = vrot.slane %v371, 5
      %v374 = vsel %vm264, %v369, %v373
      %v375 = vshrl.u32 %v231, 16
      %v377 = vrot.slane %v375, 4
      %v378 = vor.u32 %v377, %v373
      %v379 = vrot.slane %v378, 4
      %v381 = vshll.u32 %v258, 16
      %v383 = vrot.slane %v381, 5
      %v384 = vsel %vm264, %v379, %v383
      %v386 = vshrl.u32 %v232, 16
      %v388 = vrot.slane %v386, 4
      %v389 = vshll.u32 %v232, 16
      %v391 = vrot.slane %v389, 5
      %v392 = vor.u32 %v388, %v391
      %v393 = vrot.slane %v392, 4
      %v395 = vshll.u32 %v233, 16
      %v397 = vrot.slane %v395, 5
      %v398 = vsel %vm264, %v393, %v397
      %v399 = vshrl.u32 %v233, 16
      %v401 = vrot.slane %v399, 4
      %v402 = vor.u32 %v401, %v397
      %v403 = vrot.slane %v402, 4
      %v405 = vshll.u32 %v259, 16
      %v407 = vrot.slane %v405, 5
      %v408 = vsel %vm264, %v403, %v407
      %v410 = vshrl.u32 %v234, 16
      %v412 = vrot.slane %v410, 4
      %v413 = vshll.u32 %v234, 16
      %v415 = vrot.slane %v413, 5
      %v416 = vor.u32 %v412, %v415
      %v417 = vrot.slane %v416, 4
      %v419 = vshll.u32 %v235, 16
      %v421 = vrot.slane %v419, 5
      %v422 = vsel %vm264, %v417, %v421
      %v423 = vshrl.u32 %v235, 16
      %v425 = vrot.slane %v423, 4
      %v426 = vor.u32 %v425, %v421
      %v427 = vrot.slane %v426, 4
      %v429 = vshll.u32 %v260, 16
      %v431 = vrot.slane %v429, 5
      %v432 = vsel %vm264, %v427, %v431
      %v434 = vshrl.u32 %v236, 16
      %v436 = vrot.slane %v434, 4
      %v437 = vshll.u32 %v236, 16
      %v439 = vrot.slane %v437, 5
      %v440 = vor.u32 %v436, %v439
      %v441 = vrot.slane %v440, 4
      %v443 = vshll.u32 %v237, 16
      %v445 = vrot.slane %v443, 5
      %v446 = vsel %vm264, %v441, %v445
      %v447 = vshrl.u32 %v237, 16
      %v449 = vrot.slane %v447, 4
      %v450 = vor.u32 %v449, %v445
      %v451 = vrot.slane %v450, 4
      %v453 = vshll.u32 %v261, 16
      %v455 = vrot.slane %v453, 5
      %v456 = vsel %vm264, %v451, %v455
      %s457 = scalar_lea.vmem %s1, 64
      %v458 = vld [vmem:[%s457] sm:$0xf]
      %v459 = vld [vmem:[%s457 + $0x4] sm:$0xf]
      %v460 = vld [vmem:[%s457 + $0x8] sm:$0xf]
      %v461 = vld [vmem:[%s457 + $0xc] sm:$0xf]
      %v462 = vld [vmem:[%s457 + $0x10] sm:$0xf]
      %v463 = vld [vmem:[%s457 + $0x14] sm:$0xf]
      %v464 = vld [vmem:[%s457 + $0x18] sm:$0xf]
      %v465 = vld [vmem:[%s457 + $0x1c] sm:$0xf]
      %v466 = vld [vmem:[%s457 + $0x20] sm:$0xf]
      %v467 = vld [vmem:[%s457 + $0x24] sm:$0xf]
      %v468 = vld [vmem:[%s457 + $0x28] sm:$0xf]
      %v469 = vld [vmem:[%s457 + $0x2c] sm:$0xf]
      %v470 = vld [vmem:[%s457 + $0x30] sm:$0xf]
      %v471 = vld [vmem:[%s457 + $0x34] sm:$0xf]
      %v472 = vld [vmem:[%s457 + $0x38] sm:$0xf]
      %v473 = vld [vmem:[%s457 + $0x3c] sm:$0xf]
      %v474 = vunpack.c.l.b16 %v278
      %v475 = vunpack.c.l.b16 %v288
      %v476 = vunpack.c.l.b16 %v302
      %v477 = vunpack.c.l.b16 %v312
      %v478 = vunpack.c.l.b16 %v326
      %v479 = vunpack.c.l.b16 %v336
      %v480 = vunpack.c.l.b16 %v350
      %v481 = vunpack.c.l.b16 %v360
      %v482 = vunpack.c.l.b16 %v374
      %v483 = vunpack.c.l.b16 %v384
      %v484 = vunpack.c.l.b16 %v398
      %v485 = vunpack.c.l.b16 %v408
      %v486 = vunpack.c.l.b16 %v422
      %v487 = vunpack.c.l.b16 %v432
      %v488 = vunpack.c.l.b16 %v446
      %v489 = vunpack.c.l.b16 %v456
      %v490 = vpack.c.b16 %v475, %v474
      %v491 = vpack.c.b16 %v477, %v476
      %v492 = vpack.c.b16 %v479, %v478
      %v493 = vpack.c.b16 %v481, %v480
      %v494 = vpack.c.b16 %v483, %v482
      %v495 = vpack.c.b16 %v485, %v484
      %v496 = vpack.c.b16 %v487, %v486
      %v497 = vpack.c.b16 %v489, %v488
      %v522 = vunpack.c.l.b16 %v458
      %v523 = vunpack.c.l.b16 %v459
      %v524 = vunpack.c.l.b16 %v460
      %v525 = vunpack.c.l.b16 %v461
      %v526 = vunpack.c.l.b16 %v462
      %v527 = vunpack.c.l.b16 %v463
      %v528 = vunpack.c.l.b16 %v464
      %v529 = vunpack.c.l.b16 %v465
      %v530 = vunpack.c.l.b16 %v466
      %v531 = vunpack.c.l.b16 %v467
      %v532 = vunpack.c.l.b16 %v468
      %v533 = vunpack.c.l.b16 %v469
      %v534 = vunpack.c.l.b16 %v470
      %v535 = vunpack.c.l.b16 %v471
      %v536 = vunpack.c.l.b16 %v472
      %v537 = vunpack.c.l.b16 %v473
      %v538 = vpack.c.b16 %v523, %v522
      %v539 = vpack.c.b16 %v525, %v524
      %v540 = vpack.c.b16 %v527, %v526
      %v541 = vpack.c.b16 %v529, %v528
      %v542 = vpack.c.b16 %v531, %v530
      %v543 = vpack.c.b16 %v533, %v532
      %v544 = vpack.c.b16 %v535, %v534
      %v545 = vpack.c.b16 %v537, %v536
      %554 = vmatprep.subr.bf16.mxu0 0
      %555 = vmatpush1.bf16.msra.mxu0 %v538
      %556 = vmatprep.subr.bf16.mxu0 0
      %557 = vmatpush1.bf16.msra.mxu0 %v539
      %558 = vmatprep.subr.bf16.mxu0 0
      %559 = vmatpush1.bf16.msra.mxu0 %v540
      %560 = vmatprep.subr.bf16.mxu0 0
      %561 = vmatpush1.bf16.msra.mxu0 %v541
      %562 = vmatprep.subr.bf16.mxu0 0
      %563 = vmatpush1.bf16.msra.mxu0 %v542
      %564 = vmatprep.subr.bf16.mxu0 0
      %565 = vmatpush1.bf16.msra.mxu0 %v543
      %566 = vmatprep.subr.bf16.mxu0 0
      %567 = vmatpush1.bf16.msra.mxu0 %v544
      %568 = vmatprep.subr.bf16.mxu0 0
      %569 = vmatpush1.bf16.msra.mxu0 %v545
      %570 = vmatprep.subr.bf16.mxu0 0
      %571 = vmatpush1.bf16.msra.mxu0 0
      %572 = vmatprep.subr.bf16.mxu0 0
      %573 = vmatpush1.bf16.msra.mxu0 0
      %574 = vmatprep.subr.bf16.mxu0 0
      %575 = vmatpush1.bf16.msra.mxu0 0
      %576 = vmatprep.subr.bf16.mxu0 0
      %577 = vmatpush1.bf16.msra.mxu0 0
      %578 = vmatprep.subr.bf16.mxu0 0
      %579 = vmatpush1.bf16.msra.mxu0 0
      %580 = vmatprep.subr.bf16.mxu0 0
      %581 = vmatpush1.bf16.msra.mxu0 0
      %582 = vmatprep.subr.bf16.mxu0 0
      %583 = vmatpush1.bf16.msra.mxu0 0
      %584 = vmatprep.subr.bf16.mxu0 0
      %585 = vmatpush1.bf16.msra.mxu0 0
      %586 = vmatprep.mubr.bf16.mxu0 0
      %587 = vmatmul.mubr.bf16.gmra.mrb[0].mxu0 %v490
      %v588 = vpop.f32.mrb[0].mxu0
      %v589 = vadd.f32 0.0, %v588
      %v590 = vpop.f32.mrb[0].mxu0
      %v591 = vpop.f32.mrb[0].mxu0
      %v592 = vadd.f32 0.0, %v591
      %v593 = vpop.f32.mrb[0].mxu0
      %594 = vmatprep.mubr.bf16.mxu0 0
      %595 = vmatmul.mubr.bf16.gmra.mrb[0].mxu0 %v491
      %v596 = vpop.f32.mrb[0].mxu0
      %v597 = vadd.f32 0.0, %v596
      %v598 = vpop.f32.mrb[0].mxu0
      %v599 = vpop.f32.mrb[0].mxu0
      %v600 = vadd.f32 0.0, %v599
      %v601 = vpop.f32.mrb[0].mxu0
      %602 = vmatprep.mubr.bf16.mxu0 0
      %603 = vmatmul.mubr.bf16.gmra.mrb[0].mxu0 %v492
      %v604 = vpop.f32.mrb[0].mxu0
      %v605 = vadd.f32 0.0, %v604
      %v606 = vpop.f32.mrb[0].mxu0
      %v607 = vpop.f32.mrb[0].mxu0
      %v608 = vadd.f32 0.0, %v607
      %v609 = vpop.f32.mrb[0].mxu0
      %610 = vmatprep.mubr.bf16.mxu0 0
      %611 = vmatmul.mubr.bf16.gmra.mrb[0].mxu0 %v493
      %v612 = vpop.f32.mrb[0].mxu0
      %v613 = vadd.f32 0.0, %v612
      %v614 = vpop.f32.mrb[0].mxu0
      %v615 = vpop.f32.mrb[0].mxu0
      %v616 = vadd.f32 0.0, %v615
      %v617 = vpop.f32.mrb[0].mxu0
      %618 = vmatprep.mubr.bf16.mxu0 0
      %619 = vmatmul.mubr.bf16.gmra.mrb[0].mxu0 %v494
      %v620 = vpop.f32.mrb[0].mxu0
      %v621 = vadd.f32 0.0, %v620
      %v622 = vpop.f32.mrb[0].mxu0
      %v623 = vpop.f32.mrb[0].mxu0
      %v624 = vadd.f32 0.0, %v623
      %v625 = vpop.f32.mrb[0].mxu0
      %626 = vmatprep.mubr.bf16.mxu0 0
      %627 = vmatmul.mubr.bf16.gmra.mrb[0].mxu0 %v495
      %v628 = vpop.f32.mrb[0].mxu0
      %v629 = vadd.f32 0.0, %v628
      %v630 = vpop.f32.mrb[0].mxu0
      %v631 = vpop.f32.mrb[0].mxu0
      %v632 = vadd.f32 0.0, %v631
      %v633 = vpop.f32.mrb[0].mxu0
      %634 = vmatprep.mubr.bf16.mxu0 0
      %635 = vmatmul.mubr.bf16.gmra.mrb[0].mxu0 %v496
      %v636 = vpop.f32.mrb[0].mxu0
      %v637 = vadd.f32 0.0, %v636
      %v638 = vpop.f32.mrb[0].mxu0
      %v639 = vpop.f32.mrb[0].mxu0
      %v640 = vadd.f32 0.0, %v639
      %v641 = vpop.f32.mrb[0].mxu0
      %642 = vmatprep.mubr.bf16.mxu0 0
      %643 = vmatmul.mubr.bf16.gmra.mrb[0].mxu0 %v497
      %v644 = vpop.f32.mrb[0].mxu0
      %v645 = vadd.f32 0.0, %v644
      %v646 = vpop.f32.mrb[0].mxu0
      %v647 = vpop.f32.mrb[0].mxu0
      %v648 = vadd.f32 0.0, %v647
      %v649 = vpop.f32.mrb[0].mxu0
      %650 = vdwg.mxu0
      %v667 = vunpack.c.l.b16 %v222
      %v668 = vunpack.c.l.b16 %v223
      %v669 = vunpack.c.l.b16 %v224
      %v670 = vunpack.c.l.b16 %v225
      %v671 = vunpack.c.l.b16 %v226
      %v672 = vunpack.c.l.b16 %v227
      %v673 = vunpack.c.l.b16 %v228
      %v674 = vunpack.c.l.b16 %v229
      %v675 = vunpack.c.l.b16 %v230
      %v676 = vunpack.c.l.b16 %v231
      %v677 = vunpack.c.l.b16 %v232
      %v678 = vunpack.c.l.b16 %v233
      %v679 = vunpack.c.l.b16 %v234
      %v680 = vunpack.c.l.b16 %v235
      %v681 = vunpack.c.l.b16 %v236
      %v682 = vunpack.c.l.b16 %v237
      %v683 = vpack.c.b16 %v668, %v667
      %v684 = vpack.c.b16 %v670, %v669
      %v685 = vpack.c.b16 %v672, %v671
      %v686 = vpack.c.b16 %v674, %v673
      %v687 = vpack.c.b16 %v676, %v675
      %v688 = vpack.c.b16 %v678, %v677
      %v689 = vpack.c.b16 %v680, %v679
      %v690 = vpack.c.b16 %v682, %v681
      %v715 = vunpack.c.l.b16 %v238
      %v716 = vunpack.c.l.b16 %v239
      %v717 = vunpack.c.l.b16 %v240
      %v718 = vunpack.c.l.b16 %v241
      %v719 = vunpack.c.l.b16 %v242
      %v720 = vunpack.c.l.b16 %v243
      %v721 = vunpack.c.l.b16 %v244
      %v722 = vunpack.c.l.b16 %v245
      %v723 = vunpack.c.l.b16 %v246
      %v724 = vunpack.c.l.b16 %v247
      %v725 = vunpack.c.l.b16 %v248
      %v726 = vunpack.c.l.b16 %v249
      %v727 = vunpack.c.l.b16 %v250
      %v728 = vunpack.c.l.b16 %v251
      %v729 = vunpack.c.l.b16 %v252
      %v730 = vunpack.c.l.b16 %v253
      %v731 = vpack.c.b16 %v716, %v715
      %v732 = vpack.c.b16 %v718, %v717
      %v733 = vpack.c.b16 %v720, %v719
      %v734 = vpack.c.b16 %v722, %v721
      %v735 = vpack.c.b16 %v724, %v723
      %v736 = vpack.c.b16 %v726, %v725
      %v737 = vpack.c.b16 %v728, %v727
      %v738 = vpack.c.b16 %v730, %v729
      %747 = vmatprep.subr.bf16.mxu0 0
      %748 = vmatpush1.bf16.msra.mxu0 %v731
      %749 = vmatprep.subr.bf16.mxu0 0
      %750 = vmatpush1.bf16.msra.mxu0 %v732
      %751 = vmatprep.subr.bf16.mxu0 0
      %752 = vmatpush1.bf16.msra.mxu0 %v733
      %753 = vmatprep.subr.bf16.mxu0 0
      %754 = vmatpush1.bf16.msra.mxu0 %v734
      %755 = vmatprep.subr.bf16.mxu0 0
      %756 = vmatpush1.bf16.msra.mxu0 %v735
      %757 = vmatprep.subr.bf16.mxu0 0
      %758 = vmatpush1.bf16.msra.mxu0 %v736
      %759 = vmatprep.subr.bf16.mxu0 0
      %760 = vmatpush1.bf16.msra.mxu0 %v737
      %761 = vmatprep.subr.bf16.mxu0 0
      %762 = vmatpush1.bf16.msra.mxu0 %v738
      %763 = vmatprep.subr.bf16.mxu0 0
      %764 = vmatpush1.bf16.msra.mxu0 0
      %765 = vmatprep.subr.bf16.mxu0 0
      %766 = vmatpush1.bf16.msra.mxu0 0
      %767 = vmatprep.subr.bf16.mxu0 0
      %768 = vmatpush1.bf16.msra.mxu0 0
      %769 = vmatprep.subr.bf16.mxu0 0
      %770 = vmatpush1.bf16.msra.mxu0 0
      %771 = vmatprep.subr.bf16.mxu0 0
      %772 = vmatpush1.bf16.msra.mxu0 0
      %773 = vmatprep.subr.bf16.mxu0 0
      %774 = vmatpush1.bf16.msra.mxu0 0
      %775 = vmatprep.subr.bf16.mxu0 0
      %776 = vmatpush1.bf16.msra.mxu0 0
      %777 = vmatprep.subr.bf16.mxu0 0
      %778 = vmatpush1.bf16.msra.mxu0 0
      %779 = vmatprep.mubr.bf16.mxu0 0
      %780 = vmatmul.mubr.bf16.gmra.mrb[0].mxu0 %v683
      %v781 = vpop.f32.mrb[0].mxu0
      %v782 = vadd.f32 %v589, %v781
      %v783 = vpop.f32.mrb[0].mxu0
      %v784 = vpop.f32.mrb[0].mxu0
      %v785 = vadd.f32 %v592, %v784
      %v786 = vpop.f32.mrb[0].mxu0
      %787 = vmatprep.mubr.bf16.mxu0 0
      %788 = vmatmul.mubr.bf16.gmra.mrb[0].mxu0 %v684
      %v789 = vpop.f32.mrb[0].mxu0
      %v790 = vadd.f32 %v597, %v789
      %v791 = vpop.f32.mrb[0].mxu0
      %v792 = vpop.f32.mrb[0].mxu0
      %v793 = vadd.f32 %v600, %v792
      %v794 = vpop.f32.mrb[0].mxu0
      %795 = vmatprep.mubr.bf16.mxu0 0
      %796 = vmatmul.mubr.bf16.gmra.mrb[0].mxu0 %v685
      %v797 = vpop.f32.mrb[0].mxu0
      %v798 = vadd.f32 %v605, %v797
      %v799 = vpop.f32.mrb[0].mxu0
      %v800 = vpop.f32.mrb[0].mxu0
      %v801 = vadd.f32 %v608, %v800
      %v802 = vpop.f32.mrb[0].mxu0
      %803 = vmatprep.mubr.bf16.mxu0 0
      %804 = vmatmul.mubr.bf16.gmra.mrb[0].mxu0 %v686
      %v805 = vpop.f32.mrb[0].mxu0
      %v806 = vadd.f32 %v613, %v805
      %v807 = vpop.f32.mrb[0].mxu0
      %v808 = vpop.f32.mrb[0].mxu0
      %v809 = vadd.f32 %v616, %v808
      %v810 = vpop.f32.mrb[0].mxu0
      %811 = vmatprep.mubr.bf16.mxu0 0
      %812 = vmatmul.mubr.bf16.gmra.mrb[0].mxu0 %v687
      %v813 = vpop.f32.mrb[0].mxu0
      %v814 = vadd.f32 %v621, %v813
      %v815 = vpop.f32.mrb[0].mxu0
      %v816 = vpop.f32.mrb[0].mxu0
      %v817 = vadd.f32 %v624, %v816
      %v818 = vpop.f32.mrb[0].mxu0
      %819 = vmatprep.mubr.bf16.mxu0 0
      %820 = vmatmul.mubr.bf16.gmra.mrb[0].mxu0 %v688
      %v821 = vpop.f32.mrb[0].mxu0
      %v822 = vadd.f32 %v629, %v821
      %v823 = vpop.f32.mrb[0].mxu0
      %v824 = vpop.f32.mrb[0].mxu0
      %v825 = vadd.f32 %v632, %v824
      %v826 = vpop.f32.mrb[0].mxu0
      %827 = vmatprep.mubr.bf16.mxu0 0
      %828 = vmatmul.mubr.bf16.gmra.mrb[0].mxu0 %v689
      %v829 = vpop.f32.mrb[0].mxu0
      %v830 = vadd.f32 %v637, %v829
      %v831 = vpop.f32.mrb[0].mxu0
      %v832 = vpop.f32.mrb[0].mxu0
      %v833 = vadd.f32 %v640, %v832
      %v834 = vpop.f32.mrb[0].mxu0
      %835 = vmatprep.mubr.bf16.mxu0 0
      %836 = vmatmul.mubr.bf16.gmra.mrb[0].mxu0 %v690
      %v837 = vpop.f32.mrb[0].mxu0
      %v838 = vadd.f32 %v645, %v837
      %v839 = vpop.f32.mrb[0].mxu0
      %v840 = vpop.f32.mrb[0].mxu0
      %v841 = vadd.f32 %v648, %v840
      %v842 = vpop.f32.mrb[0].mxu0
      %843 = vdwg.mxu0
      %v844 = vld [vmem:[%s221] sm:$0xe]
      %v845 = vld [vmem:[%s221 + $0xc] sm:$0xe]
      %v846 = vld [vmem:[%s221 + $0x18] sm:$0xe]
      %v847 = vld [vmem:[%s221 + $0x24] sm:$0xe]
      %v848 = vld [vmem:[%s221 + $0x30] sm:$0xe]
      %v849 = vld [vmem:[%s221 + $0x3c] sm:$0xe]
      %v850 = vld [vmem:[%s221 + $0x48] sm:$0xe]
      %v851 = vld [vmem:[%s221 + $0x54] sm:$0xe]
      %vm868 = vcmask 1042432
      %vm869 = vcmask 1046532
      %vm870 = vmor %vm868, %vm869
      %v871 = vrot.slane %v844, 5
      %v872 = vrot.slane %v871, 4
      %v873 = vrot.slane %v223, 5
      %v874 = vsel %vm870, %v872, %v873
      %v875 = vrot.slane %v873, 4
      %v876 = vrot.slane %v254, 5
      %v877 = vsel %vm870, %v875, %v876
      %v878 = vrot.slane %v845, 5
      %v879 = vrot.slane %v878, 4
      %v880 = vrot.slane %v225, 5
      %v881 = vsel %vm870, %v879, %v880
      %v882 = vrot.slane %v880, 4
      %v883 = vrot.slane %v255, 5
      %v884 = vsel %vm870, %v882, %v883
      %v885 = vrot.slane %v846, 5
      %v886 = vrot.slane %v885, 4
      %v887 = vrot.slane %v227, 5
      %v888 = vsel %vm870, %v886, %v887
      %v889 = vrot.slane %v887, 4
      %v890 = vrot.slane %v256, 5
      %v891 = vsel %vm870, %v889, %v890
      %v892 = vrot.slane %v847, 5
      %v893 = vrot.slane %v892, 4
      %v894 = vrot.slane %v229, 5
      %v895 = vsel %vm870, %v893, %v894
      %v896 = vrot.slane %v894, 4
      %v897 = vrot.slane %v257, 5
      %v898 = vsel %vm870, %v896, %v897
      %v899 = vrot.slane %v848, 5
      %v900 = vrot.slane %v899, 4
      %v901 = vrot.slane %v231, 5
      %v902 = vsel %vm870, %v900, %v901
      %v903 = vrot.slane %v901, 4
      %v904 = vrot.slane %v258, 5
      %v905 = vsel %vm870, %v903, %v904
      %v906 = vrot.slane %v849, 5
      %v907 = vrot.slane %v906, 4
      %v908 = vrot.slane %v233, 5
      %v909 = vsel %vm870, %v907, %v908
      %v910 = vrot.slane %v908, 4
      %v911 = vrot.slane %v259, 5
      %v912 = vsel %vm870, %v910, %v911
      %v913 = vrot.slane %v850, 5
      %v914 = vrot.slane %v913, 4
      %v915 = vrot.slane %v235, 5
      %v916 = vsel %vm870, %v914, %v915
      %v917 = vrot.slane %v915, 4
      %v918 = vrot.slane %v260, 5
      %v919 = vsel %vm870, %v917, %v918
      %v920 = vrot.slane %v851, 5
      %v921 = vrot.slane %v920, 4
      %v922 = vrot.slane %v237, 5
      %v923 = vsel %vm870, %v921, %v922
      %v924 = vrot.slane %v922, 4
      %v925 = vrot.slane %v261, 5
      %v926 = vsel %vm870, %v924, %v925
      %s927 = scalar_lea.vmem %s1, 128
      %v928 = vld [vmem:[%s927] sm:$0xf]
      %v929 = vld [vmem:[%s927 + $0x4] sm:$0xf]
      %v930 = vld [vmem:[%s927 + $0x8] sm:$0xf]
      %v931 = vld [vmem:[%s927 + $0xc] sm:$0xf]
      %v932 = vld [vmem:[%s927 + $0x10] sm:$0xf]
      %v933 = vld [vmem:[%s927 + $0x14] sm:$0xf]
      %v934 = vld [vmem:[%s927 + $0x18] sm:$0xf]
      %v935 = vld [vmem:[%s927 + $0x1c] sm:$0xf]
      %v936 = vld [vmem:[%s927 + $0x20] sm:$0xf]
      %v937 = vld [vmem:[%s927 + $0x24] sm:$0xf]
      %v938 = vld [vmem:[%s927 + $0x28] sm:$0xf]
      %v939 = vld [vmem:[%s927 + $0x2c] sm:$0xf]
      %v940 = vld [vmem:[%s927 + $0x30] sm:$0xf]
      %v941 = vld [vmem:[%s927 + $0x34] sm:$0xf]
      %v942 = vld [vmem:[%s927 + $0x38] sm:$0xf]
      %v943 = vld [vmem:[%s927 + $0x3c] sm:$0xf]
      %v944 = vunpack.c.l.b16 %v874
      %v945 = vunpack.c.l.b16 %v877
      %v946 = vunpack.c.l.b16 %v881
      %v947 = vunpack.c.l.b16 %v884
      %v948 = vunpack.c.l.b16 %v888
      %v949 = vunpack.c.l.b16 %v891
      %v950 = vunpack.c.l.b16 %v895
      %v951 = vunpack.c.l.b16 %v898
      %v952 = vunpack.c.l.b16 %v902
      %v953 = vunpack.c.l.b16 %v905
      %v954 = vunpack.c.l.b16 %v909
      %v955 = vunpack.c.l.b16 %v912
      %v956 = vunpack.c.l.b16 %v916
      %v957 = vunpack.c.l.b16 %v919
      %v958 = vunpack.c.l.b16 %v923
      %v959 = vunpack.c.l.b16 %v926
      %v960 = vpack.c.b16 %v945, %v944
      %v961 = vpack.c.b16 %v947, %v946
      %v962 = vpack.c.b16 %v949, %v948
      %v963 = vpack.c.b16 %v951, %v950
      %v964 = vpack.c.b16 %v953, %v952
      %v965 = vpack.c.b16 %v955, %v954
      %v966 = vpack.c.b16 %v957, %v956
      %v967 = vpack.c.b16 %v959, %v958
      %v992 = vunpack.c.l.b16 %v928
      %v993 = vunpack.c.l.b16 %v929
      %v994 = vunpack.c.l.b16 %v930
      %v995 = vunpack.c.l.b16 %v931
      %v996 = vunpack.c.l.b16 %v932
      %v997 = vunpack.c.l.b16 %v933
      %v998 = vunpack.c.l.b16 %v934
      %v999 = vunpack.c.l.b16 %v935
      %v1000 = vunpack.c.l.b16 %v936
      %v1001 = vunpack.c.l.b16 %v937
      %v1002 = vunpack.c.l.b16 %v938
      %v1003 = vunpack.c.l.b16 %v939
      %v1004 = vunpack.c.l.b16 %v940
      %v1005 = vunpack.c.l.b16 %v941
      %v1006 = vunpack.c.l.b16 %v942
      %v1007 = vunpack.c.l.b16 %v943
      %v1008 = vpack.c.b16 %v993, %v992
      %v1009 = vpack.c.b16 %v995, %v994
      %v1010 = vpack.c.b16 %v997, %v996
      %v1011 = vpack.c.b16 %v999, %v998
      %v1012 = vpack.c.b16 %v1001, %v1000
      %v1013 = vpack.c.b16 %v1003, %v1002
      %v1014 = vpack.c.b16 %v1005, %v1004
      %v1015 = vpack.c.b16 %v1007, %v1006
      %1024 = vmatprep.subr.bf16.mxu0 0
      %1025 = vmatpush1.bf16.msra.mxu0 %v1008
      %1026 = vmatprep.subr.bf16.mxu0 0
      %1027 = vmatpush1.bf16.msra.mxu0 %v1009
      %1028 = vmatprep.subr.bf16.mxu0 0
      %1029 = vmatpush1.bf16.msra.mxu0 %v1010
      %1030 = vmatprep.subr.bf16.mxu0 0
      %1031 = vmatpush1.bf16.msra.mxu0 %v1011
      %1032 = vmatprep.subr.bf16.mxu0 0
      %1033 = vmatpush1.bf16.msra.mxu0 %v1012
      %1034 = vmatprep.subr.bf16.mxu0 0
      %1035 = vmatpush1.bf16.msra.mxu0 %v1013
      %1036 = vmatprep.subr.bf16.mxu0 0
      %1037 = vmatpush1.bf16.msra.mxu0 %v1014
      %1038 = vmatprep.subr.bf16.mxu0 0
      %1039 = vmatpush1.bf16.msra.mxu0 %v1015
      %1040 = vmatprep.subr.bf16.mxu0 0
      %1041 = vmatpush1.bf16.msra.mxu0 0
      %1042 = vmatprep.subr.bf16.mxu0 0
      %1043 = vmatpush1.bf16.msra.mxu0 0
      %1044 = vmatprep.subr.bf16.mxu0 0
      %1045 = vmatpush1.bf16.msra.mxu0 0
      %1046 = vmatprep.subr.bf16.mxu0 0
      %1047 = vmatpush1.bf16.msra.mxu0 0
      %1048 = vmatprep.subr.bf16.mxu0 0
      %1049 = vmatpush1.bf16.msra.mxu0 0
      %1050 = vmatprep.subr.bf16.mxu0 0
      %1051 = vmatpush1.bf16.msra.mxu0 0
      %1052 = vmatprep.subr.bf16.mxu0 0
      %1053 = vmatpush1.bf16.msra.mxu0 0
      %1054 = vmatprep.subr.bf16.mxu0 0
      %1055 = vmatpush1.bf16.msra.mxu0 0
      %1056 = vmatprep.mubr.bf16.mxu0 0
      %1057 = vmatmul.mubr.bf16.gmra.mrb[0].mxu0 %v960
      %v1058 = vpop.f32.mrb[0].mxu0
      %v1059 = vadd.f32 0.0, %v1058
      %v1060 = vpop.f32.mrb[0].mxu0
      %v1061 = vpop.f32.mrb[0].mxu0
      %v1062 = vadd.f32 0.0, %v1061
      %v1063 = vpop.f32.mrb[0].mxu0
      %1064 = vmatprep.mubr.bf16.mxu0 0
      %1065 = vmatmul.mubr.bf16.gmra.mrb[0].mxu0 %v961
      %v1066 = vpop.f32.mrb[0].mxu0
      %v1067 = vadd.f32 0.0, %v1066
      %v1068 = vpop.f32.mrb[0].mxu0
      %v1069 = vpop.f32.mrb[0].mxu0
      %v1070 = vadd.f32 0.0, %v1069
      %v1071 = vpop.f32.mrb[0].mxu0
      %1072 = vmatprep.mubr.bf16.mxu0 0
      %1073 = vmatmul.mubr.bf16.gmra.mrb[0].mxu0 %v962
      %v1074 = vpop.f32.mrb[0].mxu0
      %v1075 = vadd.f32 0.0, %v1074
      %v1076 = vpop.f32.mrb[0].mxu0
      %v1077 = vpop.f32.mrb[0].mxu0
      %v1078 = vadd.f32 0.0, %v1077
      %v1079 = vpop.f32.mrb[0].mxu0
      %1080 = vmatprep.mubr.bf16.mxu0 0
      %1081 = vmatmul.mubr.bf16.gmra.mrb[0].mxu0 %v963
      %v1082 = vpop.f32.mrb[0].mxu0
      %v1083 = vadd.f32 0.0, %v1082
      %v1084 = vpop.f32.mrb[0].mxu0
      %v1085 = vpop.f32.mrb[0].mxu0
      %v1086 = vadd.f32 0.0, %v1085
      %v1087 = vpop.f32.mrb[0].mxu0
      %1088 = vmatprep.mubr.bf16.mxu0 0
      %1089 = vmatmul.mubr.bf16.gmra.mrb[0].mxu0 %v964
      %v1090 = vpop.f32.mrb[0].mxu0
      %v1091 = vadd.f32 0.0, %v1090
      %v1092 = vpop.f32.mrb[0].mxu0
      %v1093 = vpop.f32.mrb[0].mxu0
      %v1094 = vadd.f32 0.0, %v1093
      %v1095 = vpop.f32.mrb[0].mxu0
      %1096 = vmatprep.mubr.bf16.mxu0 0
      %1097 = vmatmul.mubr.bf16.gmra.mrb[0].mxu0 %v965
      %v1098 = vpop.f32.mrb[0].mxu0
      %v1099 = vadd.f32 0.0, %v1098
      %v1100 = vpop.f32.mrb[0].mxu0
      %v1101 = vpop.f32.mrb[0].mxu0
      %v1102 = vadd.f32 0.0, %v1101
      %v1103 = vpop.f32.mrb[0].mxu0
      %1104 = vmatprep.mubr.bf16.mxu0 0
      %1105 = vmatmul.mubr.bf16.gmra.mrb[0].mxu0 %v966
      %v1106 = vpop.f32.mrb[0].mxu0
      %v1107 = vadd.f32 0.0, %v1106
      %v1108 = vpop.f32.mrb[0].mxu0
      %v1109 = vpop.f32.mrb[0].mxu0
      %v1110 = vadd.f32 0.0, %v1109
      %v1111 = vpop.f32.mrb[0].mxu0
      %1112 = vmatprep.mubr.bf16.mxu0 0
      %1113 = vmatmul.mubr.bf16.gmra.mrb[0].mxu0 %v967
      %v1114 = vpop.f32.mrb[0].mxu0
      %v1115 = vadd.f32 0.0, %v1114
      %v1116 = vpop.f32.mrb[0].mxu0
      %v1117 = vpop.f32.mrb[0].mxu0
      %v1118 = vadd.f32 0.0, %v1117
      %v1119 = vpop.f32.mrb[0].mxu0
      %1120 = vdwg.mxu0
      %v1121 = vadd.f32 %v782, %v1059
      %v1122 = vadd.f32 %v785, %v1062
      %v1123 = vadd.f32 %v790, %v1067
      %v1124 = vadd.f32 %v793, %v1070
      %v1125 = vadd.f32 %v798, %v1075
      %v1126 = vadd.f32 %v801, %v1078
      %v1127 = vadd.f32 %v806, %v1083
      %v1128 = vadd.f32 %v809, %v1086
      %v1129 = vadd.f32 %v814, %v1091
      %v1130 = vadd.f32 %v817, %v1094
      %v1131 = vadd.f32 %v822, %v1099
      %v1132 = vadd.f32 %v825, %v1102
      %v1133 = vadd.f32 %v830, %v1107
      %v1134 = vadd.f32 %v833, %v1110
      %v1135 = vadd.f32 %v838, %v1115
      %v1136 = vadd.f32 %v841, %v1118
      %s1137 = sadd.s32 %s218, 1
      %s1138 = smul.u32 %s1137, 3
      %s1139 = smul.addr %s1138, 4
      %s1140 = scalar_lea.vmem %s197, %s1139
      %v1141 = vld [vmem:[%s1140] sm:$0xf]
      %v1142 = vld [vmem:[%s1140 + $0x4] sm:$0xf]
      %v1143 = vld [vmem:[%s1140 + $0xc] sm:$0xf]
      %v1144 = vld [vmem:[%s1140 + $0x10] sm:$0xf]
      %v1145 = vld [vmem:[%s1140 + $0x18] sm:$0xf]
      %v1146 = vld [vmem:[%s1140 + $0x1c] sm:$0xf]
      %v1147 = vld [vmem:[%s1140 + $0x24] sm:$0xf]
      %v1148 = vld [vmem:[%s1140 + $0x28] sm:$0xf]
      %v1149 = vld [vmem:[%s1140 + $0x30] sm:$0xf]
      %v1150 = vld [vmem:[%s1140 + $0x34] sm:$0xf]
      %v1151 = vld [vmem:[%s1140 + $0x3c] sm:$0xf]
      %v1152 = vld [vmem:[%s1140 + $0x40] sm:$0xf]
      %v1153 = vld [vmem:[%s1140 + $0x48] sm:$0xf]
      %v1154 = vld [vmem:[%s1140 + $0x4c] sm:$0xf]
      %v1155 = vld [vmem:[%s1140 + $0x54] sm:$0xf]
      %v1156 = vld [vmem:[%s1140 + $0x58] sm:$0xf]
      %s1157 = scalar_lea.vmem %s1, 192
      %v1158 = vld [vmem:[%s1157] sm:$0xf]
      %v1159 = vld [vmem:[%s1157 + $0x4] sm:$0xf]
      %v1160 = vld [vmem:[%s1157 + $0x8] sm:$0xf]
      %v1161 = vld [vmem:[%s1157 + $0xc] sm:$0xf]
      %v1162 = vld [vmem:[%s1157 + $0x10] sm:$0xf]
      %v1163 = vld [vmem:[%s1157 + $0x14] sm:$0xf]
      %v1164 = vld [vmem:[%s1157 + $0x18] sm:$0xf]
      %v1165 = vld [vmem:[%s1157 + $0x1c] sm:$0xf]
      %v1166 = vld [vmem:[%s1157 + $0x20] sm:$0xf]
      %v1167 = vld [vmem:[%s1157 + $0x24] sm:$0xf]
      %v1168 = vld [vmem:[%s1157 + $0x28] sm:$0xf]
      %v1169 = vld [vmem:[%s1157 + $0x2c] sm:$0xf]
      %v1170 = vld [vmem:[%s1157 + $0x30] sm:$0xf]
      %v1171 = vld [vmem:[%s1157 + $0x34] sm:$0xf]
      %v1172 = vld [vmem:[%s1157 + $0x38] sm:$0xf]
      %v1173 = vld [vmem:[%s1157 + $0x3c] sm:$0xf]
      %v1190 = vunpack.c.l.b16 %v1141
      %v1191 = vunpack.c.l.b16 %v1142
      %v1192 = vunpack.c.l.b16 %v1143
      %v1193 = vunpack.c.l.b16 %v1144
      %v1194 = vunpack.c.l.b16 %v1145
      %v1195 = vunpack.c.l.b16 %v1146
      %v1196 = vunpack.c.l.b16 %v1147
      %v1197 = vunpack.c.l.b16 %v1148
      %v1198 = vunpack.c.l.b16 %v1149
      %v1199 = vunpack.c.l.b16 %v1150
      %v1200 = vunpack.c.l.b16 %v1151
      %v1201 = vunpack.c.l.b16 %v1152
      %v1202 = vunpack.c.l.b16 %v1153
      %v1203 = vunpack.c.l.b16 %v1154
      %v1204 = vunpack.c.l.b16 %v1155
      %v1205 = vunpack.c.l.b16 %v1156
      %v1206 = vpack.c.b16 %v1191, %v1190
      %v1207 = vpack.c.b16 %v1193, %v1192
      %v1208 = vpack.c.b16 %v1195, %v1194
      %v1209 = vpack.c.b16 %v1197, %v1196
      %v1210 = vpack.c.b16 %v1199, %v1198
      %v1211 = vpack.c.b16 %v1201, %v1200
      %v1212 = vpack.c.b16 %v1203, %v1202
      %v1213 = vpack.c.b16 %v1205, %v1204
      %v1238 = vunpack.c.l.b16 %v1158
      %v1239 = vunpack.c.l.b16 %v1159
      %v1240 = vunpack.c.l.b16 %v1160
      %v1241 = vunpack.c.l.b16 %v1161
      %v1242 = vunpack.c.l.b16 %v1162
      %v1243 = vunpack.c.l.b16 %v1163
      %v1244 = vunpack.c.l.b16 %v1164
      %v1245 = vunpack.c.l.b16 %v1165
      %v1246 = vunpack.c.l.b16 %v1166
      %v1247 = vunpack.c.l.b16 %v1167
      %v1248 = vunpack.c.l.b16 %v1168
      %v1249 = vunpack.c.l.b16 %v1169
      %v1250 = vunpack.c.l.b16 %v1170
      %v1251 = vunpack.c.l.b16 %v1171
      %v1252 = vunpack.c.l.b16 %v1172
      %v1253 = vunpack.c.l.b16 %v1173
      %v1254 = vpack.c.b16 %v1239, %v1238
      %v1255 = vpack.c.b16 %v1241, %v1240
      %v1256 = vpack.c.b16 %v1243, %v1242
      %v1257 = vpack.c.b16 %v1245, %v1244
      %v1258 = vpack.c.b16 %v1247, %v1246
      %v1259 = vpack.c.b16 %v1249, %v1248
      %v1260 = vpack.c.b16 %v1251, %v1250
      %v1261 = vpack.c.b16 %v1253, %v1252
      %1270 = vmatprep.subr.bf16.mxu0 0
      %1271 = vmatpush1.bf16.msra.mxu0 %v1254
      %1272 = vmatprep.subr.bf16.mxu0 0
      %1273 = vmatpush1.bf16.msra.mxu0 %v1255
      %1274 = vmatprep.subr.bf16.mxu0 0
      %1275 = vmatpush1.bf16.msra.mxu0 %v1256
      %1276 = vmatprep.subr.bf16.mxu0 0
      %1277 = vmatpush1.bf16.msra.mxu0 %v1257
      %1278 = vmatprep.subr.bf16.mxu0 0
      %1279 = vmatpush1.bf16.msra.mxu0 %v1258
      %1280 = vmatprep.subr.bf16.mxu0 0
      %1281 = vmatpush1.bf16.msra.mxu0 %v1259
      %1282 = vmatprep.subr.bf16.mxu0 0
      %1283 = vmatpush1.bf16.msra.mxu0 %v1260
      %1284 = vmatprep.subr.bf16.mxu0 0
      %1285 = vmatpush1.bf16.msra.mxu0 %v1261
      %1286 = vmatprep.subr.bf16.mxu0 0
      %1287 = vmatpush1.bf16.msra.mxu0 0
      %1288 = vmatprep.subr.bf16.mxu0 0
      %1289 = vmatpush1.bf16.msra.mxu0 0
      %1290 = vmatprep.subr.bf16.mxu0 0
      %1291 = vmatpush1.bf16.msra.mxu0 0
      %1292 = vmatprep.subr.bf16.mxu0 0
      %1293 = vmatpush1.bf16.msra.mxu0 0
      %1294 = vmatprep.subr.bf16.mxu0 0
      %1295 = vmatpush1.bf16.msra.mxu0 0
      %1296 = vmatprep.subr.bf16.mxu0 0
      %1297 = vmatpush1.bf16.msra.mxu0 0
      %1298 = vmatprep.subr.bf16.mxu0 0
      %1299 = vmatpush1.bf16.msra.mxu0 0
      %1300 = vmatprep.subr.bf16.mxu0 0
      %1301 = vmatpush1.bf16.msra.mxu0 0
      %1302 = vmatprep.mubr.bf16.mxu0 0
      %1303 = vmatmul.mubr.bf16.gmra.mrb[0].mxu0 %v1206
      %v1304 = vpop.f32.mrb[0].mxu0
      %v1305 = vadd.f32 0.0, %v1304
      %v1306 = vpop.f32.mrb[0].mxu0
      %v1307 = vpop.f32.mrb[0].mxu0
      %v1308 = vadd.f32 0.0, %v1307
      %v1309 = vpop.f32.mrb[0].mxu0
      %1310 = vmatprep.mubr.bf16.mxu0 0
      %1311 = vmatmul.mubr.bf16.gmra.mrb[0].mxu0 %v1207
      %v1312 = vpop.f32.mrb[0].mxu0
      %v1313 = vadd.f32 0.0, %v1312
      %v1314 = vpop.f32.mrb[0].mxu0
      %v1315 = vpop.f32.mrb[0].mxu0
      %v1316 = vadd.f32 0.0, %v1315
      %v1317 = vpop.f32.mrb[0].mxu0
      %1318 = vmatprep.mubr.bf16.mxu0 0
      %1319 = vmatmul.mubr.bf16.gmra.mrb[0].mxu0 %v1208
      %v1320 = vpop.f32.mrb[0].mxu0
      %v1321 = vadd.f32 0.0, %v1320
      %v1322 = vpop.f32.mrb[0].mxu0
      %v1323 = vpop.f32.mrb[0].mxu0
      %v1324 = vadd.f32 0.0, %v1323
      %v1325 = vpop.f32.mrb[0].mxu0
      %1326 = vmatprep.mubr.bf16.mxu0 0
      %1327 = vmatmul.mubr.bf16.gmra.mrb[0].mxu0 %v1209
      %v1328 = vpop.f32.mrb[0].mxu0
      %v1329 = vadd.f32 0.0, %v1328
      %v1330 = vpop.f32.mrb[0].mxu0
      %v1331 = vpop.f32.mrb[0].mxu0
      %v1332 = vadd.f32 0.0, %v1331
      %v1333 = vpop.f32.mrb[0].mxu0
      %1334 = vmatprep.mubr.bf16.mxu0 0
      %1335 = vmatmul.mubr.bf16.gmra.mrb[0].mxu0 %v1210
      %v1336 = vpop.f32.mrb[0].mxu0
      %v1337 = vadd.f32 0.0, %v1336
      %v1338 = vpop.f32.mrb[0].mxu0
      %v1339 = vpop.f32.mrb[0].mxu0
      %v1340 = vadd.f32 0.0, %v1339
      %v1341 = vpop.f32.mrb[0].mxu0
      %1342 = vmatprep.mubr.bf16.mxu0 0
      %1343 = vmatmul.mubr.bf16.gmra.mrb[0].mxu0 %v1211
      %v1344 = vpop.f32.mrb[0].mxu0
      %v1345 = vadd.f32 0.0, %v1344
      %v1346 = vpop.f32.mrb[0].mxu0
      %v1347 = vpop.f32.mrb[0].mxu0
      %v1348 = vadd.f32 0.0, %v1347
      %v1349 = vpop.f32.mrb[0].mxu0
      %1350 = vmatprep.mubr.bf16.mxu0 0
      %1351 = vmatmul.mubr.bf16.gmra.mrb[0].mxu0 %v1212
      %v1352 = vpop.f32.mrb[0].mxu0
      %v1353 = vadd.f32 0.0, %v1352
      %v1354 = vpop.f32.mrb[0].mxu0
      %v1355 = vpop.f32.mrb[0].mxu0
      %v1356 = vadd.f32 0.0, %v1355
      %v1357 = vpop.f32.mrb[0].mxu0
      %1358 = vmatprep.mubr.bf16.mxu0 0
      %1359 = vmatmul.mubr.bf16.gmra.mrb[0].mxu0 %v1213
      %v1360 = vpop.f32.mrb[0].mxu0
      %v1361 = vadd.f32 0.0, %v1360
      %v1362 = vpop.f32.mrb[0].mxu0
      %v1363 = vpop.f32.mrb[0].mxu0
      %v1364 = vadd.f32 0.0, %v1363
      %v1365 = vpop.f32.mrb[0].mxu0
      %1366 = vdwg.mxu0
      %v1367 = vadd.f32 %v1121, %v1305
      %v1368 = vadd.f32 %v1122, %v1308
      %v1369 = vadd.f32 %v1123, %v1313
      %v1370 = vadd.f32 %v1124, %v1316
      %v1371 = vadd.f32 %v1125, %v1321
      %v1372 = vadd.f32 %v1126, %v1324
      %v1373 = vadd.f32 %v1127, %v1329
      %v1374 = vadd.f32 %v1128, %v1332
      %v1375 = vadd.f32 %v1129, %v1337
      %v1376 = vadd.f32 %v1130, %v1340
      %v1377 = vadd.f32 %v1131, %v1345
      %v1378 = vadd.f32 %v1132, %v1348
      %v1379 = vadd.f32 %v1133, %v1353
      %v1380 = vadd.f32 %v1134, %v1356
      %v1381 = vadd.f32 %v1135, %v1361
      %v1382 = vadd.f32 %v1136, %v1364
      %v1383 = vld [vmem:[%s1140] sm:$0xf]
      %v1384 = vld [vmem:[%s1140 + $0x4] sm:$0xf]
      %v1385 = vld [vmem:[%s1140 + $0x8] sm:$0x1]
      %v1386 = vld [vmem:[%s1140 + $0xc] sm:$0xf]
      %v1387 = vld [vmem:[%s1140 + $0x10] sm:$0xf]
      %v1388 = vld [vmem:[%s1140 + $0x14] sm:$0x1]
      %v1389 = vld [vmem:[%s1140 + $0x18] sm:$0xf]
      %v1390 = vld [vmem:[%s1140 + $0x1c] sm:$0xf]
      %v1391 = vld [vmem:[%s1140 + $0x20] sm:$0x1]
      %v1392 = vld [vmem:[%s1140 + $0x24] sm:$0xf]
      %v1393 = vld [vmem:[%s1140 + $0x28] sm:$0xf]
      %v1394 = vld [vmem:[%s1140 + $0x2c] sm:$0x1]
      %v1395 = vld [vmem:[%s1140 + $0x30] sm:$0xf]
      %v1396 = vld [vmem:[%s1140 + $0x34] sm:$0xf]
      %v1397 = vld [vmem:[%s1140 + $0x38] sm:$0x1]
      %v1398 = vld [vmem:[%s1140 + $0x3c] sm:$0xf]
      %v1399 = vld [vmem:[%s1140 + $0x40] sm:$0xf]
      %v1400 = vld [vmem:[%s1140 + $0x44] sm:$0x1]
      %v1401 = vld [vmem:[%s1140 + $0x48] sm:$0xf]
      %v1402 = vld [vmem:[%s1140 + $0x4c] sm:$0xf]
      %v1403 = vld [vmem:[%s1140 + $0x50] sm:$0x1]
      %v1404 = vld [vmem:[%s1140 + $0x54] sm:$0xf]
      %v1405 = vld [vmem:[%s1140 + $0x58] sm:$0xf]
      %v1406 = vld [vmem:[%s1140 + $0x5c] sm:$0x1]
      %v1408 = vshrl.u32 %v1383, 16
      %v1410 = vrot.slane %v1408, 4
      %v1411 = vshll.u32 %v1383, 16
      %v1413 = vrot.slane %v1411, 5
      %v1414 = vor.u32 %v1410, %v1413
      %v1415 = vrot.slane %v1414, 4
      %v1417 = vshll.u32 %v1384, 16
      %v1419 = vrot.slane %v1417, 5
      %v1420 = vsel %vm264, %v1415, %v1419
      %v1421 = vshrl.u32 %v1384, 16
      %v1423 = vrot.slane %v1421, 4
      %v1424 = vor.u32 %v1423, %v1419
      %v1425 = vrot.slane %v1424, 4
      %v1427 = vshll.u32 %v1385, 16
      %v1429 = vrot.slane %v1427, 5
      %v1430 = vsel %vm264, %v1425, %v1429
      %v1432 = vshrl.u32 %v1386, 16
      %v1434 = vrot.slane %v1432, 4
      %v1435 = vshll.u32 %v1386, 16
      %v1437 = vrot.slane %v1435, 5
      %v1438 = vor.u32 %v1434, %v1437
      %v1439 = vrot.slane %v1438, 4
      %v1441 = vshll.u32 %v1387, 16
      %v1443 = vrot.slane %v1441, 5
      %v1444 = vsel %vm264, %v1439, %v1443
      %v1445 = vshrl.u32 %v1387, 16
      %v1447 = vrot.slane %v1445, 4
      %v1448 = vor.u32 %v1447, %v1443
      %v1449 = vrot.slane %v1448, 4
      %v1451 = vshll.u32 %v1388, 16
      %v1453 = vrot.slane %v1451, 5
      %v1454 = vsel %vm264, %v1449, %v1453
      %v1456 = vshrl.u32 %v1389, 16
      %v1458 = vrot.slane %v1456, 4
      %v1459 = vshll.u32 %v1389, 16
      %v1461 = vrot.slane %v1459, 5
      %v1462 = vor.u32 %v1458, %v1461
      %v1463 = vrot.slane %v1462, 4
      %v1465 = vshll.u32 %v1390, 16
      %v1467 = vrot.slane %v1465, 5
      %v1468 = vsel %vm264, %v1463, %v1467
      %v1469 = vshrl.u32 %v1390, 16
      %v1471 = vrot.slane %v1469, 4
      %v1472 = vor.u32 %v1471, %v1467
      %v1473 = vrot.slane %v1472, 4
      %v1475 = vshll.u32 %v1391, 16
      %v1477 = vrot.slane %v1475, 5
      %v1478 = vsel %vm264, %v1473, %v1477
      %v1480 = vshrl.u32 %v1392, 16
      %v1482 = vrot.slane %v1480, 4
      %v1483 = vshll.u32 %v1392, 16
      %v1485 = vrot.slane %v1483, 5
      %v1486 = vor.u32 %v1482, %v1485
      %v1487 = vrot.slane %v1486, 4
      %v1489 = vshll.u32 %v1393, 16
      %v1491 = vrot.slane %v1489, 5
      %v1492 = vsel %vm264, %v1487, %v1491
      %v1493 = vshrl.u32 %v1393, 16
      %v1495 = vrot.slane %v1493, 4
      %v1496 = vor.u32 %v1495, %v1491
      %v1497 = vrot.slane %v1496, 4
      %v1499 = vshll.u32 %v1394, 16
      %v1501 = vrot.slane %v1499, 5
      %v1502 = vsel %vm264, %v1497, %v1501
      %v1504 = vshrl.u32 %v1395, 16
      %v1506 = vrot.slane %v1504, 4
      %v1507 = vshll.u32 %v1395, 16
      %v1509 = vrot.slane %v1507, 5
      %v1510 = vor.u32 %v1506, %v1509
      %v1511 = vrot.slane %v1510, 4
      %v1513 = vshll.u32 %v1396, 16
      %v1515 = vrot.slane %v1513, 5
      %v1516 = vsel %vm264, %v1511, %v1515
      %v1517 = vshrl.u32 %v1396, 16
      %v1519 = vrot.slane %v1517, 4
      %v1520 = vor.u32 %v1519, %v1515
      %v1521 = vrot.slane %v1520, 4
      %v1523 = vshll.u32 %v1397, 16
      %v1525 = vrot.slane %v1523, 5
      %v1526 = vsel %vm264, %v1521, %v1525
      %v1528 = vshrl.u32 %v1398, 16
      %v1530 = vrot.slane %v1528, 4
      %v1531 = vshll.u32 %v1398, 16
      %v1533 = vrot.slane %v1531, 5
      %v1534 = vor.u32 %v1530, %v1533
      %v1535 = vrot.slane %v1534, 4
      %v1537 = vshll.u32 %v1399, 16
      %v1539 = vrot.slane %v1537, 5
      %v1540 = vsel %vm264, %v1535, %v1539
      %v1541 = vshrl.u32 %v1399, 16
      %v1543 = vrot.slane %v1541, 4
      %v1544 = vor.u32 %v1543, %v1539
      %v1545 = vrot.slane %v1544, 4
      %v1547 = vshll.u32 %v1400, 16
      %v1549 = vrot.slane %v1547, 5
      %v1550 = vsel %vm264, %v1545, %v1549
      %v1552 = vshrl.u32 %v1401, 16
      %v1554 = vrot.slane %v1552, 4
      %v1555 = vshll.u32 %v1401, 16
      %v1557 = vrot.slane %v1555, 5
      %v1558 = vor.u32 %v1554, %v1557
      %v1559 = vrot.slane %v1558, 4
      %v1561 = vshll.u32 %v1402, 16
      %v1563 = vrot.slane %v1561, 5
      %v1564 = vsel %vm264, %v1559, %v1563
      %v1565 = vshrl.u32 %v1402, 16
      %v1567 = vrot.slane %v1565, 4
      %v1568 = vor.u32 %v1567, %v1563
      %v1569 = vrot.slane %v1568, 4
      %v1571 = vshll.u32 %v1403, 16
      %v1573 = vrot.slane %v1571, 5
      %v1574 = vsel %vm264, %v1569, %v1573
      %v1576 = vshrl.u32 %v1404, 16
      %v1578 = vrot.slane %v1576, 4
      %v1579 = vshll.u32 %v1404, 16
      %v1581 = vrot.slane %v1579, 5
      %v1582 = vor.u32 %v1578, %v1581
      %v1583 = vrot.slane %v1582, 4
      %v1585 = vshll.u32 %v1405, 16
      %v1587 = vrot.slane %v1585, 5
      %v1588 = vsel %vm264, %v1583, %v1587
      %v1589 = vshrl.u32 %v1405, 16
      %v1591 = vrot.slane %v1589, 4
      %v1592 = vor.u32 %v1591, %v1587
      %v1593 = vrot.slane %v1592, 4
      %v1595 = vshll.u32 %v1406, 16
      %v1597 = vrot.slane %v1595, 5
      %v1598 = vsel %vm264, %v1593, %v1597
      %s1599 = scalar_lea.vmem %s1, 256
      %v1600 = vld [vmem:[%s1599] sm:$0xf]
      %v1601 = vld [vmem:[%s1599 + $0x4] sm:$0xf]
      %v1602 = vld [vmem:[%s1599 + $0x8] sm:$0xf]
      %v1603 = vld [vmem:[%s1599 + $0xc] sm:$0xf]
      %v1604 = vld [vmem:[%s1599 + $0x10] sm:$0xf]
      %v1605 = vld [vmem:[%s1599 + $0x14] sm:$0xf]
      %v1606 = vld [vmem:[%s1599 + $0x18] sm:$0xf]
      %v1607 = vld [vmem:[%s1599 + $0x1c] sm:$0xf]
      %v1608 = vld [vmem:[%s1599 + $0x20] sm:$0xf]
      %v1609 = vld [vmem:[%s1599 + $0x24] sm:$0xf]
      %v1610 = vld [vmem:[%s1599 + $0x28] sm:$0xf]
      %v1611 = vld [vmem:[%s1599 + $0x2c] sm:$0xf]
      %v1612 = vld [vmem:[%s1599 + $0x30] sm:$0xf]
      %v1613 = vld [vmem:[%s1599 + $0x34] sm:$0xf]
      %v1614 = vld [vmem:[%s1599 + $0x38] sm:$0xf]
      %v1615 = vld [vmem:[%s1599 + $0x3c] sm:$0xf]
      %v1616 = vunpack.c.l.b16 %v1420
      %v1617 = vunpack.c.l.b16 %v1430
      %v1618 = vunpack.c.l.b16 %v1444
      %v1619 = vunpack.c.l.b16 %v1454
      %v1620 = vunpack.c.l.b16 %v1468
      %v1621 = vunpack.c.l.b16 %v1478
      %v1622 = vunpack.c.l.b16 %v1492
      %v1623 = vunpack.c.l.b16 %v1502
      %v1624 = vunpack.c.l.b16 %v1516
      %v1625 = vunpack.c.l.b16 %v1526
      %v1626 = vunpack.c.l.b16 %v1540
      %v1627 = vunpack.c.l.b16 %v1550
      %v1628 = vunpack.c.l.b16 %v1564
      %v1629 = vunpack.c.l.b16 %v1574
      %v1630 = vunpack.c.l.b16 %v1588
      %v1631 = vunpack.c.l.b16 %v1598
      %v1632 = vpack.c.b16 %v1617, %v1616
      %v1633 = vpack.c.b16 %v1619, %v1618
      %v1634 = vpack.c.b16 %v1621, %v1620
      %v1635 = vpack.c.b16 %v1623, %v1622
      %v1636 = vpack.c.b16 %v1625, %v1624
      %v1637 = vpack.c.b16 %v1627, %v1626
      %v1638 = vpack.c.b16 %v1629, %v1628
      %v1639 = vpack.c.b16 %v1631, %v1630
      %v1664 = vunpack.c.l.b16 %v1600
      %v1665 = vunpack.c.l.b16 %v1601
      %v1666 = vunpack.c.l.b16 %v1602
      %v1667 = vunpack.c.l.b16 %v1603
      %v1668 = vunpack.c.l.b16 %v1604
      %v1669 = vunpack.c.l.b16 %v1605
      %v1670 = vunpack.c.l.b16 %v1606
      %v1671 = vunpack.c.l.b16 %v1607
      %v1672 = vunpack.c.l.b16 %v1608
      %v1673 = vunpack.c.l.b16 %v1609
      %v1674 = vunpack.c.l.b16 %v1610
      %v1675 = vunpack.c.l.b16 %v1611
      %v1676 = vunpack.c.l.b16 %v1612
      %v1677 = vunpack.c.l.b16 %v1613
      %v1678 = vunpack.c.l.b16 %v1614
      %v1679 = vunpack.c.l.b16 %v1615
      %v1680 = vpack.c.b16 %v1665, %v1664
      %v1681 = vpack.c.b16 %v1667, %v1666
      %v1682 = vpack.c.b16 %v1669, %v1668
      %v1683 = vpack.c.b16 %v1671, %v1670
      %v1684 = vpack.c.b16 %v1673, %v1672
      %v1685 = vpack.c.b16 %v1675, %v1674
      %v1686 = vpack.c.b16 %v1677, %v1676
      %v1687 = vpack.c.b16 %v1679, %v1678
      %1696 = vmatprep.subr.bf16.mxu0 0
      %1697 = vmatpush1.bf16.msra.mxu0 %v1680
      %1698 = vmatprep.subr.bf16.mxu0 0
      %1699 = vmatpush1.bf16.msra.mxu0 %v1681
      %1700 = vmatprep.subr.bf16.mxu0 0
      %1701 = vmatpush1.bf16.msra.mxu0 %v1682
      %1702 = vmatprep.subr.bf16.mxu0 0
      %1703 = vmatpush1.bf16.msra.mxu0 %v1683
      %1704 = vmatprep.subr.bf16.mxu0 0
      %1705 = vmatpush1.bf16.msra.mxu0 %v1684
      %1706 = vmatprep.subr.bf16.mxu0 0
      %1707 = vmatpush1.bf16.msra.mxu0 %v1685
      %1708 = vmatprep.subr.bf16.mxu0 0
      %1709 = vmatpush1.bf16.msra.mxu0 %v1686
      %1710 = vmatprep.subr.bf16.mxu0 0
      %1711 = vmatpush1.bf16.msra.mxu0 %v1687
      %1712 = vmatprep.subr.bf16.mxu0 0
      %1713 = vmatpush1.bf16.msra.mxu0 0
      %1714 = vmatprep.subr.bf16.mxu0 0
      %1715 = vmatpush1.bf16.msra.mxu0 0
      %1716 = vmatprep.subr.bf16.mxu0 0
      %1717 = vmatpush1.bf16.msra.mxu0 0
      %1718 = vmatprep.subr.bf16.mxu0 0
      %1719 = vmatpush1.bf16.msra.mxu0 0
      %1720 = vmatprep.subr.bf16.mxu0 0
      %1721 = vmatpush1.bf16.msra.mxu0 0
      %1722 = vmatprep.subr.bf16.mxu0 0
      %1723 = vmatpush1.bf16.msra.mxu0 0
      %1724 = vmatprep.subr.bf16.mxu0 0
      %1725 = vmatpush1.bf16.msra.mxu0 0
      %1726 = vmatprep.subr.bf16.mxu0 0
      %1727 = vmatpush1.bf16.msra.mxu0 0
      %1728 = vmatprep.mubr.bf16.mxu0 0
      %1729 = vmatmul.mubr.bf16.gmra.mrb[0].mxu0 %v1632
      %v1730 = vpop.f32.mrb[0].mxu0
      %v1731 = vadd.f32 0.0, %v1730
      %v1732 = vpop.f32.mrb[0].mxu0
      %v1733 = vpop.f32.mrb[0].mxu0
      %v1734 = vadd.f32 0.0, %v1733
      %v1735 = vpop.f32.mrb[0].mxu0
      %1736 = vmatprep.mubr.bf16.mxu0 0
      %1737 = vmatmul.mubr.bf16.gmra.mrb[0].mxu0 %v1633
      %v1738 = vpop.f32.mrb[0].mxu0
      %v1739 = vadd.f32 0.0, %v1738
      %v1740 = vpop.f32.mrb[0].mxu0
      %v1741 = vpop.f32.mrb[0].mxu0
      %v1742 = vadd.f32 0.0, %v1741
      %v1743 = vpop.f32.mrb[0].mxu0
      %1744 = vmatprep.mubr.bf16.mxu0 0
      %1745 = vmatmul.mubr.bf16.gmra.mrb[0].mxu0 %v1634
      %v1746 = vpop.f32.mrb[0].mxu0
      %v1747 = vadd.f32 0.0, %v1746
      %v1748 = vpop.f32.mrb[0].mxu0
      %v1749 = vpop.f32.mrb[0].mxu0
      %v1750 = vadd.f32 0.0, %v1749
      %v1751 = vpop.f32.mrb[0].mxu0
      %1752 = vmatprep.mubr.bf16.mxu0 0
      %1753 = vmatmul.mubr.bf16.gmra.mrb[0].mxu0 %v1635
      %v1754 = vpop.f32.mrb[0].mxu0
      %v1755 = vadd.f32 0.0, %v1754
      %v1756 = vpop.f32.mrb[0].mxu0
      %v1757 = vpop.f32.mrb[0].mxu0
      %v1758 = vadd.f32 0.0, %v1757
      %v1759 = vpop.f32.mrb[0].mxu0
      %1760 = vmatprep.mubr.bf16.mxu0 0
      %1761 = vmatmul.mubr.bf16.gmra.mrb[0].mxu0 %v1636
      %v1762 = vpop.f32.mrb[0].mxu0
      %v1763 = vadd.f32 0.0, %v1762
      %v1764 = vpop.f32.mrb[0].mxu0
      %v1765 = vpop.f32.mrb[0].mxu0
      %v1766 = vadd.f32 0.0, %v1765
      %v1767 = vpop.f32.mrb[0].mxu0
      %1768 = vmatprep.mubr.bf16.mxu0 0
      %1769 = vmatmul.mubr.bf16.gmra.mrb[0].mxu0 %v1637
      %v1770 = vpop.f32.mrb[0].mxu0
      %v1771 = vadd.f32 0.0, %v1770
      %v1772 = vpop.f32.mrb[0].mxu0
      %v1773 = vpop.f32.mrb[0].mxu0
      %v1774 = vadd.f32 0.0, %v1773
      %v1775 = vpop.f32.mrb[0].mxu0
      %1776 = vmatprep.mubr.bf16.mxu0 0
      %1777 = vmatmul.mubr.bf16.gmra.mrb[0].mxu0 %v1638
      %v1778 = vpop.f32.mrb[0].mxu0
      %v1779 = vadd.f32 0.0, %v1778
      %v1780 = vpop.f32.mrb[0].mxu0
      %v1781 = vpop.f32.mrb[0].mxu0
      %v1782 = vadd.f32 0.0, %v1781
      %v1783 = vpop.f32.mrb[0].mxu0
      %1784 = vmatprep.mubr.bf16.mxu0 0
      %1785 = vmatmul.mubr.bf16.gmra.mrb[0].mxu0 %v1639
      %v1786 = vpop.f32.mrb[0].mxu0
      %v1787 = vadd.f32 0.0, %v1786
      %v1788 = vpop.f32.mrb[0].mxu0
      %v1789 = vpop.f32.mrb[0].mxu0
      %v1790 = vadd.f32 0.0, %v1789
      %v1791 = vpop.f32.mrb[0].mxu0
      %1792 = vdwg.mxu0
      %v1793 = vadd.f32 %v1367, %v1731
      %v1794 = vadd.f32 %v1368, %v1734
      %v1795 = vadd.f32 %v1369, %v1739
      %v1796 = vadd.f32 %v1370, %v1742
      %v1797 = vadd.f32 %v1371, %v1747
      %v1798 = vadd.f32 %v1372, %v1750
      %v1799 = vadd.f32 %v1373, %v1755
      %v1800 = vadd.f32 %v1374, %v1758
      %v1801 = vadd.f32 %v1375, %v1763
      %v1802 = vadd.f32 %v1376, %v1766
      %v1803 = vadd.f32 %v1377, %v1771
      %v1804 = vadd.f32 %v1378, %v1774
      %v1805 = vadd.f32 %v1379, %v1779
      %v1806 = vadd.f32 %v1380, %v1782
      %v1807 = vadd.f32 %v1381, %v1787
      %v1808 = vadd.f32 %v1382, %v1790
      %v1809 = vld [vmem:[%s1140] sm:$0xe]
      %v1810 = vld [vmem:[%s1140 + $0xc] sm:$0xe]
      %v1811 = vld [vmem:[%s1140 + $0x18] sm:$0xe]
      %v1812 = vld [vmem:[%s1140 + $0x24] sm:$0xe]
      %v1813 = vld [vmem:[%s1140 + $0x30] sm:$0xe]
      %v1814 = vld [vmem:[%s1140 + $0x3c] sm:$0xe]
      %v1815 = vld [vmem:[%s1140 + $0x48] sm:$0xe]
      %v1816 = vld [vmem:[%s1140 + $0x54] sm:$0xe]
      %v1841 = vrot.slane %v1809, 5
      %v1842 = vrot.slane %v1841, 4
      %v1843 = vrot.slane %v1384, 5
      %v1844 = vsel %vm870, %v1842, %v1843
      %v1845 = vrot.slane %v1843, 4
      %v1846 = vrot.slane %v1385, 5
      %v1847 = vsel %vm870, %v1845, %v1846
      %v1848 = vrot.slane %v1810, 5
      %v1849 = vrot.slane %v1848, 4
      %v1850 = vrot.slane %v1387, 5
      %v1851 = vsel %vm870, %v1849, %v1850
      %v1852 = vrot.slane %v1850, 4
      %v1853 = vrot.slane %v1388, 5
      %v1854 = vsel %vm870, %v1852, %v1853
      %v1855 = vrot.slane %v1811, 5
      %v1856 = vrot.slane %v1855, 4
      %v1857 = vrot.slane %v1390, 5
      %v1858 = vsel %vm870, %v1856, %v1857
      %v1859 = vrot.slane %v1857, 4
      %v1860 = vrot.slane %v1391, 5
      %v1861 = vsel %vm870, %v1859, %v1860
      %v1862 = vrot.slane %v1812, 5
      %v1863 = vrot.slane %v1862, 4
      %v1864 = vrot.slane %v1393, 5
      %v1865 = vsel %vm870, %v1863, %v1864
      %v1866 = vrot.slane %v1864, 4
      %v1867 = vrot.slane %v1394, 5
      %v1868 = vsel %vm870, %v1866, %v1867
      %v1869 = vrot.slane %v1813, 5
      %v1870 = vrot.slane %v1869, 4
      %v1871 = vrot.slane %v1396, 5
      %v1872 = vsel %vm870, %v1870, %v1871
      %v1873 = vrot.slane %v1871, 4
      %v1874 = vrot.slane %v1397, 5
      %v1875 = vsel %vm870, %v1873, %v1874
      %v1876 = vrot.slane %v1814, 5
      %v1877 = vrot.slane %v1876, 4
      %v1878 = vrot.slane %v1399, 5
      %v1879 = vsel %vm870, %v1877, %v1878
      %v1880 = vrot.slane %v1878, 4
      %v1881 = vrot.slane %v1400, 5
      %v1882 = vsel %vm870, %v1880, %v1881
      %v1883 = vrot.slane %v1815, 5
      %v1884 = vrot.slane %v1883, 4
      %v1885 = vrot.slane %v1402, 5
      %v1886 = vsel %vm870, %v1884, %v1885
      %v1887 = vrot.slane %v1885, 4
      %v1888 = vrot.slane %v1403, 5
      %v1889 = vsel %vm870, %v1887, %v1888
      %v1890 = vrot.slane %v1816, 5
      %v1891 = vrot.slane %v1890, 4
      %v1892 = vrot.slane %v1405, 5
      %v1893 = vsel %vm870, %v1891, %v1892
      %v1894 = vrot.slane %v1892, 4
      %v1895 = vrot.slane %v1406, 5
      %v1896 = vsel %vm870, %v1894, %v1895
      %s1897 = scalar_lea.vmem %s1, 320
      %v1898 = vld [vmem:[%s1897] sm:$0xf]
      %v1899 = vld [vmem:[%s1897 + $0x4] sm:$0xf]
      %v1900 = vld [vmem:[%s1897 + $0x8] sm:$0xf]
      %v1901 = vld [vmem:[%s1897 + $0xc] sm:$0xf]
      %v1902 = vld [vmem:[%s1897 + $0x10] sm:$0xf]
      %v1903 = vld [vmem:[%s1897 + $0x14] sm:$0xf]
      %v1904 = vld [vmem:[%s1897 + $0x18] sm:$0xf]
      %v1905 = vld [vmem:[%s1897 + $0x1c] sm:$0xf]
      %v1906 = vld [vmem:[%s1897 + $0x20] sm:$0xf]
      %v1907 = vld [vmem:[%s1897 + $0x24] sm:$0xf]
      %v1908 = vld [vmem:[%s1897 + $0x28] sm:$0xf]
      %v1909 = vld [vmem:[%s1897 + $0x2c] sm:$0xf]
      %v1910 = vld [vmem:[%s1897 + $0x30] sm:$0xf]
      %v1911 = vld [vmem:[%s1897 + $0x34] sm:$0xf]
      %v1912 = vld [vmem:[%s1897 + $0x38] sm:$0xf]
      %v1913 = vld [vmem:[%s1897 + $0x3c] sm:$0xf]
      %v1914 = vunpack.c.l.b16 %v1844
      %v1915 = vunpack.c.l.b16 %v1847
      %v1916 = vunpack.c.l.b16 %v1851
      %v1917 = vunpack.c.l.b16 %v1854
      %v1918 = vunpack.c.l.b16 %v1858
      %v1919 = vunpack.c.l.b16 %v1861
      %v1920 = vunpack.c.l.b16 %v1865
      %v1921 = vunpack.c.l.b16 %v1868
      %v1922 = vunpack.c.l.b16 %v1872
      %v1923 = vunpack.c.l.b16 %v1875
      %v1924 = vunpack.c.l.b16 %v1879
      %v1925 = vunpack.c.l.b16 %v1882
      %v1926 = vunpack.c.l.b16 %v1886
      %v1927 = vunpack.c.l.b16 %v1889
      %v1928 = vunpack.c.l.b16 %v1893
      %v1929 = vunpack.c.l.b16 %v1896
      %v1930 = vpack.c.b16 %v1915, %v1914
      %v1931 = vpack.c.b16 %v1917, %v1916
      %v1932 = vpack.c.b16 %v1919, %v1918
      %v1933 = vpack.c.b16 %v1921, %v1920
      %v1934 = vpack.c.b16 %v1923, %v1922
      %v1935 = vpack.c.b16 %v1925, %v1924
      %v1936 = vpack.c.b16 %v1927, %v1926
      %v1937 = vpack.c.b16 %v1929, %v1928
      %v1962 = vunpack.c.l.b16 %v1898
      %v1963 = vunpack.c.l.b16 %v1899
      %v1964 = vunpack.c.l.b16 %v1900
      %v1965 = vunpack.c.l.b16 %v1901
      %v1966 = vunpack.c.l.b16 %v1902
      %v1967 = vunpack.c.l.b16 %v1903
      %v1968 = vunpack.c.l.b16 %v1904
      %v1969 = vunpack.c.l.b16 %v1905
      %v1970 = vunpack.c.l.b16 %v1906
      %v1971 = vunpack.c.l.b16 %v1907
      %v1972 = vunpack.c.l.b16 %v1908
      %v1973 = vunpack.c.l.b16 %v1909
      %v1974 = vunpack.c.l.b16 %v1910
      %v1975 = vunpack.c.l.b16 %v1911
      %v1976 = vunpack.c.l.b16 %v1912
      %v1977 = vunpack.c.l.b16 %v1913
      %v1978 = vpack.c.b16 %v1963, %v1962
      %v1979 = vpack.c.b16 %v1965, %v1964
      %v1980 = vpack.c.b16 %v1967, %v1966
      %v1981 = vpack.c.b16 %v1969, %v1968
      %v1982 = vpack.c.b16 %v1971, %v1970
      %v1983 = vpack.c.b16 %v1973, %v1972
      %v1984 = vpack.c.b16 %v1975, %v1974
      %v1985 = vpack.c.b16 %v1977, %v1976
      %1994 = vmatprep.subr.bf16.mxu0 0
      %1995 = vmatpush1.bf16.msra.mxu0 %v1978
      %1996 = vmatprep.subr.bf16.mxu0 0
      %1997 = vmatpush1.bf16.msra.mxu0 %v1979
      %1998 = vmatprep.subr.bf16.mxu0 0
      %1999 = vmatpush1.bf16.msra.mxu0 %v1980
      %2000 = vmatprep.subr.bf16.mxu0 0
      %2001 = vmatpush1.bf16.msra.mxu0 %v1981
      %2002 = vmatprep.subr.bf16.mxu0 0
      %2003 = vmatpush1.bf16.msra.mxu0 %v1982
      %2004 = vmatprep.subr.bf16.mxu0 0
      %2005 = vmatpush1.bf16.msra.mxu0 %v1983
      %2006 = vmatprep.subr.bf16.mxu0 0
      %2007 = vmatpush1.bf16.msra.mxu0 %v1984
      %2008 = vmatprep.subr.bf16.mxu0 0
      %2009 = vmatpush1.bf16.msra.mxu0 %v1985
      %2010 = vmatprep.subr.bf16.mxu0 0
      %2011 = vmatpush1.bf16.msra.mxu0 0
      %2012 = vmatprep.subr.bf16.mxu0 0
      %2013 = vmatpush1.bf16.msra.mxu0 0
      %2014 = vmatprep.subr.bf16.mxu0 0
      %2015 = vmatpush1.bf16.msra.mxu0 0
      %2016 = vmatprep.subr.bf16.mxu0 0
      %2017 = vmatpush1.bf16.msra.mxu0 0
      %2018 = vmatprep.subr.bf16.mxu0 0
      %2019 = vmatpush1.bf16.msra.mxu0 0
      %2020 = vmatprep.subr.bf16.mxu0 0
      %2021 = vmatpush1.bf16.msra.mxu0 0
      %2022 = vmatprep.subr.bf16.mxu0 0
      %2023 = vmatpush1.bf16.msra.mxu0 0
      %2024 = vmatprep.subr.bf16.mxu0 0
      %2025 = vmatpush1.bf16.msra.mxu0 0
      %2026 = vmatprep.mubr.bf16.mxu0 0
      %2027 = vmatmul.mubr.bf16.gmra.mrb[0].mxu0 %v1930
      %v2028 = vpop.f32.mrb[0].mxu0
      %v2029 = vadd.f32 0.0, %v2028
      %v2030 = vpop.f32.mrb[0].mxu0
      %v2031 = vpop.f32.mrb[0].mxu0
      %v2032 = vadd.f32 0.0, %v2031
      %v2033 = vpop.f32.mrb[0].mxu0
      %2034 = vmatprep.mubr.bf16.mxu0 0
      %2035 = vmatmul.mubr.bf16.gmra.mrb[0].mxu0 %v1931
      %v2036 = vpop.f32.mrb[0].mxu0
      %v2037 = vadd.f32 0.0, %v2036
      %v2038 = vpop.f32.mrb[0].mxu0
      %v2039 = vpop.f32.mrb[0].mxu0
      %v2040 = vadd.f32 0.0, %v2039
      %v2041 = vpop.f32.mrb[0].mxu0
      %2042 = vmatprep.mubr.bf16.mxu0 0
      %2043 = vmatmul.mubr.bf16.gmra.mrb[0].mxu0 %v1932
      %v2044 = vpop.f32.mrb[0].mxu0
      %v2045 = vadd.f32 0.0, %v2044
      %v2046 = vpop.f32.mrb[0].mxu0
      %v2047 = vpop.f32.mrb[0].mxu0
      %v2048 = vadd.f32 0.0, %v2047
      %v2049 = vpop.f32.mrb[0].mxu0
      %2050 = vmatprep.mubr.bf16.mxu0 0
      %2051 = vmatmul.mubr.bf16.gmra.mrb[0].mxu0 %v1933
      %v2052 = vpop.f32.mrb[0].mxu0
      %v2053 = vadd.f32 0.0, %v2052
      %v2054 = vpop.f32.mrb[0].mxu0
      %v2055 = vpop.f32.mrb[0].mxu0
      %v2056 = vadd.f32 0.0, %v2055
      %v2057 = vpop.f32.mrb[0].mxu0
      %2058 = vmatprep.mubr.bf16.mxu0 0
      %2059 = vmatmul.mubr.bf16.gmra.mrb[0].mxu0 %v1934
      %v2060 = vpop.f32.mrb[0].mxu0
      %v2061 = vadd.f32 0.0, %v2060
      %v2062 = vpop.f32.mrb[0].mxu0
      %v2063 = vpop.f32.mrb[0].mxu0
      %v2064 = vadd.f32 0.0, %v2063
      %v2065 = vpop.f32.mrb[0].mxu0
      %2066 = vmatprep.mubr.bf16.mxu0 0
      %2067 = vmatmul.mubr.bf16.gmra.mrb[0].mxu0 %v1935
      %v2068 = vpop.f32.mrb[0].mxu0
      %v2069 = vadd.f32 0.0, %v2068
      %v2070 = vpop.f32.mrb[0].mxu0
      %v2071 = vpop.f32.mrb[0].mxu0
      %v2072 = vadd.f32 0.0, %v2071
      %v2073 = vpop.f32.mrb[0].mxu0
      %2074 = vmatprep.mubr.bf16.mxu0 0
      %2075 = vmatmul.mubr.bf16.gmra.mrb[0].mxu0 %v1936
      %v2076 = vpop.f32.mrb[0].mxu0
      %v2077 = vadd.f32 0.0, %v2076
      %v2078 = vpop.f32.mrb[0].mxu0
      %v2079 = vpop.f32.mrb[0].mxu0
      %v2080 = vadd.f32 0.0, %v2079
      %v2081 = vpop.f32.mrb[0].mxu0
      %2082 = vmatprep.mubr.bf16.mxu0 0
      %2083 = vmatmul.mubr.bf16.gmra.mrb[0].mxu0 %v1937
      %v2084 = vpop.f32.mrb[0].mxu0
      %v2085 = vadd.f32 0.0, %v2084
      %v2086 = vpop.f32.mrb[0].mxu0
      %v2087 = vpop.f32.mrb[0].mxu0
      %v2088 = vadd.f32 0.0, %v2087
      %v2089 = vpop.f32.mrb[0].mxu0
      %2090 = vdwg.mxu0
      %v2091 = vadd.f32 %v1793, %v2029
      %v2092 = vadd.f32 %v1794, %v2032
      %v2093 = vadd.f32 %v1795, %v2037
      %v2094 = vadd.f32 %v1796, %v2040
      %v2095 = vadd.f32 %v1797, %v2045
      %v2096 = vadd.f32 %v1798, %v2048
      %v2097 = vadd.f32 %v1799, %v2053
      %v2098 = vadd.f32 %v1800, %v2056
      %v2099 = vadd.f32 %v1801, %v2061
      %v2100 = vadd.f32 %v1802, %v2064
      %v2101 = vadd.f32 %v1803, %v2069
      %v2102 = vadd.f32 %v1804, %v2072
      %v2103 = vadd.f32 %v1805, %v2077
      %v2104 = vadd.f32 %v1806, %v2080
      %v2105 = vadd.f32 %v1807, %v2085
      %v2106 = vadd.f32 %v1808, %v2088
      %s2107 = sadd.s32 %s218, 2
      %s2108 = smul.u32 %s2107, 3
      %s2109 = smul.addr %s2108, 4
      %s2110 = scalar_lea.vmem %s197, %s2109
      %v2111 = vld [vmem:[%s2110] sm:$0xf]
      %v2112 = vld [vmem:[%s2110 + $0x4] sm:$0xf]
      %v2113 = vld [vmem:[%s2110 + $0xc] sm:$0xf]
      %v2114 = vld [vmem:[%s2110 + $0x10] sm:$0xf]
      %v2115 = vld [vmem:[%s2110 + $0x18] sm:$0xf]
      %v2116 = vld [vmem:[%s2110 + $0x1c] sm:$0xf]
      %v2117 = vld [vmem:[%s2110 + $0x24] sm:$0xf]
      %v2118 = vld [vmem:[%s2110 + $0x28] sm:$0xf]
      %v2119 = vld [vmem:[%s2110 + $0x30] sm:$0xf]
      %v2120 = vld [vmem:[%s2110 + $0x34] sm:$0xf]
      %v2121 = vld [vmem:[%s2110 + $0x3c] sm:$0xf]
      %v2122 = vld [vmem:[%s2110 + $0x40] sm:$0xf]
      %v2123 = vld [vmem:[%s2110 + $0x48] sm:$0xf]
      %v2124 = vld [vmem:[%s2110 + $0x4c] sm:$0xf]
      %v2125 = vld [vmem:[%s2110 + $0x54] sm:$0xf]
      %v2126 = vld [vmem:[%s2110 + $0x58] sm:$0xf]
      %s2127 = scalar_lea.vmem %s1, 384
      %v2128 = vld [vmem:[%s2127] sm:$0xf]
      %v2129 = vld [vmem:[%s2127 + $0x4] sm:$0xf]
      %v2130 = vld [vmem:[%s2127 + $0x8] sm:$0xf]
      %v2131 = vld [vmem:[%s2127 + $0xc] sm:$0xf]
      %v2132 = vld [vmem:[%s2127 + $0x10] sm:$0xf]
      %v2133 = vld [vmem:[%s2127 + $0x14] sm:$0xf]
      %v2134 = vld [vmem:[%s2127 + $0x18] sm:$0xf]
      %v2135 = vld [vmem:[%s2127 + $0x1c] sm:$0xf]
      %v2136 = vld [vmem:[%s2127 + $0x20] sm:$0xf]
      %v2137 = vld [vmem:[%s2127 + $0x24] sm:$0xf]
      %v2138 = vld [vmem:[%s2127 + $0x28] sm:$0xf]
      %v2139 = vld [vmem:[%s2127 + $0x2c] sm:$0xf]
      %v2140 = vld [vmem:[%s2127 + $0x30] sm:$0xf]
      %v2141 = vld [vmem:[%s2127 + $0x34] sm:$0xf]
      %v2142 = vld [vmem:[%s2127 + $0x38] sm:$0xf]
      %v2143 = vld [vmem:[%s2127 + $0x3c] sm:$0xf]
      %v2160 = vunpack.c.l.b16 %v2111
      %v2161 = vunpack.c.l.b16 %v2112
      %v2162 = vunpack.c.l.b16 %v2113
      %v2163 = vunpack.c.l.b16 %v2114
      %v2164 = vunpack.c.l.b16 %v2115
      %v2165 = vunpack.c.l.b16 %v2116
      %v2166 = vunpack.c.l.b16 %v2117
      %v2167 = vunpack.c.l.b16 %v2118
      %v2168 = vunpack.c.l.b16 %v2119
      %v2169 = vunpack.c.l.b16 %v2120
      %v2170 = vunpack.c.l.b16 %v2121
      %v2171 = vunpack.c.l.b16 %v2122
      %v2172 = vunpack.c.l.b16 %v2123
      %v2173 = vunpack.c.l.b16 %v2124
      %v2174 = vunpack.c.l.b16 %v2125
      %v2175 = vunpack.c.l.b16 %v2126
      %v2176 = vpack.c.b16 %v2161, %v2160
      %v2177 = vpack.c.b16 %v2163, %v2162
      %v2178 = vpack.c.b16 %v2165, %v2164
      %v2179 = vpack.c.b16 %v2167, %v2166
      %v2180 = vpack.c.b16 %v2169, %v2168
      %v2181 = vpack.c.b16 %v2171, %v2170
      %v2182 = vpack.c.b16 %v2173, %v2172
      %v2183 = vpack.c.b16 %v2175, %v2174
      %v2208 = vunpack.c.l.b16 %v2128
      %v2209 = vunpack.c.l.b16 %v2129
      %v2210 = vunpack.c.l.b16 %v2130
      %v2211 = vunpack.c.l.b16 %v2131
      %v2212 = vunpack.c.l.b16 %v2132
      %v2213 = vunpack.c.l.b16 %v2133
      %v2214 = vunpack.c.l.b16 %v2134
      %v2215 = vunpack.c.l.b16 %v2135
      %v2216 = vunpack.c.l.b16 %v2136
      %v2217 = vunpack.c.l.b16 %v2137
      %v2218 = vunpack.c.l.b16 %v2138
      %v2219 = vunpack.c.l.b16 %v2139
      %v2220 = vunpack.c.l.b16 %v2140
      %v2221 = vunpack.c.l.b16 %v2141
      %v2222 = vunpack.c.l.b16 %v2142
      %v2223 = vunpack.c.l.b16 %v2143
      %v2224 = vpack.c.b16 %v2209, %v2208
      %v2225 = vpack.c.b16 %v2211, %v2210
      %v2226 = vpack.c.b16 %v2213, %v2212
      %v2227 = vpack.c.b16 %v2215, %v2214
      %v2228 = vpack.c.b16 %v2217, %v2216
      %v2229 = vpack.c.b16 %v2219, %v2218
      %v2230 = vpack.c.b16 %v2221, %v2220
      %v2231 = vpack.c.b16 %v2223, %v2222
      %2240 = vmatprep.subr.bf16.mxu0 0
      %2241 = vmatpush1.bf16.msra.mxu0 %v2224
      %2242 = vmatprep.subr.bf16.mxu0 0
      %2243 = vmatpush1.bf16.msra.mxu0 %v2225
      %2244 = vmatprep.subr.bf16.mxu0 0
      %2245 = vmatpush1.bf16.msra.mxu0 %v2226
      %2246 = vmatprep.subr.bf16.mxu0 0
      %2247 = vmatpush1.bf16.msra.mxu0 %v2227
      %2248 = vmatprep.subr.bf16.mxu0 0
      %2249 = vmatpush1.bf16.msra.mxu0 %v2228
      %2250 = vmatprep.subr.bf16.mxu0 0
      %2251 = vmatpush1.bf16.msra.mxu0 %v2229
      %2252 = vmatprep.subr.bf16.mxu0 0
      %2253 = vmatpush1.bf16.msra.mxu0 %v2230
      %2254 = vmatprep.subr.bf16.mxu0 0
      %2255 = vmatpush1.bf16.msra.mxu0 %v2231
      %2256 = vmatprep.subr.bf16.mxu0 0
      %2257 = vmatpush1.bf16.msra.mxu0 0
      %2258 = vmatprep.subr.bf16.mxu0 0
      %2259 = vmatpush1.bf16.msra.mxu0 0
      %2260 = vmatprep.subr.bf16.mxu0 0
      %2261 = vmatpush1.bf16.msra.mxu0 0
      %2262 = vmatprep.subr.bf16.mxu0 0
      %2263 = vmatpush1.bf16.msra.mxu0 0
      %2264 = vmatprep.subr.bf16.mxu0 0
      %2265 = vmatpush1.bf16.msra.mxu0 0
      %2266 = vmatprep.subr.bf16.mxu0 0
      %2267 = vmatpush1.bf16.msra.mxu0 0
      %2268 = vmatprep.subr.bf16.mxu0 0
      %2269 = vmatpush1.bf16.msra.mxu0 0
      %2270 = vmatprep.subr.bf16.mxu0 0
      %2271 = vmatpush1.bf16.msra.mxu0 0
      %2272 = vmatprep.mubr.bf16.mxu0 0
      %2273 = vmatmul.mubr.bf16.gmra.mrb[0].mxu0 %v2176
      %v2274 = vpop.f32.mrb[0].mxu0
      %v2275 = vadd.f32 0.0, %v2274
      %v2276 = vpop.f32.mrb[0].mxu0
      %v2277 = vpop.f32.mrb[0].mxu0
      %v2278 = vadd.f32 0.0, %v2277
      %v2279 = vpop.f32.mrb[0].mxu0
      %2280 = vmatprep.mubr.bf16.mxu0 0
      %2281 = vmatmul.mubr.bf16.gmra.mrb[0].mxu0 %v2177
      %v2282 = vpop.f32.mrb[0].mxu0
      %v2283 = vadd.f32 0.0, %v2282
      %v2284 = vpop.f32.mrb[0].mxu0
      %v2285 = vpop.f32.mrb[0].mxu0
      %v2286 = vadd.f32 0.0, %v2285
      %v2287 = vpop.f32.mrb[0].mxu0
      %2288 = vmatprep.mubr.bf16.mxu0 0
      %2289 = vmatmul.mubr.bf16.gmra.mrb[0].mxu0 %v2178
      %v2290 = vpop.f32.mrb[0].mxu0
      %v2291 = vadd.f32 0.0, %v2290
      %v2292 = vpop.f32.mrb[0].mxu0
      %v2293 = vpop.f32.mrb[0].mxu0
      %v2294 = vadd.f32 0.0, %v2293
      %v2295 = vpop.f32.mrb[0].mxu0
      %2296 = vmatprep.mubr.bf16.mxu0 0
      %2297 = vmatmul.mubr.bf16.gmra.mrb[0].mxu0 %v2179
      %v2298 = vpop.f32.mrb[0].mxu0
      %v2299 = vadd.f32 0.0, %v2298
      %v2300 = vpop.f32.mrb[0].mxu0
      %v2301 = vpop.f32.mrb[0].mxu0
      %v2302 = vadd.f32 0.0, %v2301
      %v2303 = vpop.f32.mrb[0].mxu0
      %2304 = vmatprep.mubr.bf16.mxu0 0
      %2305 = vmatmul.mubr.bf16.gmra.mrb[0].mxu0 %v2180
      %v2306 = vpop.f32.mrb[0].mxu0
      %v2307 = vadd.f32 0.0, %v2306
      %v2308 = vpop.f32.mrb[0].mxu0
      %v2309 = vpop.f32.mrb[0].mxu0
      %v2310 = vadd.f32 0.0, %v2309
      %v2311 = vpop.f32.mrb[0].mxu0
      %2312 = vmatprep.mubr.bf16.mxu0 0
      %2313 = vmatmul.mubr.bf16.gmra.mrb[0].mxu0 %v2181
      %v2314 = vpop.f32.mrb[0].mxu0
      %v2315 = vadd.f32 0.0, %v2314
      %v2316 = vpop.f32.mrb[0].mxu0
      %v2317 = vpop.f32.mrb[0].mxu0
      %v2318 = vadd.f32 0.0, %v2317
      %v2319 = vpop.f32.mrb[0].mxu0
      %2320 = vmatprep.mubr.bf16.mxu0 0
      %2321 = vmatmul.mubr.bf16.gmra.mrb[0].mxu0 %v2182
      %v2322 = vpop.f32.mrb[0].mxu0
      %v2323 = vadd.f32 0.0, %v2322
      %v2324 = vpop.f32.mrb[0].mxu0
      %v2325 = vpop.f32.mrb[0].mxu0
      %v2326 = vadd.f32 0.0, %v2325
      %v2327 = vpop.f32.mrb[0].mxu0
      %2328 = vmatprep.mubr.bf16.mxu0 0
      %2329 = vmatmul.mubr.bf16.gmra.mrb[0].mxu0 %v2183
      %v2330 = vpop.f32.mrb[0].mxu0
      %v2331 = vadd.f32 0.0, %v2330
      %v2332 = vpop.f32.mrb[0].mxu0
      %v2333 = vpop.f32.mrb[0].mxu0
      %v2334 = vadd.f32 0.0, %v2333
      %v2335 = vpop.f32.mrb[0].mxu0
      %2336 = vdwg.mxu0
      %v2337 = vadd.f32 %v2091, %v2275
      %v2338 = vadd.f32 %v2092, %v2278
      %v2339 = vadd.f32 %v2093, %v2283
      %v2340 = vadd.f32 %v2094, %v2286
      %v2341 = vadd.f32 %v2095, %v2291
      %v2342 = vadd.f32 %v2096, %v2294
      %v2343 = vadd.f32 %v2097, %v2299
      %v2344 = vadd.f32 %v2098, %v2302
      %v2345 = vadd.f32 %v2099, %v2307
      %v2346 = vadd.f32 %v2100, %v2310
      %v2347 = vadd.f32 %v2101, %v2315
      %v2348 = vadd.f32 %v2102, %v2318
      %v2349 = vadd.f32 %v2103, %v2323
      %v2350 = vadd.f32 %v2104, %v2326
      %v2351 = vadd.f32 %v2105, %v2331
      %v2352 = vadd.f32 %v2106, %v2334
      %v2353 = vld [vmem:[%s2110] sm:$0xf]
      %v2354 = vld [vmem:[%s2110 + $0x4] sm:$0xf]
      %v2355 = vld [vmem:[%s2110 + $0x8] sm:$0x1]
      %v2356 = vld [vmem:[%s2110 + $0xc] sm:$0xf]
      %v2357 = vld [vmem:[%s2110 + $0x10] sm:$0xf]
      %v2358 = vld [vmem:[%s2110 + $0x14] sm:$0x1]
      %v2359 = vld [vmem:[%s2110 + $0x18] sm:$0xf]
      %v2360 = vld [vmem:[%s2110 + $0x1c] sm:$0xf]
      %v2361 = vld [vmem:[%s2110 + $0x20] sm:$0x1]
      %v2362 = vld [vmem:[%s2110 + $0x24] sm:$0xf]
      %v2363 = vld [vmem:[%s2110 + $0x28] sm:$0xf]
      %v2364 = vld [vmem:[%s2110 + $0x2c] sm:$0x1]
      %v2365 = vld [vmem:[%s2110 + $0x30] sm:$0xf]
      %v2366 = vld [vmem:[%s2110 + $0x34] sm:$0xf]
      %v2367 = vld [vmem:[%s2110 + $0x38] sm:$0x1]
      %v2368 = vld [vmem:[%s2110 + $0x3c] sm:$0xf]
      %v2369 = vld [vmem:[%s2110 + $0x40] sm:$0xf]
      %v2370 = vld [vmem:[%s2110 + $0x44] sm:$0x1]
      %v2371 = vld [vmem:[%s2110 + $0x48] sm:$0xf]
      %v2372 = vld [vmem:[%s2110 + $0x4c] sm:$0xf]
      %v2373 = vld [vmem:[%s2110 + $0x50] sm:$0x1]
      %v2374 = vld [vmem:[%s2110 + $0x54] sm:$0xf]
      %v2375 = vld [vmem:[%s2110 + $0x58] sm:$0xf]
      %v2376 = vld [vmem:[%s2110 + $0x5c] sm:$0x1]
      %v2378 = vshrl.u32 %v2353, 16
      %v2380 = vrot.slane %v2378, 4
      %v2381 = vshll.u32 %v2353, 16
      %v2383 = vrot.slane %v2381, 5
      %v2384 = vor.u32 %v2380, %v2383
      %v2385 = vrot.slane %v2384, 4
      %v2387 = vshll.u32 %v2354, 16
      %v2389 = vrot.slane %v2387, 5
      %v2390 = vsel %vm264, %v2385, %v2389
      %v2391 = vshrl.u32 %v2354, 16
      %v2393 = vrot.slane %v2391, 4
      %v2394 = vor.u32 %v2393, %v2389
      %v2395 = vrot.slane %v2394, 4
      %v2397 = vshll.u32 %v2355, 16
      %v2399 = vrot.slane %v2397, 5
      %v2400 = vsel %vm264, %v2395, %v2399
      %v2402 = vshrl.u32 %v2356, 16
      %v2404 = vrot.slane %v2402, 4
      %v2405 = vshll.u32 %v2356, 16
      %v2407 = vrot.slane %v2405, 5
      %v2408 = vor.u32 %v2404, %v2407
      %v2409 = vrot.slane %v2408, 4
      %v2411 = vshll.u32 %v2357, 16
      %v2413 = vrot.slane %v2411, 5
      %v2414 = vsel %vm264, %v2409, %v2413
      %v2415 = vshrl.u32 %v2357, 16
      %v2417 = vrot.slane %v2415, 4
      %v2418 = vor.u32 %v2417, %v2413
      %v2419 = vrot.slane %v2418, 4
      %v2421 = vshll.u32 %v2358, 16
      %v2423 = vrot.slane %v2421, 5
      %v2424 = vsel %vm264, %v2419, %v2423
      %v2426 = vshrl.u32 %v2359, 16
      %v2428 = vrot.slane %v2426, 4
      %v2429 = vshll.u32 %v2359, 16
      %v2431 = vrot.slane %v2429, 5
      %v2432 = vor.u32 %v2428, %v2431
      %v2433 = vrot.slane %v2432, 4
      %v2435 = vshll.u32 %v2360, 16
      %v2437 = vrot.slane %v2435, 5
      %v2438 = vsel %vm264, %v2433, %v2437
      %v2439 = vshrl.u32 %v2360, 16
      %v2441 = vrot.slane %v2439, 4
      %v2442 = vor.u32 %v2441, %v2437
      %v2443 = vrot.slane %v2442, 4
      %v2445 = vshll.u32 %v2361, 16
      %v2447 = vrot.slane %v2445, 5
      %v2448 = vsel %vm264, %v2443, %v2447
      %v2450 = vshrl.u32 %v2362, 16
      %v2452 = vrot.slane %v2450, 4
      %v2453 = vshll.u32 %v2362, 16
      %v2455 = vrot.slane %v2453, 5
      %v2456 = vor.u32 %v2452, %v2455
      %v2457 = vrot.slane %v2456, 4
      %v2459 = vshll.u32 %v2363, 16
      %v2461 = vrot.slane %v2459, 5
      %v2462 = vsel %vm264, %v2457, %v2461
      %v2463 = vshrl.u32 %v2363, 16
      %v2465 = vrot.slane %v2463, 4
      %v2466 = vor.u32 %v2465, %v2461
      %v2467 = vrot.slane %v2466, 4
      %v2469 = vshll.u32 %v2364, 16
      %v2471 = vrot.slane %v2469, 5
      %v2472 = vsel %vm264, %v2467, %v2471
      %v2474 = vshrl.u32 %v2365, 16
      %v2476 = vrot.slane %v2474, 4
      %v2477 = vshll.u32 %v2365, 16
      %v2479 = vrot.slane %v2477, 5
      %v2480 = vor.u32 %v2476, %v2479
      %v2481 = vrot.slane %v2480, 4
      %v2483 = vshll.u32 %v2366, 16
      %v2485 = vrot.slane %v2483, 5
      %v2486 = vsel %vm264, %v2481, %v2485
      %v2487 = vshrl.u32 %v2366, 16
      %v2489 = vrot.slane %v2487, 4
      %v2490 = vor.u32 %v2489, %v2485
      %v2491 = vrot.slane %v2490, 4
      %v2493 = vshll.u32 %v2367, 16
      %v2495 = vrot.slane %v2493, 5
      %v2496 = vsel %vm264, %v2491, %v2495
      %v2498 = vshrl.u32 %v2368, 16
      %v2500 = vrot.slane %v2498, 4
      %v2501 = vshll.u32 %v2368, 16
      %v2503 = vrot.slane %v2501, 5
      %v2504 = vor.u32 %v2500, %v2503
      %v2505 = vrot.slane %v2504, 4
      %v2507 = vshll.u32 %v2369, 16
      %v2509 = vrot.slane %v2507, 5
      %v2510 = vsel %vm264, %v2505, %v2509
      %v2511 = vshrl.u32 %v2369, 16
      %v2513 = vrot.slane %v2511, 4
      %v2514 = vor.u32 %v2513, %v2509
      %v2515 = vrot.slane %v2514, 4
      %v2517 = vshll.u32 %v2370, 16
      %v2519 = vrot.slane %v2517, 5
      %v2520 = vsel %vm264, %v2515, %v2519
      %v2522 = vshrl.u32 %v2371, 16
      %v2524 = vrot.slane %v2522, 4
      %v2525 = vshll.u32 %v2371, 16
      %v2527 = vrot.slane %v2525, 5
      %v2528 = vor.u32 %v2524, %v2527
      %v2529 = vrot.slane %v2528, 4
      %v2531 = vshll.u32 %v2372, 16
      %v2533 = vrot.slane %v2531, 5
      %v2534 = vsel %vm264, %v2529, %v2533
      %v2535 = vshrl.u32 %v2372, 16
      %v2537 = vrot.slane %v2535, 4
      %v2538 = vor.u32 %v2537, %v2533
      %v2539 = vrot.slane %v2538, 4
      %v2541 = vshll.u32 %v2373, 16
      %v2543 = vrot.slane %v2541, 5
      %v2544 = vsel %vm264, %v2539, %v2543
      %v2546 = vshrl.u32 %v2374, 16
      %v2548 = vrot.slane %v2546, 4
      %v2549 = vshll.u32 %v2374, 16
      %v2551 = vrot.slane %v2549, 5
      %v2552 = vor.u32 %v2548, %v2551
      %v2553 = vrot.slane %v2552, 4
      %v2555 = vshll.u32 %v2375, 16
      %v2557 = vrot.slane %v2555, 5
      %v2558 = vsel %vm264, %v2553, %v2557
      %v2559 = vshrl.u32 %v2375, 16
      %v2561 = vrot.slane %v2559, 4
      %v2562 = vor.u32 %v2561, %v2557
      %v2563 = vrot.slane %v2562, 4
      %v2565 = vshll.u32 %v2376, 16
      %v2567 = vrot.slane %v2565, 5
      %v2568 = vsel %vm264, %v2563, %v2567
      %s2569 = scalar_lea.vmem %s1, 448
      %v2570 = vld [vmem:[%s2569] sm:$0xf]
      %v2571 = vld [vmem:[%s2569 + $0x4] sm:$0xf]
      %v2572 = vld [vmem:[%s2569 + $0x8] sm:$0xf]
      %v2573 = vld [vmem:[%s2569 + $0xc] sm:$0xf]
      %v2574 = vld [vmem:[%s2569 + $0x10] sm:$0xf]
      %v2575 = vld [vmem:[%s2569 + $0x14] sm:$0xf]
      %v2576 = vld [vmem:[%s2569 + $0x18] sm:$0xf]
      %v2577 = vld [vmem:[%s2569 + $0x1c] sm:$0xf]
      %v2578 = vld [vmem:[%s2569 + $0x20] sm:$0xf]
      %v2579 = vld [vmem:[%s2569 + $0x24] sm:$0xf]
      %v2580 = vld [vmem:[%s2569 + $0x28] sm:$0xf]
      %v2581 = vld [vmem:[%s2569 + $0x2c] sm:$0xf]
      %v2582 = vld [vmem:[%s2569 + $0x30] sm:$0xf]
      %v2583 = vld [vmem:[%s2569 + $0x34] sm:$0xf]
      %v2584 = vld [vmem:[%s2569 + $0x38] sm:$0xf]
      %v2585 = vld [vmem:[%s2569 + $0x3c] sm:$0xf]
      %v2586 = vunpack.c.l.b16 %v2390
      %v2587 = vunpack.c.l.b16 %v2400
      %v2588 = vunpack.c.l.b16 %v2414
      %v2589 = vunpack.c.l.b16 %v2424
      %v2590 = vunpack.c.l.b16 %v2438
      %v2591 = vunpack.c.l.b16 %v2448
      %v2592 = vunpack.c.l.b16 %v2462
      %v2593 = vunpack.c.l.b16 %v2472
      %v2594 = vunpack.c.l.b16 %v2486
      %v2595 = vunpack.c.l.b16 %v2496
      %v2596 = vunpack.c.l.b16 %v2510
      %v2597 = vunpack.c.l.b16 %v2520
      %v2598 = vunpack.c.l.b16 %v2534
      %v2599 = vunpack.c.l.b16 %v2544
      %v2600 = vunpack.c.l.b16 %v2558
      %v2601 = vunpack.c.l.b16 %v2568
      %v2602 = vpack.c.b16 %v2587, %v2586
      %v2603 = vpack.c.b16 %v2589, %v2588
      %v2604 = vpack.c.b16 %v2591, %v2590
      %v2605 = vpack.c.b16 %v2593, %v2592
      %v2606 = vpack.c.b16 %v2595, %v2594
      %v2607 = vpack.c.b16 %v2597, %v2596
      %v2608 = vpack.c.b16 %v2599, %v2598
      %v2609 = vpack.c.b16 %v2601, %v2600
      %v2634 = vunpack.c.l.b16 %v2570
      %v2635 = vunpack.c.l.b16 %v2571
      %v2636 = vunpack.c.l.b16 %v2572
      %v2637 = vunpack.c.l.b16 %v2573
      %v2638 = vunpack.c.l.b16 %v2574
      %v2639 = vunpack.c.l.b16 %v2575
      %v2640 = vunpack.c.l.b16 %v2576
      %v2641 = vunpack.c.l.b16 %v2577
      %v2642 = vunpack.c.l.b16 %v2578
      %v2643 = vunpack.c.l.b16 %v2579
      %v2644 = vunpack.c.l.b16 %v2580
      %v2645 = vunpack.c.l.b16 %v2581
      %v2646 = vunpack.c.l.b16 %v2582
      %v2647 = vunpack.c.l.b16 %v2583
      %v2648 = vunpack.c.l.b16 %v2584
      %v2649 = vunpack.c.l.b16 %v2585
      %v2650 = vpack.c.b16 %v2635, %v2634
      %v2651 = vpack.c.b16 %v2637, %v2636
      %v2652 = vpack.c.b16 %v2639, %v2638
      %v2653 = vpack.c.b16 %v2641, %v2640
      %v2654 = vpack.c.b16 %v2643, %v2642
      %v2655 = vpack.c.b16 %v2645, %v2644
      %v2656 = vpack.c.b16 %v2647, %v2646
      %v2657 = vpack.c.b16 %v2649, %v2648
      %2666 = vmatprep.subr.bf16.mxu0 0
      %2667 = vmatpush1.bf16.msra.mxu0 %v2650
      %2668 = vmatprep.subr.bf16.mxu0 0
      %2669 = vmatpush1.bf16.msra.mxu0 %v2651
      %2670 = vmatprep.subr.bf16.mxu0 0
      %2671 = vmatpush1.bf16.msra.mxu0 %v2652
      %2672 = vmatprep.subr.bf16.mxu0 0
      %2673 = vmatpush1.bf16.msra.mxu0 %v2653
      %2674 = vmatprep.subr.bf16.mxu0 0
      %2675 = vmatpush1.bf16.msra.mxu0 %v2654
      %2676 = vmatprep.subr.bf16.mxu0 0
      %2677 = vmatpush1.bf16.msra.mxu0 %v2655
      %2678 = vmatprep.subr.bf16.mxu0 0
      %2679 = vmatpush1.bf16.msra.mxu0 %v2656
      %2680 = vmatprep.subr.bf16.mxu0 0
      %2681 = vmatpush1.bf16.msra.mxu0 %v2657
      %2682 = vmatprep.subr.bf16.mxu0 0
      %2683 = vmatpush1.bf16.msra.mxu0 0
      %2684 = vmatprep.subr.bf16.mxu0 0
      %2685 = vmatpush1.bf16.msra.mxu0 0
      %2686 = vmatprep.subr.bf16.mxu0 0
      %2687 = vmatpush1.bf16.msra.mxu0 0
      %2688 = vmatprep.subr.bf16.mxu0 0
      %2689 = vmatpush1.bf16.msra.mxu0 0
      %2690 = vmatprep.subr.bf16.mxu0 0
      %2691 = vmatpush1.bf16.msra.mxu0 0
      %2692 = vmatprep.subr.bf16.mxu0 0
      %2693 = vmatpush1.bf16.msra.mxu0 0
      %2694 = vmatprep.subr.bf16.mxu0 0
      %2695 = vmatpush1.bf16.msra.mxu0 0
      %2696 = vmatprep.subr.bf16.mxu0 0
      %2697 = vmatpush1.bf16.msra.mxu0 0
      %2698 = vmatprep.mubr.bf16.mxu0 0
      %2699 = vmatmul.mubr.bf16.gmra.mrb[0].mxu0 %v2602
      %v2700 = vpop.f32.mrb[0].mxu0
      %v2701 = vadd.f32 0.0, %v2700
      %v2702 = vpop.f32.mrb[0].mxu0
      %v2703 = vpop.f32.mrb[0].mxu0
      %v2704 = vadd.f32 0.0, %v2703
      %v2705 = vpop.f32.mrb[0].mxu0
      %2706 = vmatprep.mubr.bf16.mxu0 0
      %2707 = vmatmul.mubr.bf16.gmra.mrb[0].mxu0 %v2603
      %v2708 = vpop.f32.mrb[0].mxu0
      %v2709 = vadd.f32 0.0, %v2708
      %v2710 = vpop.f32.mrb[0].mxu0
      %v2711 = vpop.f32.mrb[0].mxu0
      %v2712 = vadd.f32 0.0, %v2711
      %v2713 = vpop.f32.mrb[0].mxu0
      %2714 = vmatprep.mubr.bf16.mxu0 0
      %2715 = vmatmul.mubr.bf16.gmra.mrb[0].mxu0 %v2604
      %v2716 = vpop.f32.mrb[0].mxu0
      %v2717 = vadd.f32 0.0, %v2716
      %v2718 = vpop.f32.mrb[0].mxu0
      %v2719 = vpop.f32.mrb[0].mxu0
      %v2720 = vadd.f32 0.0, %v2719
      %v2721 = vpop.f32.mrb[0].mxu0
      %2722 = vmatprep.mubr.bf16.mxu0 0
      %2723 = vmatmul.mubr.bf16.gmra.mrb[0].mxu0 %v2605
      %v2724 = vpop.f32.mrb[0].mxu0
      %v2725 = vadd.f32 0.0, %v2724
      %v2726 = vpop.f32.mrb[0].mxu0
      %v2727 = vpop.f32.mrb[0].mxu0
      %v2728 = vadd.f32 0.0, %v2727
      %v2729 = vpop.f32.mrb[0].mxu0
      %2730 = vmatprep.mubr.bf16.mxu0 0
      %2731 = vmatmul.mubr.bf16.gmra.mrb[0].mxu0 %v2606
      %v2732 = vpop.f32.mrb[0].mxu0
      %v2733 = vadd.f32 0.0, %v2732
      %v2734 = vpop.f32.mrb[0].mxu0
      %v2735 = vpop.f32.mrb[0].mxu0
      %v2736 = vadd.f32 0.0, %v2735
      %v2737 = vpop.f32.mrb[0].mxu0
      %2738 = vmatprep.mubr.bf16.mxu0 0
      %2739 = vmatmul.mubr.bf16.gmra.mrb[0].mxu0 %v2607
      %v2740 = vpop.f32.mrb[0].mxu0
      %v2741 = vadd.f32 0.0, %v2740
      %v2742 = vpop.f32.mrb[0].mxu0
      %v2743 = vpop.f32.mrb[0].mxu0
      %v2744 = vadd.f32 0.0, %v2743
      %v2745 = vpop.f32.mrb[0].mxu0
      %2746 = vmatprep.mubr.bf16.mxu0 0
      %2747 = vmatmul.mubr.bf16.gmra.mrb[0].mxu0 %v2608
      %v2748 = vpop.f32.mrb[0].mxu0
      %v2749 = vadd.f32 0.0, %v2748
      %v2750 = vpop.f32.mrb[0].mxu0
      %v2751 = vpop.f32.mrb[0].mxu0
      %v2752 = vadd.f32 0.0, %v2751
      %v2753 = vpop.f32.mrb[0].mxu0
      %2754 = vmatprep.mubr.bf16.mxu0 0
      %2755 = vmatmul.mubr.bf16.gmra.mrb[0].mxu0 %v2609
      %v2756 = vpop.f32.mrb[0].mxu0
      %v2757 = vadd.f32 0.0, %v2756
      %v2758 = vpop.f32.mrb[0].mxu0
      %v2759 = vpop.f32.mrb[0].mxu0
      %v2760 = vadd.f32 0.0, %v2759
      %v2761 = vpop.f32.mrb[0].mxu0
      %2762 = vdwg.mxu0
      %v2763 = vadd.f32 %v2337, %v2701
      %v2764 = vadd.f32 %v2338, %v2704
      %v2765 = vadd.f32 %v2339, %v2709
      %v2766 = vadd.f32 %v2340, %v2712
      %v2767 = vadd.f32 %v2341, %v2717
      %v2768 = vadd.f32 %v2342, %v2720
      %v2769 = vadd.f32 %v2343, %v2725
      %v2770 = vadd.f32 %v2344, %v2728
      %v2771 = vadd.f32 %v2345, %v2733
      %v2772 = vadd.f32 %v2346, %v2736
      %v2773 = vadd.f32 %v2347, %v2741
      %v2774 = vadd.f32 %v2348, %v2744
      %v2775 = vadd.f32 %v2349, %v2749
      %v2776 = vadd.f32 %v2350, %v2752
      %v2777 = vadd.f32 %v2351, %v2757
      %v2778 = vadd.f32 %v2352, %v2760
      %v2779 = vld [vmem:[%s2110] sm:$0xe]
      %v2780 = vld [vmem:[%s2110 + $0xc] sm:$0xe]
      %v2781 = vld [vmem:[%s2110 + $0x18] sm:$0xe]
      %v2782 = vld [vmem:[%s2110 + $0x24] sm:$0xe]
      %v2783 = vld [vmem:[%s2110 + $0x30] sm:$0xe]
      %v2784 = vld [vmem:[%s2110 + $0x3c] sm:$0xe]
      %v2785 = vld [vmem:[%s2110 + $0x48] sm:$0xe]
      %v2786 = vld [vmem:[%s2110 + $0x54] sm:$0xe]
      %v2811 = vrot.slane %v2779, 5
      %v2812 = vrot.slane %v2811, 4
      %v2813 = vrot.slane %v2354, 5
      %v2814 = vsel %vm870, %v2812, %v2813
      %v2815 = vrot.slane %v2813, 4
      %v2816 = vrot.slane %v2355, 5
      %v2817 = vsel %vm870, %v2815, %v2816
      %v2818 = vrot.slane %v2780, 5
      %v2819 = vrot.slane %v2818, 4
      %v2820 = vrot.slane %v2357, 5
      %v2821 = vsel %vm870, %v2819, %v2820
      %v2822 = vrot.slane %v2820, 4
      %v2823 = vrot.slane %v2358, 5
      %v2824 = vsel %vm870, %v2822, %v2823
      %v2825 = vrot.slane %v2781, 5
      %v2826 = vrot.slane %v2825, 4
      %v2827 = vrot.slane %v2360, 5
      %v2828 = vsel %vm870, %v2826, %v2827
      %v2829 = vrot.slane %v2827, 4
      %v2830 = vrot.slane %v2361, 5
      %v2831 = vsel %vm870, %v2829, %v2830
      %v2832 = vrot.slane %v2782, 5
      %v2833 = vrot.slane %v2832, 4
      %v2834 = vrot.slane %v2363, 5
      %v2835 = vsel %vm870, %v2833, %v2834
      %v2836 = vrot.slane %v2834, 4
      %v2837 = vrot.slane %v2364, 5
      %v2838 = vsel %vm870, %v2836, %v2837
      %v2839 = vrot.slane %v2783, 5
      %v2840 = vrot.slane %v2839, 4
      %v2841 = vrot.slane %v2366, 5
      %v2842 = vsel %vm870, %v2840, %v2841
      %v2843 = vrot.slane %v2841, 4
      %v2844 = vrot.slane %v2367, 5
      %v2845 = vsel %vm870, %v2843, %v2844
      %v2846 = vrot.slane %v2784, 5
      %v2847 = vrot.slane %v2846, 4
      %v2848 = vrot.slane %v2369, 5
      %v2849 = vsel %vm870, %v2847, %v2848
      %v2850 = vrot.slane %v2848, 4
      %v2851 = vrot.slane %v2370, 5
      %v2852 = vsel %vm870, %v2850, %v2851
      %v2853 = vrot.slane %v2785, 5
      %v2854 = vrot.slane %v2853, 4
      %v2855 = vrot.slane %v2372, 5
      %v2856 = vsel %vm870, %v2854, %v2855
      %v2857 = vrot.slane %v2855, 4
      %v2858 = vrot.slane %v2373, 5
      %v2859 = vsel %vm870, %v2857, %v2858
      %v2860 = vrot.slane %v2786, 5
      %v2861 = vrot.slane %v2860, 4
      %v2862 = vrot.slane %v2375, 5
      %v2863 = vsel %vm870, %v2861, %v2862
      %v2864 = vrot.slane %v2862, 4
      %v2865 = vrot.slane %v2376, 5
      %v2866 = vsel %vm870, %v2864, %v2865
      %s2867 = scalar_lea.vmem %s1, 512
      %v2868 = vld [vmem:[%s2867] sm:$0xf]
      %v2869 = vld [vmem:[%s2867 + $0x4] sm:$0xf]
      %v2870 = vld [vmem:[%s2867 + $0x8] sm:$0xf]
      %v2871 = vld [vmem:[%s2867 + $0xc] sm:$0xf]
      %v2872 = vld [vmem:[%s2867 + $0x10] sm:$0xf]
      %v2873 = vld [vmem:[%s2867 + $0x14] sm:$0xf]
      %v2874 = vld [vmem:[%s2867 + $0x18] sm:$0xf]
      %v2875 = vld [vmem:[%s2867 + $0x1c] sm:$0xf]
      %v2876 = vld [vmem:[%s2867 + $0x20] sm:$0xf]
      %v2877 = vld [vmem:[%s2867 + $0x24] sm:$0xf]
      %v2878 = vld [vmem:[%s2867 + $0x28] sm:$0xf]
      %v2879 = vld [vmem:[%s2867 + $0x2c] sm:$0xf]
      %v2880 = vld [vmem:[%s2867 + $0x30] sm:$0xf]
      %v2881 = vld [vmem:[%s2867 + $0x34] sm:$0xf]
      %v2882 = vld [vmem:[%s2867 + $0x38] sm:$0xf]
      %v2883 = vld [vmem:[%s2867 + $0x3c] sm:$0xf]
      %v2884 = vunpack.c.l.b16 %v2814
      %v2885 = vunpack.c.l.b16 %v2817
      %v2886 = vunpack.c.l.b16 %v2821
      %v2887 = vunpack.c.l.b16 %v2824
      %v2888 = vunpack.c.l.b16 %v2828
      %v2889 = vunpack.c.l.b16 %v2831
      %v2890 = vunpack.c.l.b16 %v2835
      %v2891 = vunpack.c.l.b16 %v2838
      %v2892 = vunpack.c.l.b16 %v2842
      %v2893 = vunpack.c.l.b16 %v2845
      %v2894 = vunpack.c.l.b16 %v2849
      %v2895 = vunpack.c.l.b16 %v2852
      %v2896 = vunpack.c.l.b16 %v2856
      %v2897 = vunpack.c.l.b16 %v2859
      %v2898 = vunpack.c.l.b16 %v2863
      %v2899 = vunpack.c.l.b16 %v2866
      %v2900 = vpack.c.b16 %v2885, %v2884
      %v2901 = vpack.c.b16 %v2887, %v2886
      %v2902 = vpack.c.b16 %v2889, %v2888
      %v2903 = vpack.c.b16 %v2891, %v2890
      %v2904 = vpack.c.b16 %v2893, %v2892
      %v2905 = vpack.c.b16 %v2895, %v2894
      %v2906 = vpack.c.b16 %v2897, %v2896
      %v2907 = vpack.c.b16 %v2899, %v2898
      %v2932 = vunpack.c.l.b16 %v2868
      %v2933 = vunpack.c.l.b16 %v2869
      %v2934 = vunpack.c.l.b16 %v2870
      %v2935 = vunpack.c.l.b16 %v2871
      %v2936 = vunpack.c.l.b16 %v2872
      %v2937 = vunpack.c.l.b16 %v2873
      %v2938 = vunpack.c.l.b16 %v2874
      %v2939 = vunpack.c.l.b16 %v2875
      %v2940 = vunpack.c.l.b16 %v2876
      %v2941 = vunpack.c.l.b16 %v2877
      %v2942 = vunpack.c.l.b16 %v2878
      %v2943 = vunpack.c.l.b16 %v2879
      %v2944 = vunpack.c.l.b16 %v2880
      %v2945 = vunpack.c.l.b16 %v2881
      %v2946 = vunpack.c.l.b16 %v2882
      %v2947 = vunpack.c.l.b16 %v2883
      %v2948 = vpack.c.b16 %v2933, %v2932
      %v2949 = vpack.c.b16 %v2935, %v2934
      %v2950 = vpack.c.b16 %v2937, %v2936
      %v2951 = vpack.c.b16 %v2939, %v2938
      %v2952 = vpack.c.b16 %v2941, %v2940
      %v2953 = vpack.c.b16 %v2943, %v2942
      %v2954 = vpack.c.b16 %v2945, %v2944
      %v2955 = vpack.c.b16 %v2947, %v2946
      %2964 = vmatprep.subr.bf16.mxu0 0
      %2965 = vmatpush1.bf16.msra.mxu0 %v2948
      %2966 = vmatprep.subr.bf16.mxu0 0
      %2967 = vmatpush1.bf16.msra.mxu0 %v2949
      %2968 = vmatprep.subr.bf16.mxu0 0
      %2969 = vmatpush1.bf16.msra.mxu0 %v2950
      %2970 = vmatprep.subr.bf16.mxu0 0
      %2971 = vmatpush1.bf16.msra.mxu0 %v2951
      %2972 = vmatprep.subr.bf16.mxu0 0
      %2973 = vmatpush1.bf16.msra.mxu0 %v2952
      %2974 = vmatprep.subr.bf16.mxu0 0
      %2975 = vmatpush1.bf16.msra.mxu0 %v2953
      %2976 = vmatprep.subr.bf16.mxu0 0
      %2977 = vmatpush1.bf16.msra.mxu0 %v2954
      %2978 = vmatprep.subr.bf16.mxu0 0
      %2979 = vmatpush1.bf16.msra.mxu0 %v2955
      %2980 = vmatprep.subr.bf16.mxu0 0
      %2981 = vmatpush1.bf16.msra.mxu0 0
      %2982 = vmatprep.subr.bf16.mxu0 0
      %2983 = vmatpush1.bf16.msra.mxu0 0
      %2984 = vmatprep.subr.bf16.mxu0 0
      %2985 = vmatpush1.bf16.msra.mxu0 0
      %2986 = vmatprep.subr.bf16.mxu0 0
      %2987 = vmatpush1.bf16.msra.mxu0 0
      %2988 = vmatprep.subr.bf16.mxu0 0
      %2989 = vmatpush1.bf16.msra.mxu0 0
      %2990 = vmatprep.subr.bf16.mxu0 0
      %2991 = vmatpush1.bf16.msra.mxu0 0
      %2992 = vmatprep.subr.bf16.mxu0 0
      %2993 = vmatpush1.bf16.msra.mxu0 0
      %2994 = vmatprep.subr.bf16.mxu0 0
      %2995 = vmatpush1.bf16.msra.mxu0 0
      %2996 = vmatprep.mubr.bf16.mxu0 0
      %2997 = vmatmul.mubr.bf16.gmra.mrb[0].mxu0 %v2900
      %v2998 = vpop.f32.mrb[0].mxu0
      %v2999 = vadd.f32 0.0, %v2998
      %v3000 = vpop.f32.mrb[0].mxu0
      %v3001 = vpop.f32.mrb[0].mxu0
      %v3002 = vadd.f32 0.0, %v3001
      %v3003 = vpop.f32.mrb[0].mxu0
      %3004 = vmatprep.mubr.bf16.mxu0 0
      %3005 = vmatmul.mubr.bf16.gmra.mrb[0].mxu0 %v2901
      %v3006 = vpop.f32.mrb[0].mxu0
      %v3007 = vadd.f32 0.0, %v3006
      %v3008 = vpop.f32.mrb[0].mxu0
      %v3009 = vpop.f32.mrb[0].mxu0
      %v3010 = vadd.f32 0.0, %v3009
      %v3011 = vpop.f32.mrb[0].mxu0
      %3012 = vmatprep.mubr.bf16.mxu0 0
      %3013 = vmatmul.mubr.bf16.gmra.mrb[0].mxu0 %v2902
      %v3014 = vpop.f32.mrb[0].mxu0
      %v3015 = vadd.f32 0.0, %v3014
      %v3016 = vpop.f32.mrb[0].mxu0
      %v3017 = vpop.f32.mrb[0].mxu0
      %v3018 = vadd.f32 0.0, %v3017
      %v3019 = vpop.f32.mrb[0].mxu0
      %3020 = vmatprep.mubr.bf16.mxu0 0
      %3021 = vmatmul.mubr.bf16.gmra.mrb[0].mxu0 %v2903
      %v3022 = vpop.f32.mrb[0].mxu0
      %v3023 = vadd.f32 0.0, %v3022
      %v3024 = vpop.f32.mrb[0].mxu0
      %v3025 = vpop.f32.mrb[0].mxu0
      %v3026 = vadd.f32 0.0, %v3025
      %v3027 = vpop.f32.mrb[0].mxu0
      %3028 = vmatprep.mubr.bf16.mxu0 0
      %3029 = vmatmul.mubr.bf16.gmra.mrb[0].mxu0 %v2904
      %v3030 = vpop.f32.mrb[0].mxu0
      %v3031 = vadd.f32 0.0, %v3030
      %v3032 = vpop.f32.mrb[0].mxu0
      %v3033 = vpop.f32.mrb[0].mxu0
      %v3034 = vadd.f32 0.0, %v3033
      %v3035 = vpop.f32.mrb[0].mxu0
      %3036 = vmatprep.mubr.bf16.mxu0 0
      %3037 = vmatmul.mubr.bf16.gmra.mrb[0].mxu0 %v2905
      %v3038 = vpop.f32.mrb[0].mxu0
      %v3039 = vadd.f32 0.0, %v3038
      %v3040 = vpop.f32.mrb[0].mxu0
      %v3041 = vpop.f32.mrb[0].mxu0
      %v3042 = vadd.f32 0.0, %v3041
      %v3043 = vpop.f32.mrb[0].mxu0
      %3044 = vmatprep.mubr.bf16.mxu0 0
      %3045 = vmatmul.mubr.bf16.gmra.mrb[0].mxu0 %v2906
      %v3046 = vpop.f32.mrb[0].mxu0
      %v3047 = vadd.f32 0.0, %v3046
      %v3048 = vpop.f32.mrb[0].mxu0
      %v3049 = vpop.f32.mrb[0].mxu0
      %v3050 = vadd.f32 0.0, %v3049
      %v3051 = vpop.f32.mrb[0].mxu0
      %3052 = vmatprep.mubr.bf16.mxu0 0
      %3053 = vmatmul.mubr.bf16.gmra.mrb[0].mxu0 %v2907
      %v3054 = vpop.f32.mrb[0].mxu0
      %v3055 = vadd.f32 0.0, %v3054
      %v3056 = vpop.f32.mrb[0].mxu0
      %v3057 = vpop.f32.mrb[0].mxu0
      %v3058 = vadd.f32 0.0, %v3057
      %v3059 = vpop.f32.mrb[0].mxu0
      %3060 = vdwg.mxu0
      %v3061 = vadd.f32 %v2763, %v2999
      %v3062 = vadd.f32 %v2764, %v3002
      %v3063 = vadd.f32 %v2765, %v3007
      %v3064 = vadd.f32 %v2766, %v3010
      %v3065 = vadd.f32 %v2767, %v3015
      %v3066 = vadd.f32 %v2768, %v3018
      %v3067 = vadd.f32 %v2769, %v3023
      %v3068 = vadd.f32 %v2770, %v3026
      %v3069 = vadd.f32 %v2771, %v3031
      %v3070 = vadd.f32 %v2772, %v3034
      %v3071 = vadd.f32 %v2773, %v3039
      %v3072 = vadd.f32 %v2774, %v3042
      %v3073 = vadd.f32 %v2775, %v3047
      %v3074 = vadd.f32 %v2776, %v3050
      %v3075 = vadd.f32 %v2777, %v3055
      %v3076 = vadd.f32 %v2778, %v3058
      %3077 = vst [vmem:[%s207] sm:$0xff] %v3061
      %3078 = vst [vmem:[%s207 + $0x8] sm:$0xff] %v3062
      %3079 = vst [vmem:[%s207 + $0x10] sm:$0xff] %v3063
      %3080 = vst [vmem:[%s207 + $0x18] sm:$0xff] %v3064
      %3081 = vst [vmem:[%s207 + $0x20] sm:$0xff] %v3065
      %3082 = vst [vmem:[%s207 + $0x28] sm:$0xff] %v3066
      %3083 = vst [vmem:[%s207 + $0x30] sm:$0xff] %v3067
      %3084 = vst [vmem:[%s207 + $0x38] sm:$0xff] %v3068
      %3085 = vst [vmem:[%s207 + $0x40] sm:$0xff] %v3069
      %3086 = vst [vmem:[%s207 + $0x48] sm:$0xff] %v3070
      %3087 = vst [vmem:[%s207 + $0x50] sm:$0xff] %v3071
      %3088 = vst [vmem:[%s207 + $0x58] sm:$0xff] %v3072
      %3089 = vst [vmem:[%s207 + $0x60] sm:$0xff] %v3073
      %3090 = vst [vmem:[%s207 + $0x68] sm:$0xff] %v3074
      %3091 = vst [vmem:[%s207 + $0x70] sm:$0xff] %v3075
      %3092 = vst [vmem:[%s207 + $0x78] sm:$0xff] %v3076
      %v3093 = vadd.f32 %v3061, %v3062
      %v3094 = vadd.f32 %v3093, %v3063
      %v3095 = vadd.f32 %v3094, %v3064
      %v3096 = vadd.f32 %v3095, %v3065
      %v3097 = vadd.f32 %v3096, %v3066
      %v3098 = vadd.f32 %v3097, %v3067
      %v3099 = vadd.f32 %v3098, %v3068
      %v3100 = vadd.f32 %v3099, %v3069
      %v3101 = vadd.f32 %v3100, %v3070
      %v3102 = vadd.f32 %v3101, %v3071
      %v3103 = vadd.f32 %v3102, %v3072
      %v3104 = vadd.f32 %v3103, %v3073
      %v3105 = vadd.f32 %v3104, %v3074
      %v3106 = vadd.f32 %v3105, %v3075
      %v3107 = vadd.f32 %v3106, %v3076
      %v3108 = vrot.slane %v3107, 4
      %v3109 = vadd.f32 %v3107, %v3108
      %v3110 = vrot.slane %v3109, 2
      %v3111 = vadd.f32 %v3109, %v3110
      %v3112 = vrot.slane %v3111, 1
      %v3113 = vadd.f32 %v3111, %v3112
      %v3114 = vmul.f32 %v3061, %v3061
      %v3115 = vmul.f32 %v3062, %v3062
      %v3116 = vmul.f32 %v3063, %v3063
      %v3117 = vmul.f32 %v3064, %v3064
      %v3118 = vmul.f32 %v3065, %v3065
      %v3119 = vmul.f32 %v3066, %v3066
      %v3120 = vmul.f32 %v3067, %v3067
      %v3121 = vmul.f32 %v3068, %v3068
      %v3122 = vmul.f32 %v3069, %v3069
      %v3123 = vmul.f32 %v3070, %v3070
      %v3124 = vmul.f32 %v3071, %v3071
      %v3125 = vmul.f32 %v3072, %v3072
      %v3126 = vmul.f32 %v3073, %v3073
      %v3127 = vmul.f32 %v3074, %v3074
      %v3128 = vmul.f32 %v3075, %v3075
      %v3129 = vmul.f32 %v3076, %v3076
      %v3130 = vadd.f32 %v3114, %v3115
      %v3131 = vadd.f32 %v3130, %v3116
      %v3132 = vadd.f32 %v3131, %v3117
      %v3133 = vadd.f32 %v3132, %v3118
      %v3134 = vadd.f32 %v3133, %v3119
      %v3135 = vadd.f32 %v3134, %v3120
      %v3136 = vadd.f32 %v3135, %v3121
      %v3137 = vadd.f32 %v3136, %v3122
      %v3138 = vadd.f32 %v3137, %v3123
      %v3139 = vadd.f32 %v3138, %v3124
      %v3140 = vadd.f32 %v3139, %v3125
      %v3141 = vadd.f32 %v3140, %v3126
      %v3142 = vadd.f32 %v3141, %v3127
      %v3143 = vadd.f32 %v3142, %v3128
      %v3144 = vadd.f32 %v3143, %v3129
      %v3145 = vrot.slane %v3144, 4
      %v3146 = vadd.f32 %v3144, %v3145
      %v3147 = vrot.slane %v3146, 2
      %v3148 = vadd.f32 %v3146, %v3147
      %v3149 = vrot.slane %v3148, 1
      %v3150 = vadd.f32 %v3148, %v3149
      %vm3151 = vcmask 1040384
      %v3152 = vsel %vm3151, %v3113, %v3150
      %3153 = vst [vmem:[%s216] sm:$0x3] %v3152
      %s3154 = smul.u32 8, %s20
      %p3155 = scmp.lt.s32.totalorder %s19, 1
      %s3156 = scalar_select %p3155, %s19, 1
      %p3157 = scmp.lt.s32.totalorder %s3154, 15
      %s3158 = scalar_select %p3157, %s3154, 15
      %s3159 = smul.addr %s3158, 2
      %s3160 = smul.addr %s3156, 32
      %s3161 = sadd.s32 %s3159, %s3160
      %s3162 = smul.addr %s3161, 8
      %s3163 = scalar_lea.vmem %s2, %s3162
      %p3164 = scmp.lt.s32.totalorder %s19, 1
      %s3165 = scalar_select %p3164, %s19, 1
      %p3166 = scmp.lt.s32.totalorder %s20, 1
      %s3167 = scalar_select %p3166, %s20, 1
      %s3168 = smul.addr %s3165, 2
      %s3169 = sadd.s32 %s3167, %s3168
      %s3170 = smul.addr %s3169, 2
      %s3171 = scalar_lea.vmem %s3, %s3170
      // Predicated region
      $region29: #{double_conv_forward.4} parent=27 // pred_check
        %p3172 = pneg %p94
      $region30: #{double_conv_forward.4} parent=27 // pred_check_branch
        %3174 = sbr.rel (%p3172) target = $region32
      $region31: #{double_conv_forward.4} parent=27 // pred_region
        %s3175 = smul.u32 8, %s20
      $region32: #{double_conv_forward.4} parent=27 // pred_fallthru
        _
      // Predicated region
      $region33: #{double_conv_forward.4} parent=27 // pred_check
        %p3176 = pneg %p122
      $region34: #{double_conv_forward.4} parent=27 // pred_check_branch
        %3178 = sbr.rel (%p3176) target = $region36
      $region35: #{double_conv_forward.4} parent=27 // pred_region
        _
      $region36: #{double_conv_forward.4} parent=27 // pred_fallthru
        _
    $region28: #{double_conv_forward.4} parent=5 // pred_fallthru
      _
    %p3179 = scmp.le.s32.totalorder 2, %s10
    // Predicated region
    $region37: #{double_conv_forward.4} parent=5 // pred_check
      %p3180 = pneg %p3179
    $region38: #{double_conv_forward.4} parent=5 // pred_check_branch
      %3182 = sbr.rel (%p3180) target = $region40
    $region39: #{double_conv_forward.4} parent=5 // pred_region
      %s3183 = ssub.s32 %s10, 2
      // Predicated region
      $region41: #{double_conv_forward.4} parent=39 // pred_check
        %p3184 = pneg %p100
      $region42: #{double_conv_forward.4} parent=39 // pred_check_branch
        %3186 = sbr.rel (%p3184) target = $region44
      $region43: #{double_conv_forward.4} parent=39 // pred_region
        %s3187 = smul.u32 8, %s22
        %p3188 = scmp.lt.s32.totalorder %s21, 1
        %s3189 = scalar_select %p3188, %s21, 1
        %p3190 = scmp.lt.s32.totalorder %s3187, 15
        %s3191 = scalar_select %p3190, %s3187, 15
        %s3192 = smul.addr %s3191, 2
        %s3193 = smul.addr %s3189, 32
        %s3194 = sadd.s32 %s3192, %s3193
        %s3195 = smul.addr %s3194, 8
        %s3196 = scalar_lea.vmem %s2, %s3195
      $region44: #{double_conv_forward.4} parent=39 // pred_fallthru
        _
      // Predicated region
      $region45: #{double_conv_forward.4} parent=39 // pred_check
        %p3197 = pneg %p128
      $region46: #{double_conv_forward.4} parent=39 // pred_check_branch
        %3199 = sbr.rel (%p3197) target = $region48
      $region47: #{double_conv_forward.4} parent=39 // pred_region
        %p3200 = scmp.lt.s32.totalorder %s21, 1
        %s3201 = scalar_select %p3200, %s21, 1
        %p3202 = scmp.lt.s32.totalorder %s22, 1
        %s3203 = scalar_select %p3202, %s22, 1
        %s3204 = smul.addr %s3201, 2
        %s3205 = sadd.s32 %s3203, %s3204
        %s3206 = smul.addr %s3205, 2
        %s3207 = scalar_lea.vmem %s3, %s3206
      $region48: #{double_conv_forward.4} parent=39 // pred_fallthru
        _
    $region40: #{double_conv_forward.4} parent=5 // pred_fallthru
      _
  $region6: #{double_conv_forward.4} parent=0 // loop_footer
    %s14 = sadd.s32 1, %s10
  $region7: #{double_conv_forward.4} parent=0 // loop_footer_branch
    %9 = sbr.rel target = $region3
  $region8: #{double_conv_forward.4} parent=0 // loop_exit
    _

</llo_original>
